<compile_context>
chip_gen: v5e
topology: v5e:2x2
jax: 0.10.0
libtpu: 0.0.40
codegen_flags: <defaults>
</compile_context>

<pallas_src>
import numpy as np
import jax
import jax.numpy as jnp
from jax.experimental import pallas as pl
from jax.experimental.pallas import tpu as pltpu


_TAPS = tuple((dy, dx) for dy in range(3) for dx in range(3))


# --------------------------------------------------------------------------
# Host-side constant builders
# --------------------------------------------------------------------------

def _tap_masks(H, W):
    """(9, H*W) 0/1 masks: mask[t, y*W+x] == 1 iff 3x3 tap t reads an
    in-bounds (non zero-padding) source pixel for output position (y, x)."""
    m = np.zeros((9, H, W), np.float32)
    for t, (dy, dx) in enumerate(_TAPS):
        y0, y1 = max(0, 1 - dy), min(H, H + 1 - dy)
        x0, x1 = max(0, 1 - dx), min(W, W + 1 - dx)
        m[t, y0:y1, x0:x1] = 1.0
    return m.reshape(9, H * W)


def _pool_matrix(size):
    """Per-axis avg-pool matrix for k=3, s=2, p=1, count_include_pad=False
    (the 1/valid-count is folded in; the per-axis product is exact)."""
    out = (size + 2 - 3) // 2 + 1
    P = np.zeros((out, size), np.float32)
    for o in range(out):
        rows = [r for r in (2 * o - 1, 2 * o, 2 * o + 1) if 0 <= r < size]
        for r in rows:
            P[o, r] = 1.0 / len(rows)
    return P


# --------------------------------------------------------------------------
# Pallas kernels
# --------------------------------------------------------------------------

def _make_disc_kernel(H, W, with_pool):
    """One discriminator scale (optionally fused with the downsample that
    produces the next scale's input); one batch element per (parallel) step.

    Refs (channel-first, spatial on lanes):
      xflat : (1, Cin, H*W) f32      masks : (9, H*W) f32 boundary masks
      w1    : (Hid, 9*Cin) bf16      b1    : (Hid, 1) f32
      w2    : (9, Hid) bf16          b2    : (1, 1) f32
      out   : (1, 1, H*W) f32        p1    : VMEM (9*Cin, H*W) bf16 scratch
      [pool only]  x4d : (1, Cin, H, W) f32, ph : (Ho, H), pwt : (W, Wo),
                   xnext : (1, Cin, Ho, Wo) f32
    """
    HW = H * W

    def conv_core(xflat_ref, masks_ref, w1_ref, b1_ref, w2_ref, b2_ref,
                  out_ref, p1_ref):
        Cin = xflat_ref.shape[1]
        x = xflat_ref[0]                            # (Cin, HW) f32, lane-dense

        # conv1 "im2col": each tap row-block is (boundary mask) * (lane roll of
        # the flat image).  Rolled-in wrap values only land where the mask is
        # zero, so this is exactly zero padding -- no padded scratch, no
        # border zeroing, no minor-dim reshapes; all stores are lane-dense.
        # p1 is fully overwritten every grid step (no stale-data hazard with
        # per-core persistent scratch under megacore).
        for t, (dy, dx) in enumerate(_TAPS):
            s = (dy - 1) * W + (dx - 1)
            shifted = x if s == 0 else pltpu.roll(x, (-s) % HW, 1)
            p1_ref[t * Cin:(t + 1) * Cin, :] = (
                masks_ref[t:t + 1, :] * shifted).astype(p1_ref.dtype)

        # conv1: ONE (Hid, 9*Cin) x (9*Cin, HW) bf16 MXU matmul, f32 accum.
        h = jnp.dot(w1_ref[...], p1_ref[...],
                    preferred_element_type=jnp.float32) + b1_ref[...]
        h = jnp.maximum(h, 0.2 * h)                 # LeakyReLU(0.2)

        # conv2 (single output channel): one (9, Hid) x (Hid, HW) matmul gives
        # the per-tap channel reductions; shift each tap row back into place
        # with a lane roll + boundary mask and accumulate (XLU/VPU).  No
        # (HW, 9*Hid) im2col buffer and no padded hidden scratch.
        u = jnp.dot(w2_ref[...], h.astype(jnp.bfloat16),
                    preferred_element_type=jnp.float32)          # (9, HW) f32
        acc = jnp.zeros((1, HW), jnp.float32)
        for t, (dy, dx) in enumerate(_TAPS):
            s = (dy - 1) * W + (dx - 1)
            ut = u[t:t + 1, :]
            if s != 0:
                ut = pltpu.roll(ut, (-s) % HW, 1)
            acc = acc + masks_ref[t:t + 1, :] * ut
        out_ref[...] = (acc + b2_ref[...]).reshape(1, 1, HW)     # lane-dense

    if not with_pool:
        def kernel(xflat_ref, masks_ref, w1_ref, b1_ref, w2_ref, b2_ref,
                   out_ref, p1_ref):
            conv_core(xflat_ref, masks_ref, w1_ref, b1_ref, w2_ref, b2_ref,
                      out_ref, p1_ref)
        return kernel

    def kernel(xflat_ref, masks_ref, w1_ref, b1_ref, w2_ref, b2_ref,
               x4d_ref, ph_ref, pwt_ref, out_ref, xnext_ref, p1_ref):
        conv_core(xflat_ref, masks_ref, w1_ref, b1_ref, w2_ref, b2_ref,
                  out_ref, p1_ref)
        # Fused separable avg_pool2d(k=3, s=2, p=1, count_include_pad=False)
        # producing the next scale's input (one pallas_call per scale).
        # Only leading-dim (layout-safe) reshapes, no transposes.
        Cin = x4d_ref.shape[1]
        Ho, Wo = xnext_ref.shape[2], xnext_ref.shape[3]
        xin = x4d_ref[0]                                          # (Cin, H, W)
        ph_b = jnp.broadcast_to(ph_ref[...], (Cin, Ho, H))
        y = jnp.einsum('coh,chw->cow', ph_b, xin,
                       preferred_element_type=jnp.float32)        # (Cin, Ho, W)
        z = jnp.dot(y.reshape(Cin * Ho, W), pwt_ref[...],
                    preferred_element_type=jnp.float32)           # (Cin*Ho, Wo)
        xnext_ref[0] = z.reshape(Cin, Ho, Wo)
    return kernel


# --------------------------------------------------------------------------
# Wrappers (glue: specs, parameter plumbing)
# --------------------------------------------------------------------------

def _disc_scale(x4d, w1, b1, w2, b2, pool_next):
    N, Cin, H, W = x4d.shape
    HW = H * W
    Hid = w1.shape[-1]

    # Kernel-layout parameters: bf16 MXU operands, f32 biases.
    w1f = jnp.transpose(w1.reshape(9 * Cin, Hid)).astype(jnp.bfloat16)  # (Hid, 9*Cin)
    b1k = b1.reshape(Hid, 1).astype(jnp.float32)
    w2f = w2.reshape(9, Hid).astype(jnp.bfloat16)                       # (9, Hid)
    b2k = b2.reshape(1, 1).astype(jnp.float32)
    masks = jnp.asarray(_tap_masks(H, W))                               # (9, HW)

    # Free host-side view: merges the trailing H,W dims (same memory layout).
    xflat = x4d.reshape(N, Cin, HW)

    in_specs = [
        pl.BlockSpec((1, Cin, HW), lambda n: (n, 0, 0)),
        pl.BlockSpec((9, HW), lambda n: (0, 0)),          # VMEM-resident consts
        pl.BlockSpec((Hid, 9 * Cin), lambda n: (0, 0)),
        pl.BlockSpec((Hid, 1), lambda n: (0, 0)),
        pl.BlockSpec((9, Hid), lambda n: (0, 0)),
        pl.BlockSpec((1, 1), lambda n: (0, 0)),
    ]
    args = [xflat, masks, w1f, b1k, w2f, b2k]
    scratch = [pltpu.VMEM((9 * Cin, HW), jnp.bfloat16)]   # only scratch buffer
    cparams = pltpu.CompilerParams(
        dimension_semantics=("parallel",),                # batch over TCs
        vmem_limit_bytes=32 * 1024 * 1024)

    flops = int(2 * N * HW * (Hid * 9 * Cin + 9 * Hid + 2 * 9))
    bytes_accessed = int(4 * (xflat.size + masks.size + N * HW)
                         + 2 * (w1f.size + w2f.size) + 4 * (b1k.size + b2k.size))

    if not pool_next:
        out = pl.pallas_call(
            _make_disc_kernel(H, W, with_pool=False),
            out_shape=jax.ShapeDtypeStruct((N, 1, HW), jnp.float32),
            grid=(N,),
            in_specs=in_specs,
            out_specs=pl.BlockSpec((1, 1, HW), lambda n: (n, 0, 0)),
            scratch_shapes=scratch,
            compiler_params=cparams,
            cost_estimate=pl.CostEstimate(flops=flops, transcendentals=0,
                                          bytes_accessed=bytes_accessed),
        )(*args)
        return out.reshape(N, HW), None                   # torch.flatten(dim=1)

    Ho, Wo = (H - 1) // 2 + 1, (W - 1) // 2 + 1
    ph = jnp.asarray(_pool_matrix(H))                     # (Ho, H)
    pwt = jnp.asarray(_pool_matrix(W).T)                  # (W, Wo)
    # Second (4-D) view of the same input feeds the fused pool; this trades a
    # small duplicate DMA for avoiding in-kernel minor-dim reshapes.
    flops += int(2 * N * Cin * (Ho * H * W + Ho * W * Wo))
    bytes_accessed += int(4 * (x4d.size + N * Cin * Ho * Wo + ph.size + pwt.size))

    out, xnext = pl.pallas_call(
        _make_disc_kernel(H, W, with_pool=True),
        out_shape=(jax.ShapeDtypeStruct((N, 1, HW), jnp.float32),
                   jax.ShapeDtypeStruct((N, Cin, Ho, Wo), jnp.float32)),
        grid=(N,),
        in_specs=in_specs + [
            pl.BlockSpec((1, Cin, H, W), lambda n: (n, 0, 0, 0)),
            pl.BlockSpec((Ho, H), lambda n: (0, 0)),
            pl.BlockSpec((W, Wo), lambda n: (0, 0)),
        ],
        out_specs=(pl.BlockSpec((1, 1, HW), lambda n: (n, 0, 0)),
                   pl.BlockSpec((1, Cin, Ho, Wo), lambda n: (n, 0, 0, 0))),
        scratch_shapes=scratch,
        compiler_params=cparams,
        cost_estimate=pl.CostEstimate(flops=flops, transcendentals=0,
                                      bytes_accessed=bytes_accessed),
    )(*(args + [x4d, ph, pwt]))
    return out.reshape(N, HW), xnext


def init_params(key, c_img, c_seg, hidden, scale_n):
    cin = c_img + c_seg
    params = []
    for _ in range(scale_n):
        key, k1, k2, k3, k4 = jax.random.split(key, 5)
        w1 = jax.random.normal(k1, (3, 3, cin, hidden), jnp.float32) / np.sqrt(9 * cin)
        b1 = 0.1 * jax.random.normal(k3, (hidden,), jnp.float32)
        w2 = jax.random.normal(k2, (3, 3, hidden, 1), jnp.float32) / np.sqrt(9 * hidden)
        b2 = 0.1 * jax.random.normal(k4, (1,), jnp.float32)
        params.append((w1, b1, w2, b2))
    return params


def multi_scale_discriminator(img_nchw, seg_nchw, params):
    """Forward pass matching MultiScaleDiscriminator.forward(img, seg)."""
    img = img_nchw.astype(jnp.float32)
    seg = seg_nchw.astype(jnp.float32)                    # seg.float()
    # avg-pooling is linear & per-channel: pooling concat(img, seg) equals
    # pooling img and seg separately -> concat once, pool the concat per scale.
    x = jnp.concatenate([img, seg], axis=1)               # NCHW
    outs = []
    n_scales = len(params)
    for s, (w1, b1, w2, b2) in enumerate(params):
        out, x = _disc_scale(x, w1, b1, w2, b2, pool_next=(s + 1 < n_scales))
        outs.append(out)                                  # dis(img, seg), flattened
    return jnp.concatenate(outs, axis=1)                  # torch.cat(outs, dim=1)


# --------------------------------------------------------------------------
# Pure-JAX reference (for correctness check only)
# --------------------------------------------------------------------------

def _ref_forward(img_nchw, seg_nchw, params):
    img = jnp.transpose(img_nchw, (0, 2, 3, 1)).astype(jnp.float32)
    seg = jnp.transpose(seg_nchw, (0, 2, 3, 1)).astype(jnp.float32)

    def conv(x, w, b):
        y = jax.lax.conv_general_dilated(
            x, w, window_strides=(1, 1), padding=((1, 1), (1, 1)),
            dimension_numbers=("NHWC", "HWIO", "NHWC"))
        return y + b.reshape(1, 1, 1, -1)

    def pool(x):
        dims, strides = (1, 3, 3, 1), (1, 2, 2, 1)
        pad = ((0, 0), (1, 1), (1, 1), (0, 0))
        s = jax.lax.reduce_window(x, 0.0, jax.lax.add, dims, strides, pad)
        c = jax.lax.reduce_window(jnp.ones_like(x), 0.0, jax.lax.add,
                                  dims, strides, pad)
        return s / c

    outs = []
    for (w1, b1, w2, b2) in params:
        x = jnp.concatenate([img, seg], axis=-1)
        h = conv(x, w1, b1)
        h = jnp.maximum(h, 0.2 * h)
        o = conv(h, w2, b2)
        outs.append(o.reshape(o.shape[0], -1))
        img = pool(img)
        seg = pool(seg)
    return jnp.concatenate(outs, axis=1)


if __name__ == "__main__":
    key = jax.random.PRNGKey(0)
    N, C_IMG, N_CLS, H, W = 2, 3, 5, 16, 16
    HIDDEN, SCALE_N = 16, 3

    k_img, k_seg, k_p = jax.random.split(key, 3)
    img = jax.random.normal(k_img, (N, C_IMG, H, W), jnp.float32)
    labels = jax.random.randint(k_seg, (N, H, W), 0, N_CLS)
    seg = jnp.transpose(jax.nn.one_hot(labels, N_CLS, dtype=jnp.int32),
                        (0, 3, 1, 2))                     # NCHW int seg map

    params = init_params(k_p, C_IMG, N_CLS, HIDDEN, SCALE_N)

    fwd = jax.jit(multi_scale_discriminator)
    out = jax.block_until_ready(fwd(img, seg, params))

    expected_cols = H * W + (H // 2) * (W // 2) + (H // 4) * (W // 4)
    assert out.shape == (N, expected_cols), out.shape

    ref = _ref_forward(img, seg, params)
    # bf16 MXU operands (f32 accumulation) -> small drift vs the f32 reference.
    if not jnp.allclose(out, ref, rtol=5e-2, atol=5e-2):
        raise AssertionError(
            f"mismatch vs reference, max abs err={float(jnp.max(jnp.abs(out - ref)))}")

    print("KERNEL_OK")
</pallas_src>

<mosaic_0001>
module attributes {stable_mosaic.version = 11 : i64} {
  func.func @kernel(%arg0: i32, %arg1: memref<1x8x256xf32, #tpu.memory_space<vmem>>, %arg2: memref<9x256xf32, #tpu.memory_space<vmem>>, %arg3: memref<16x72xbf16, #tpu.memory_space<vmem>>, %arg4: memref<16x1xf32, #tpu.memory_space<vmem>>, %arg5: memref<9x16xbf16, #tpu.memory_space<vmem>>, %arg6: memref<1x1xf32, #tpu.memory_space<vmem>>, %arg7: memref<1x8x16x16xf32, #tpu.memory_space<vmem>>, %arg8: memref<8x16xf32, #tpu.memory_space<vmem>>, %arg9: memref<16x8xf32, #tpu.memory_space<vmem>>, %arg10: memref<1x1x256xf32, #tpu.memory_space<vmem>>, %arg11: memref<1x8x8x8xf32, #tpu.memory_space<vmem>>, %arg12: memref<72x256xbf16, #tpu.memory_space<vmem>>) attributes {dimension_semantics = [#tpu.dimension_semantics<parallel>], iteration_bounds = array<i64: 2>, scalar_prefetch = 0 : i64, scratch_operands = 1 : i64, tpu.core_type = #tpu.core_type<tc>, window_params = [{transform_indices = @transform_0, window_bounds = array<i64: 1, 8, 256>}, {pipeline_mode = #tpu.pipeline_mode<synchronous>, transform_indices = @transform_1, window_bounds = array<i64: 9, 256>}, {pipeline_mode = #tpu.pipeline_mode<synchronous>, transform_indices = @transform_2, window_bounds = array<i64: 16, 72>}, {pipeline_mode = #tpu.pipeline_mode<synchronous>, transform_indices = @transform_3, window_bounds = array<i64: 16, 1>}, {pipeline_mode = #tpu.pipeline_mode<synchronous>, transform_indices = @transform_4, window_bounds = array<i64: 9, 16>}, {pipeline_mode = #tpu.pipeline_mode<synchronous>, transform_indices = @transform_5, window_bounds = array<i64: 1, 1>}, {transform_indices = @transform_6, window_bounds = array<i64: 1, 8, 16, 16>}, {pipeline_mode = #tpu.pipeline_mode<synchronous>, transform_indices = @transform_7, window_bounds = array<i64: 8, 16>}, {pipeline_mode = #tpu.pipeline_mode<synchronous>, transform_indices = @transform_8, window_bounds = array<i64: 16, 8>}, {transform_indices = @transform_9, window_bounds = array<i64: 1, 1, 256>}, {transform_indices = @transform_10, window_bounds = array<i64: 1, 8, 8, 8>}]} {
    %c0 = arith.constant 0 : index
    %c0_0 = arith.constant 0 : index
    %c0_1 = arith.constant 0 : index
    %0 = vector.load %arg1[%c0, %c0_0, %c0_1] : memref<1x8x256xf32, #tpu.memory_space<vmem>>, vector<1x8x256xf32>
    %1 = vector.shape_cast %0 : vector<1x8x256xf32> to vector<8x256xf32>
    %c17_i32 = arith.constant 17 : i32
    %2 = tpu.dynamic_rotate %1 by %c17_i32 dim 1 : vector<8x256xf32>, i32 -> vector<8x256xf32>
    %c0_2 = arith.constant 0 : index
    %c0_3 = arith.constant 0 : index
    %3 = vector.load %arg2[%c0_2, %c0_3] : memref<9x256xf32, #tpu.memory_space<vmem>>, vector<1x256xf32>
    %4 = vector.broadcast %3 : vector<1x256xf32> to vector<8x256xf32>
    %5 = arith.mulf %4, %2 : vector<8x256xf32>
    %6 = arith.truncf %5 : vector<8x256xf32> to vector<8x256xbf16>
    %c0_4 = arith.constant 0 : index
    %c0_5 = arith.constant 0 : index
    %7 = vector.load %arg12[%c0_4, %c0_5] : memref<72x256xbf16, #tpu.memory_space<vmem>>, vector<8x256xbf16>
    tpu.vector_store %arg12[%c0_4, %c0_5], %6 {strides = array<i32>} : memref<72x256xbf16, #tpu.memory_space<vmem>>, vector<8x256xbf16>,
    %c16_i32 = arith.constant 16 : i32
    %8 = tpu.dynamic_rotate %1 by %c16_i32 dim 1 : vector<8x256xf32>, i32 -> vector<8x256xf32>
    %c1 = arith.constant 1 : index
    %c0_6 = arith.constant 0 : index
    %9 = vector.load %arg2[%c1, %c0_6] : memref<9x256xf32, #tpu.memory_space<vmem>>, vector<1x256xf32>
    %10 = vector.broadcast %9 : vector<1x256xf32> to vector<8x256xf32>
    %11 = arith.mulf %10, %8 : vector<8x256xf32>
    %12 = arith.truncf %11 : vector<8x256xf32> to vector<8x256xbf16>
    %c8 = arith.constant 8 : index
    %c0_7 = arith.constant 0 : index
    %13 = vector.load %arg12[%c8, %c0_7] : memref<72x256xbf16, #tpu.memory_space<vmem>>, vector<8x256xbf16>
    tpu.vector_store %arg12[%c8, %c0_7], %12 {strides = array<i32>} : memref<72x256xbf16, #tpu.memory_space<vmem>>, vector<8x256xbf16>,
    %c15_i32 = arith.constant 15 : i32
    %14 = tpu.dynamic_rotate %1 by %c15_i32 dim 1 : vector<8x256xf32>, i32 -> vector<8x256xf32>
    %c2 = arith.constant 2 : index
    %c0_8 = arith.constant 0 : index
    %15 = vector.load %arg2[%c2, %c0_8] : memref<9x256xf32, #tpu.memory_space<vmem>>, vector<1x256xf32>
    %16 = vector.broadcast %15 : vector<1x256xf32> to vector<8x256xf32>
    %17 = arith.mulf %16, %14 : vector<8x256xf32>
    %18 = arith.truncf %17 : vector<8x256xf32> to vector<8x256xbf16>
    %c16 = arith.constant 16 : index
    %c0_9 = arith.constant 0 : index
    %19 = vector.load %arg12[%c16, %c0_9] : memref<72x256xbf16, #tpu.memory_space<vmem>>, vector<8x256xbf16>
    tpu.vector_store %arg12[%c16, %c0_9], %18 {strides = array<i32>} : memref<72x256xbf16, #tpu.memory_space<vmem>>, vector<8x256xbf16>,
    %c1_i32 = arith.constant 1 : i32
    %20 = tpu.dynamic_rotate %1 by %c1_i32 dim 1 : vector<8x256xf32>, i32 -> vector<8x256xf32>
    %c3 = arith.constant 3 : index
    %c0_10 = arith.constant 0 : index
    %21 = vector.load %arg2[%c3, %c0_10] : memref<9x256xf32, #tpu.memory_space<vmem>>, vector<1x256xf32>
    %22 = vector.broadcast %21 : vector<1x256xf32> to vector<8x256xf32>
    %23 = arith.mulf %22, %20 : vector<8x256xf32>
    %24 = arith.truncf %23 : vector<8x256xf32> to vector<8x256xbf16>
    %c24 = arith.constant 24 : index
    %c0_11 = arith.constant 0 : index
    %25 = vector.load %arg12[%c24, %c0_11] : memref<72x256xbf16, #tpu.memory_space<vmem>>, vector<8x256xbf16>
    tpu.vector_store %arg12[%c24, %c0_11], %24 {strides = array<i32>} : memref<72x256xbf16, #tpu.memory_space<vmem>>, vector<8x256xbf16>,
    %c4 = arith.constant 4 : index
    %c0_12 = arith.constant 0 : index
    %26 = vector.load %arg2[%c4, %c0_12] : memref<9x256xf32, #tpu.memory_space<vmem>>, vector<1x256xf32>
    %27 = vector.broadcast %26 : vector<1x256xf32> to vector<8x256xf32>
    %28 = arith.mulf %27, %1 : vector<8x256xf32>
    %29 = arith.truncf %28 : vector<8x256xf32> to vector<8x256xbf16>
    %c32 = arith.constant 32 : index
    %c0_13 = arith.constant 0 : index
    %30 = vector.load %arg12[%c32, %c0_13] : memref<72x256xbf16, #tpu.memory_space<vmem>>, vector<8x256xbf16>
    tpu.vector_store %arg12[%c32, %c0_13], %29 {strides = array<i32>} : memref<72x256xbf16, #tpu.memory_space<vmem>>, vector<8x256xbf16>,
    %c255_i32 = arith.constant 255 : i32
    %31 = tpu.dynamic_rotate %1 by %c255_i32 dim 1 : vector<8x256xf32>, i32 -> vector<8x256xf32>
    %c5 = arith.constant 5 : index
    %c0_14 = arith.constant 0 : index
    %32 = vector.load %arg2[%c5, %c0_14] : memref<9x256xf32, #tpu.memory_space<vmem>>, vector<1x256xf32>
    %33 = vector.broadcast %32 : vector<1x256xf32> to vector<8x256xf32>
    %34 = arith.mulf %33, %31 : vector<8x256xf32>
    %35 = arith.truncf %34 : vector<8x256xf32> to vector<8x256xbf16>
    %c40 = arith.constant 40 : index
    %c0_15 = arith.constant 0 : index
    %36 = vector.load %arg12[%c40, %c0_15] : memref<72x256xbf16, #tpu.memory_space<vmem>>, vector<8x256xbf16>
    tpu.vector_store %arg12[%c40, %c0_15], %35 {strides = array<i32>} : memref<72x256xbf16, #tpu.memory_space<vmem>>, vector<8x256xbf16>,
    %c241_i32 = arith.constant 241 : i32
    %37 = tpu.dynamic_rotate %1 by %c241_i32 dim 1 : vector<8x256xf32>, i32 -> vector<8x256xf32>
    %c6 = arith.constant 6 : index
    %c0_16 = arith.constant 0 : index
    %38 = vector.load %arg2[%c6, %c0_16] : memref<9x256xf32, #tpu.memory_space<vmem>>, vector<1x256xf32>
    %39 = vector.broadcast %38 : vector<1x256xf32> to vector<8x256xf32>
    %40 = arith.mulf %39, %37 : vector<8x256xf32>
    %41 = arith.truncf %40 : vector<8x256xf32> to vector<8x256xbf16>
    %c48 = arith.constant 48 : index
    %c0_17 = arith.constant 0 : index
    %42 = vector.load %arg12[%c48, %c0_17] : memref<72x256xbf16, #tpu.memory_space<vmem>>, vector<8x256xbf16>
    tpu.vector_store %arg12[%c48, %c0_17], %41 {strides = array<i32>} : memref<72x256xbf16, #tpu.memory_space<vmem>>, vector<8x256xbf16>,
    %c240_i32 = arith.constant 240 : i32
    %43 = tpu.dynamic_rotate %1 by %c240_i32 dim 1 : vector<8x256xf32>, i32 -> vector<8x256xf32>
    %c7 = arith.constant 7 : index
    %c0_18 = arith.constant 0 : index
    %44 = vector.load %arg2[%c7, %c0_18] : memref<9x256xf32, #tpu.memory_space<vmem>>, vector<1x256xf32>
    %45 = vector.broadcast %44 : vector<1x256xf32> to vector<8x256xf32>
    %46 = arith.mulf %45, %43 : vector<8x256xf32>
    %47 = arith.truncf %46 : vector<8x256xf32> to vector<8x256xbf16>
    %c56 = arith.constant 56 : index
    %c0_19 = arith.constant 0 : index
    %48 = vector.load %arg12[%c56, %c0_19] : memref<72x256xbf16, #tpu.memory_space<vmem>>, vector<8x256xbf16>
    tpu.vector_store %arg12[%c56, %c0_19], %47 {strides = array<i32>} : memref<72x256xbf16, #tpu.memory_space<vmem>>, vector<8x256xbf16>,
    %c239_i32 = arith.constant 239 : i32
    %49 = tpu.dynamic_rotate %1 by %c239_i32 dim 1 : vector<8x256xf32>, i32 -> vector<8x256xf32>
    %c8_20 = arith.constant 8 : index
    %c0_21 = arith.constant 0 : index
    %50 = vector.load %arg2[%c8_20, %c0_21] : memref<9x256xf32, #tpu.memory_space<vmem>>, vector<1x256xf32>
    %51 = vector.broadcast %50 : vector<1x256xf32> to vector<8x256xf32>
    %52 = arith.mulf %51, %49 : vector<8x256xf32>
    %53 = arith.truncf %52 : vector<8x256xf32> to vector<8x256xbf16>
    %c64 = arith.constant 64 : index
    %c0_22 = arith.constant 0 : index
    %54 = vector.load %arg12[%c64, %c0_22] : memref<72x256xbf16, #tpu.memory_space<vmem>>, vector<8x256xbf16>
    tpu.vector_store %arg12[%c64, %c0_22], %53 {strides = array<i32>} : memref<72x256xbf16, #tpu.memory_space<vmem>>, vector<8x256xbf16>,
    %c0_23 = arith.constant 0 : index
    %c0_24 = arith.constant 0 : index
    %55 = vector.load %arg3[%c0_23, %c0_24] : memref<16x72xbf16, #tpu.memory_space<vmem>>, vector<16x72xbf16>
    %c0_25 = arith.constant 0 : index
    %c0_26 = arith.constant 0 : index
    %56 = vector.load %arg12[%c0_25, %c0_26] : memref<72x256xbf16, #tpu.memory_space<vmem>>, vector<72x256xbf16>
    %cst = arith.constant dense<0.000000e+00> : vector<16x256xf32>
    %57 = tpu.matmul %55, %56, %cst {dimension_numbers = #tpu.dot_dimension_numbers<[1], [0], [0], [1], [0, 0, 1, 1], [], []>} : vector<16x72xbf16>, vector<72x256xbf16>, vector<16x256xf32> -> vector<16x256xf32>
    %c0_27 = arith.constant 0 : index
    %c0_28 = arith.constant 0 : index
    %58 = vector.load %arg4[%c0_27, %c0_28] : memref<16x1xf32, #tpu.memory_space<vmem>>, vector<16x1xf32>
    %59 = vector.broadcast %58 : vector<16x1xf32> to vector<16x256xf32>
    %60 = arith.addf %57, %59 : vector<16x256xf32>
    %cst_29 = arith.constant 2.000000e-01 : f32
    %61 = vector.broadcast %cst_29 : f32 to vector<16x256xf32>
    %62 = arith.mulf %61, %60 : vector<16x256xf32>
    %63 = arith.maximumf %60, %62 : vector<16x256xf32>
    %c0_30 = arith.constant 0 : index
    %c0_31 = arith.constant 0 : index
    %64 = vector.load %arg5[%c0_30, %c0_31] : memref<9x16xbf16, #tpu.memory_space<vmem>>, vector<9x16xbf16>
    %65 = arith.truncf %63 : vector<16x256xf32> to vector<16x256xbf16>
    %cst_32 = arith.constant dense<0.000000e+00> : vector<9x256xf32>
    %66 = tpu.matmul %64, %65, %cst_32 {dimension_numbers = #tpu.dot_dimension_numbers<[1], [0], [0], [1], [0, 0, 1, 1], [], []>} : vector<9x16xbf16>, vector<16x256xbf16>, vector<9x256xf32> -> vector<9x256xf32>
    %cst_33 = arith.constant 0.000000e+00 : f32
    %67 = vector.broadcast %cst_33 : f32 to vector<1x256xf32>
    %68 = vector.extract_strided_slice %66 {offsets = [0, 0], sizes = [1, 256], strides = [1, 1]} : vector<9x256xf32> to vector<1x256xf32>
    %c17_i32_34 = arith.constant 17 : i32
    %69 = tpu.dynamic_rotate %68 by %c17_i32_34 dim 1 : vector<1x256xf32>, i32 -> vector<1x256xf32>
    %c0_35 = arith.constant 0 : index
    %c0_36 = arith.constant 0 : index
    %70 = vector.load %arg2[%c0_35, %c0_36] : memref<9x256xf32, #tpu.memory_space<vmem>>, vector<1x256xf32>
    %71 = arith.mulf %70, %69 : vector<1x256xf32>
    %72 = arith.addf %67, %71 : vector<1x256xf32>
    %73 = vector.extract_strided_slice %66 {offsets = [1, 0], sizes = [1, 256], strides = [1, 1]} : vector<9x256xf32> to vector<1x256xf32>
    %c16_i32_37 = arith.constant 16 : i32
    %74 = tpu.dynamic_rotate %73 by %c16_i32_37 dim 1 : vector<1x256xf32>, i32 -> vector<1x256xf32>
    %c1_38 = arith.constant 1 : index
    %c0_39 = arith.constant 0 : index
    %75 = vector.load %arg2[%c1_38, %c0_39] : memref<9x256xf32, #tpu.memory_space<vmem>>, vector<1x256xf32>
    %76 = arith.mulf %75, %74 : vector<1x256xf32>
    %77 = arith.addf %72, %76 : vector<1x256xf32>
    %78 = vector.extract_strided_slice %66 {offsets = [2, 0], sizes = [1, 256], strides = [1, 1]} : vector<9x256xf32> to vector<1x256xf32>
    %c15_i32_40 = arith.constant 15 : i32
    %79 = tpu.dynamic_rotate %78 by %c15_i32_40 dim 1 : vector<1x256xf32>, i32 -> vector<1x256xf32>
    %c2_41 = arith.constant 2 : index
    %c0_42 = arith.constant 0 : index
    %80 = vector.load %arg2[%c2_41, %c0_42] : memref<9x256xf32, #tpu.memory_space<vmem>>, vector<1x256xf32>
    %81 = arith.mulf %80, %79 : vector<1x256xf32>
    %82 = arith.addf %77, %81 : vector<1x256xf32>
    %83 = vector.extract_strided_slice %66 {offsets = [3, 0], sizes = [1, 256], strides = [1, 1]} : vector<9x256xf32> to vector<1x256xf32>
    %c1_i32_43 = arith.constant 1 : i32
    %84 = tpu.dynamic_rotate %83 by %c1_i32_43 dim 1 : vector<1x256xf32>, i32 -> vector<1x256xf32>
    %c3_44 = arith.constant 3 : index
    %c0_45 = arith.constant 0 : index
    %85 = vector.load %arg2[%c3_44, %c0_45] : memref<9x256xf32, #tpu.memory_space<vmem>>, vector<1x256xf32>
    %86 = arith.mulf %85, %84 : vector<1x256xf32>
    %87 = arith.addf %82, %86 : vector<1x256xf32>
    %88 = vector.extract_strided_slice %66 {offsets = [4, 0], sizes = [1, 256], strides = [1, 1]} : vector<9x256xf32> to vector<1x256xf32>
    %c4_46 = arith.constant 4 : index
    %c0_47 = arith.constant 0 : index
    %89 = vector.load %arg2[%c4_46, %c0_47] : memref<9x256xf32, #tpu.memory_space<vmem>>, vector<1x256xf32>
    %90 = arith.mulf %89, %88 : vector<1x256xf32>
    %91 = arith.addf %87, %90 : vector<1x256xf32>
    %92 = vector.extract_strided_slice %66 {offsets = [5, 0], sizes = [1, 256], strides = [1, 1]} : vector<9x256xf32> to vector<1x256xf32>
    %c255_i32_48 = arith.constant 255 : i32
    %93 = tpu.dynamic_rotate %92 by %c255_i32_48 dim 1 : vector<1x256xf32>, i32 -> vector<1x256xf32>
    %c5_49 = arith.constant 5 : index
    %c0_50 = arith.constant 0 : index
    %94 = vector.load %arg2[%c5_49, %c0_50] : memref<9x256xf32, #tpu.memory_space<vmem>>, vector<1x256xf32>
    %95 = arith.mulf %94, %93 : vector<1x256xf32>
    %96 = arith.addf %91, %95 : vector<1x256xf32>
    %97 = vector.extract_strided_slice %66 {offsets = [6, 0], sizes = [1, 256], strides = [1, 1]} : vector<9x256xf32> to vector<1x256xf32>
    %c241_i32_51 = arith.constant 241 : i32
    %98 = tpu.dynamic_rotate %97 by %c241_i32_51 dim 1 : vector<1x256xf32>, i32 -> vector<1x256xf32>
    %c6_52 = arith.constant 6 : index
    %c0_53 = arith.constant 0 : index
    %99 = vector.load %arg2[%c6_52, %c0_53] : memref<9x256xf32, #tpu.memory_space<vmem>>, vector<1x256xf32>
    %100 = arith.mulf %99, %98 : vector<1x256xf32>
    %101 = arith.addf %96, %100 : vector<1x256xf32>
    %102 = vector.extract_strided_slice %66 {offsets = [7, 0], sizes = [1, 256], strides = [1, 1]} : vector<9x256xf32> to vector<1x256xf32>
    %c240_i32_54 = arith.constant 240 : i32
    %103 = tpu.dynamic_rotate %102 by %c240_i32_54 dim 1 : vector<1x256xf32>, i32 -> vector<1x256xf32>
    %c7_55 = arith.constant 7 : index
    %c0_56 = arith.constant 0 : index
    %104 = vector.load %arg2[%c7_55, %c0_56] : memref<9x256xf32, #tpu.memory_space<vmem>>, vector<1x256xf32>
    %105 = arith.mulf %104, %103 : vector<1x256xf32>
    %106 = arith.addf %101, %105 : vector<1x256xf32>
    %107 = vector.extract_strided_slice %66 {offsets = [8, 0], sizes = [1, 256], strides = [1, 1]} : vector<9x256xf32> to vector<1x256xf32>
    %c239_i32_57 = arith.constant 239 : i32
    %108 = tpu.dynamic_rotate %107 by %c239_i32_57 dim 1 : vector<1x256xf32>, i32 -> vector<1x256xf32>
    %c8_58 = arith.constant 8 : index
    %c0_59 = arith.constant 0 : index
    %109 = vector.load %arg2[%c8_58, %c0_59] : memref<9x256xf32, #tpu.memory_space<vmem>>, vector<1x256xf32>
    %110 = arith.mulf %109, %108 : vector<1x256xf32>
    %111 = arith.addf %106, %110 : vector<1x256xf32>
    %c0_60 = arith.constant 0 : index
    %c0_61 = arith.constant 0 : index
    %112 = vector.load %arg6[%c0_60, %c0_61] : memref<1x1xf32, #tpu.memory_space<vmem>>, vector<1x1xf32>
    %113 = vector.broadcast %112 : vector<1x1xf32> to vector<1x256xf32>
    %114 = arith.addf %111, %113 : vector<1x256xf32>
    %115 = vector.shape_cast %114 : vector<1x256xf32> to vector<1x1x256xf32>
    %c0_62 = arith.constant 0 : index
    %c0_63 = arith.constant 0 : index
    %c0_64 = arith.constant 0 : index
    %116 = vector.load %arg10[%c0_62, %c0_63, %c0_64] : memref<1x1x256xf32, #tpu.memory_space<vmem>>, vector<1x1x256xf32>
    tpu.vector_store %arg10[%c0_62, %c0_63, %c0_64], %115 {strides = array<i32>} : memref<1x1x256xf32, #tpu.memory_space<vmem>>, vector<1x1x256xf32>,
    %c0_65 = arith.constant 0 : index
    %c0_66 = arith.constant 0 : index
    %c0_67 = arith.constant 0 : index
    %c0_68 = arith.constant 0 : index
    %117 = vector.load %arg7[%c0_65, %c0_66, %c0_67, %c0_68] : memref<1x8x16x16xf32, #tpu.memory_space<vmem>>, vector<1x8x16x16xf32>
    %118 = vector.shape_cast %117 : vector<1x8x16x16xf32> to vector<8x16x16xf32>
    %c0_69 = arith.constant 0 : index
    %c0_70 = arith.constant 0 : index
    %119 = vector.load %arg8[%c0_69, %c0_70] : memref<8x16xf32, #tpu.memory_space<vmem>>, vector<8x16xf32>
    %120 = vector.shape_cast %119 : vector<8x16xf32> to vector<1x8x16xf32>
    %121 = vector.broadcast %120 : vector<1x8x16xf32> to vector<8x8x16xf32>
    "tpu.trace_start"() <{level = 10 : i32, message = "coh,chw->cow"}> : () -> ()
    %cst_71 = arith.constant dense<0.000000e+00> : vector<8x8x16xf32>
    %122 = tpu.matmul %121, %118, %cst_71 {dimension_numbers = #tpu.dot_dimension_numbers<[2], [1], [1], [2], [0, 0, 0, 1, 1, 2], [0], [0]>} : vector<8x8x16xf32>, vector<8x16x16xf32>, vector<8x8x16xf32> -> vector<8x8x16xf32>
    "tpu.trace_stop"() : () -> ()
    %123 = vector.shape_cast %122 : vector<8x8x16xf32> to vector<64x16xf32>
    %c0_72 = arith.constant 0 : index
    %c0_73 = arith.constant 0 : index
    %124 = vector.load %arg9[%c0_72, %c0_73] : memref<16x8xf32, #tpu.memory_space<vmem>>, vector<16x8xf32>
    %cst_74 = arith.constant dense<0.000000e+00> : vector<64x8xf32>
    %125 = tpu.matmul %123, %124, %cst_74 {dimension_numbers = #tpu.dot_dimension_numbers<[1], [0], [0], [1], [0, 0, 1, 1], [], []>} : vector<64x16xf32>, vector<16x8xf32>, vector<64x8xf32> -> vector<64x8xf32>
    %126 = vector.shape_cast %125 : vector<64x8xf32> to vector<8x8x8xf32>
    %c0_75 = arith.constant 0 : index
    %c0_76 = arith.constant 0 : index
    %c0_77 = arith.constant 0 : index
    %c0_78 = arith.constant 0 : index
    %127 = vector.load %arg11[%c0_75, %c0_76, %c0_77, %c0_78] : memref<1x8x8x8xf32, #tpu.memory_space<vmem>>, vector<1x8x8x8xf32>
    %128 = vector.shape_cast %127 : vector<1x8x8x8xf32> to vector<8x8x8xf32>
    %129 = vector.shape_cast %126 : vector<8x8x8xf32> to vector<1x8x8x8xf32>
    tpu.vector_store %arg11[%c0_75, %c0_76, %c0_77, %c0_78], %129 {strides = array<i32>} : memref<1x8x8x8xf32, #tpu.memory_space<vmem>>, vector<1x8x8x8xf32>,
    return
  }
  func.func @transform_0(%arg0: i32) -> (i32, i32, i32) {
    %c0_i32 = arith.constant 0 : i32
    %c0_i32_0 = arith.constant 0 : i32
    %c0_i32_1 = arith.constant 0 : i32
    return %arg0, %c0_i32, %c0_i32_0 : i32, i32, i32
  }
  func.func @transform_1(%arg0: i32) -> (i32, i32) {
    %c0_i32 = arith.constant 0 : i32
    %c0_i32_0 = arith.constant 0 : i32
    %c0_i32_1 = arith.constant 0 : i32
    return %c0_i32, %c0_i32_0 : i32, i32
  }
  func.func @transform_2(%arg0: i32) -> (i32, i32) {
    %c0_i32 = arith.constant 0 : i32
    %c0_i32_0 = arith.constant 0 : i32
    %c0_i32_1 = arith.constant 0 : i32
    return %c0_i32, %c0_i32_0 : i32, i32
  }
  func.func @transform_3(%arg0: i32) -> (i32, i32) {
    %c0_i32 = arith.constant 0 : i32
    %c0_i32_0 = arith.constant 0 : i32
    %c0_i32_1 = arith.constant 0 : i32
    return %c0_i32, %c0_i32_0 : i32, i32
  }
  func.func @transform_4(%arg0: i32) -> (i32, i32) {
    %c0_i32 = arith.constant 0 : i32
    %c0_i32_0 = arith.constant 0 : i32
    %c0_i32_1 = arith.constant 0 : i32
    return %c0_i32, %c0_i32_0 : i32, i32
  }
  func.func @transform_5(%arg0: i32) -> (i32, i32) {
    %c0_i32 = arith.constant 0 : i32
    %c0_i32_0 = arith.constant 0 : i32
    %c0_i32_1 = arith.constant 0 : i32
    return %c0_i32, %c0_i32_0 : i32, i32
  }
  func.func @transform_6(%arg0: i32) -> (i32, i32, i32, i32) {
    %c0_i32 = arith.constant 0 : i32
    %c0_i32_0 = arith.constant 0 : i32
    %c0_i32_1 = arith.constant 0 : i32
    %c0_i32_2 = arith.constant 0 : i32
    return %arg0, %c0_i32, %c0_i32_0, %c0_i32_1 : i32, i32, i32, i32
  }
  func.func @transform_7(%arg0: i32) -> (i32, i32) {
    %c0_i32 = arith.constant 0 : i32
    %c0_i32_0 = arith.constant 0 : i32
    %c0_i32_1 = arith.constant 0 : i32
    return %c0_i32, %c0_i32_0 : i32, i32
  }
  func.func @transform_8(%arg0: i32) -> (i32, i32) {
    %c0_i32 = arith.constant 0 : i32
    %c0_i32_0 = arith.constant 0 : i32
    %c0_i32_1 = arith.constant 0 : i32
    return %c0_i32, %c0_i32_0 : i32, i32
  }
  func.func @transform_9(%arg0: i32) -> (i32, i32, i32) {
    %c0_i32 = arith.constant 0 : i32
    %c0_i32_0 = arith.constant 0 : i32
    %c0_i32_1 = arith.constant 0 : i32
    return %arg0, %c0_i32, %c0_i32_0 : i32, i32, i32
  }
  func.func @transform_10(%arg0: i32) -> (i32, i32, i32, i32) {
    %c0_i32 = arith.constant 0 : i32
    %c0_i32_0 = arith.constant 0 : i32
    %c0_i32_1 = arith.constant 0 : i32
    %c0_i32_2 = arith.constant 0 : i32
    return %arg0, %c0_i32, %c0_i32_0, %c0_i32_1 : i32, i32, i32, i32
  }
}

module attributes {stable_mosaic.version = 11 : i64} {
  func.func @kernel(%arg0: i32, %arg1: memref<1x8x64xf32, #tpu.memory_space<vmem>>, %arg2: memref<9x64xf32, #tpu.memory_space<vmem>>, %arg3: memref<16x72xbf16, #tpu.memory_space<vmem>>, %arg4: memref<16x1xf32, #tpu.memory_space<vmem>>, %arg5: memref<9x16xbf16, #tpu.memory_space<vmem>>, %arg6: memref<1x1xf32, #tpu.memory_space<vmem>>, %arg7: memref<1x8x8x8xf32, #tpu.memory_space<vmem>>, %arg8: memref<4x8xf32, #tpu.memory_space<vmem>>, %arg9: memref<8x4xf32, #tpu.memory_space<vmem>>, %arg10: memref<1x1x64xf32, #tpu.memory_space<vmem>>, %arg11: memref<1x8x4x4xf32, #tpu.memory_space<vmem>>, %arg12: memref<72x64xbf16, #tpu.memory_space<vmem>>) attributes {dimension_semantics = [#tpu.dimension_semantics<parallel>], iteration_bounds = array<i64: 2>, scalar_prefetch = 0 : i64, scratch_operands = 1 : i64, tpu.core_type = #tpu.core_type<tc>, window_params = [{transform_indices = @transform_0, window_bounds = array<i64: 1, 8, 64>}, {pipeline_mode = #tpu.pipeline_mode<synchronous>, transform_indices = @transform_1, window_bounds = array<i64: 9, 64>}, {pipeline_mode = #tpu.pipeline_mode<synchronous>, transform_indices = @transform_2, window_bounds = array<i64: 16, 72>}, {pipeline_mode = #tpu.pipeline_mode<synchronous>, transform_indices = @transform_3, window_bounds = array<i64: 16, 1>}, {pipeline_mode = #tpu.pipeline_mode<synchronous>, transform_indices = @transform_4, window_bounds = array<i64: 9, 16>}, {pipeline_mode = #tpu.pipeline_mode<synchronous>, transform_indices = @transform_5, window_bounds = array<i64: 1, 1>}, {transform_indices = @transform_6, window_bounds = array<i64: 1, 8, 8, 8>}, {pipeline_mode = #tpu.pipeline_mode<synchronous>, transform_indices = @transform_7, window_bounds = array<i64: 4, 8>}, {pipeline_mode = #tpu.pipeline_mode<synchronous>, transform_indices = @transform_8, window_bounds = array<i64: 8, 4>}, {transform_indices = @transform_9, window_bounds = array<i64: 1, 1, 64>}, {transform_indices = @transform_10, window_bounds = array<i64: 1, 8, 4, 4>}]} {
    %c0 = arith.constant 0 : index
    %c0_0 = arith.constant 0 : index
    %c0_1 = arith.constant 0 : index
    %0 = vector.load %arg1[%c0, %c0_0, %c0_1] : memref<1x8x64xf32, #tpu.memory_space<vmem>>, vector<1x8x64xf32>
    %1 = vector.shape_cast %0 : vector<1x8x64xf32> to vector<8x64xf32>
    %c9_i32 = arith.constant 9 : i32
    %2 = tpu.dynamic_rotate %1 by %c9_i32 dim 1 : vector<8x64xf32>, i32 -> vector<8x64xf32>
    %c0_2 = arith.constant 0 : index
    %c0_3 = arith.constant 0 : index
    %3 = vector.load %arg2[%c0_2, %c0_3] : memref<9x64xf32, #tpu.memory_space<vmem>>, vector<1x64xf32>
    %4 = vector.broadcast %3 : vector<1x64xf32> to vector<8x64xf32>
    %5 = arith.mulf %4, %2 : vector<8x64xf32>
    %6 = arith.truncf %5 : vector<8x64xf32> to vector<8x64xbf16>
    %c0_4 = arith.constant 0 : index
    %c0_5 = arith.constant 0 : index
    %7 = vector.load %arg12[%c0_4, %c0_5] : memref<72x64xbf16, #tpu.memory_space<vmem>>, vector<8x64xbf16>
    tpu.vector_store %arg12[%c0_4, %c0_5], %6 {strides = array<i32>} : memref<72x64xbf16, #tpu.memory_space<vmem>>, vector<8x64xbf16>,
    %c8_i32 = arith.constant 8 : i32
    %8 = tpu.dynamic_rotate %1 by %c8_i32 dim 1 : vector<8x64xf32>, i32 -> vector<8x64xf32>
    %c1 = arith.constant 1 : index
    %c0_6 = arith.constant 0 : index
    %9 = vector.load %arg2[%c1, %c0_6] : memref<9x64xf32, #tpu.memory_space<vmem>>, vector<1x64xf32>
    %10 = vector.broadcast %9 : vector<1x64xf32> to vector<8x64xf32>
    %11 = arith.mulf %10, %8 : vector<8x64xf32>
    %12 = arith.truncf %11 : vector<8x64xf32> to vector<8x64xbf16>
    %c8 = arith.constant 8 : index
    %c0_7 = arith.constant 0 : index
    %13 = vector.load %arg12[%c8, %c0_7] : memref<72x64xbf16, #tpu.memory_space<vmem>>, vector<8x64xbf16>
    tpu.vector_store %arg12[%c8, %c0_7], %12 {strides = array<i32>} : memref<72x64xbf16, #tpu.memory_space<vmem>>, vector<8x64xbf16>,
    %c7_i32 = arith.constant 7 : i32
    %14 = tpu.dynamic_rotate %1 by %c7_i32 dim 1 : vector<8x64xf32>, i32 -> vector<8x64xf32>
    %c2 = arith.constant 2 : index
    %c0_8 = arith.constant 0 : index
    %15 = vector.load %arg2[%c2, %c0_8] : memref<9x64xf32, #tpu.memory_space<vmem>>, vector<1x64xf32>
    %16 = vector.broadcast %15 : vector<1x64xf32> to vector<8x64xf32>
    %17 = arith.mulf %16, %14 : vector<8x64xf32>
    %18 = arith.truncf %17 : vector<8x64xf32> to vector<8x64xbf16>
    %c16 = arith.constant 16 : index
    %c0_9 = arith.constant 0 : index
    %19 = vector.load %arg12[%c16, %c0_9] : memref<72x64xbf16, #tpu.memory_space<vmem>>, vector<8x64xbf16>
    tpu.vector_store %arg12[%c16, %c0_9], %18 {strides = array<i32>} : memref<72x64xbf16, #tpu.memory_space<vmem>>, vector<8x64xbf16>,
    %c1_i32 = arith.constant 1 : i32
    %20 = tpu.dynamic_rotate %1 by %c1_i32 dim 1 : vector<8x64xf32>, i32 -> vector<8x64xf32>
    %c3 = arith.constant 3 : index
    %c0_10 = arith.constant 0 : index
    %21 = vector.load %arg2[%c3, %c0_10] : memref<9x64xf32, #tpu.memory_space<vmem>>, vector<1x64xf32>
    %22 = vector.broadcast %21 : vector<1x64xf32> to vector<8x64xf32>
    %23 = arith.mulf %22, %20 : vector<8x64xf32>
    %24 = arith.truncf %23 : vector<8x64xf32> to vector<8x64xbf16>
    %c24 = arith.constant 24 : index
    %c0_11 = arith.constant 0 : index
    %25 = vector.load %arg12[%c24, %c0_11] : memref<72x64xbf16, #tpu.memory_space<vmem>>, vector<8x64xbf16>
    tpu.vector_store %arg12[%c24, %c0_11], %24 {strides = array<i32>} : memref<72x64xbf16, #tpu.memory_space<vmem>>, vector<8x64xbf16>,
    %c4 = arith.constant 4 : index
    %c0_12 = arith.constant 0 : index
    %26 = vector.load %arg2[%c4, %c0_12] : memref<9x64xf32, #tpu.memory_space<vmem>>, vector<1x64xf32>
    %27 = vector.broadcast %26 : vector<1x64xf32> to vector<8x64xf32>
    %28 = arith.mulf %27, %1 : vector<8x64xf32>
    %29 = arith.truncf %28 : vector<8x64xf32> to vector<8x64xbf16>
    %c32 = arith.constant 32 : index
    %c0_13 = arith.constant 0 : index
    %30 = vector.load %arg12[%c32, %c0_13] : memref<72x64xbf16, #tpu.memory_space<vmem>>, vector<8x64xbf16>
    tpu.vector_store %arg12[%c32, %c0_13], %29 {strides = array<i32>} : memref<72x64xbf16, #tpu.memory_space<vmem>>, vector<8x64xbf16>,
    %c63_i32 = arith.constant 63 : i32
    %31 = tpu.dynamic_rotate %1 by %c63_i32 dim 1 : vector<8x64xf32>, i32 -> vector<8x64xf32>
    %c5 = arith.constant 5 : index
    %c0_14 = arith.constant 0 : index
    %32 = vector.load %arg2[%c5, %c0_14] : memref<9x64xf32, #tpu.memory_space<vmem>>, vector<1x64xf32>
    %33 = vector.broadcast %32 : vector<1x64xf32> to vector<8x64xf32>
    %34 = arith.mulf %33, %31 : vector<8x64xf32>
    %35 = arith.truncf %34 : vector<8x64xf32> to vector<8x64xbf16>
    %c40 = arith.constant 40 : index
    %c0_15 = arith.constant 0 : index
    %36 = vector.load %arg12[%c40, %c0_15] : memref<72x64xbf16, #tpu.memory_space<vmem>>, vector<8x64xbf16>
    tpu.vector_store %arg12[%c40, %c0_15], %35 {strides = array<i32>} : memref<72x64xbf16, #tpu.memory_space<vmem>>, vector<8x64xbf16>,
    %c57_i32 = arith.constant 57 : i32
    %37 = tpu.dynamic_rotate %1 by %c57_i32 dim 1 : vector<8x64xf32>, i32 -> vector<8x64xf32>
    %c6 = arith.constant 6 : index
    %c0_16 = arith.constant 0 : index
    %38 = vector.load %arg2[%c6, %c0_16] : memref<9x64xf32, #tpu.memory_space<vmem>>, vector<1x64xf32>
    %39 = vector.broadcast %38 : vector<1x64xf32> to vector<8x64xf32>
    %40 = arith.mulf %39, %37 : vector<8x64xf32>
    %41 = arith.truncf %40 : vector<8x64xf32> to vector<8x64xbf16>
    %c48 = arith.constant 48 : index
    %c0_17 = arith.constant 0 : index
    %42 = vector.load %arg12[%c48, %c0_17] : memref<72x64xbf16, #tpu.memory_space<vmem>>, vector<8x64xbf16>
    tpu.vector_store %arg12[%c48, %c0_17], %41 {strides = array<i32>} : memref<72x64xbf16, #tpu.memory_space<vmem>>, vector<8x64xbf16>,
    %c56_i32 = arith.constant 56 : i32
    %43 = tpu.dynamic_rotate %1 by %c56_i32 dim 1 : vector<8x64xf32>, i32 -> vector<8x64xf32>
    %c7 = arith.constant 7 : index
    %c0_18 = arith.constant 0 : index
    %44 = vector.load %arg2[%c7, %c0_18] : memref<9x64xf32, #tpu.memory_space<vmem>>, vector<1x64xf32>
    %45 = vector.broadcast %44 : vector<1x64xf32> to vector<8x64xf32>
    %46 = arith.mulf %45, %43 : vector<8x64xf32>
    %47 = arith.truncf %46 : vector<8x64xf32> to vector<8x64xbf16>
    %c56 = arith.constant 56 : index
    %c0_19 = arith.constant 0 : index
    %48 = vector.load %arg12[%c56, %c0_19] : memref<72x64xbf16, #tpu.memory_space<vmem>>, vector<8x64xbf16>
    tpu.vector_store %arg12[%c56, %c0_19], %47 {strides = array<i32>} : memref<72x64xbf16, #tpu.memory_space<vmem>>, vector<8x64xbf16>,
    %c55_i32 = arith.constant 55 : i32
    %49 = tpu.dynamic_rotate %1 by %c55_i32 dim 1 : vector<8x64xf32>, i32 -> vector<8x64xf32>
    %c8_20 = arith.constant 8 : index
    %c0_21 = arith.constant 0 : index
    %50 = vector.load %arg2[%c8_20, %c0_21] : memref<9x64xf32, #tpu.memory_space<vmem>>, vector<1x64xf32>
    %51 = vector.broadcast %50 : vector<1x64xf32> to vector<8x64xf32>
    %52 = arith.mulf %51, %49 : vector<8x64xf32>
    %53 = arith.truncf %52 : vector<8x64xf32> to vector<8x64xbf16>
    %c64 = arith.constant 64 : index
    %c0_22 = arith.constant 0 : index
    %54 = vector.load %arg12[%c64, %c0_22] : memref<72x64xbf16, #tpu.memory_space<vmem>>, vector<8x64xbf16>
    tpu.vector_store %arg12[%c64, %c0_22], %53 {strides = array<i32>} : memref<72x64xbf16, #tpu.memory_space<vmem>>, vector<8x64xbf16>,
    %c0_23 = arith.constant 0 : index
    %c0_24 = arith.constant 0 : index
    %55 = vector.load %arg3[%c0_23, %c0_24] : memref<16x72xbf16, #tpu.memory_space<vmem>>, vector<16x72xbf16>
    %c0_25 = arith.constant 0 : index
    %c0_26 = arith.constant 0 : index
    %56 = vector.load %arg12[%c0_25, %c0_26] : memref<72x64xbf16, #tpu.memory_space<vmem>>, vector<72x64xbf16>
    %cst = arith.constant dense<0.000000e+00> : vector<16x64xf32>
    %57 = tpu.matmul %55, %56, %cst {dimension_numbers = #tpu.dot_dimension_numbers<[1], [0], [0], [1], [0, 0, 1, 1], [], []>} : vector<16x72xbf16>, vector<72x64xbf16>, vector<16x64xf32> -> vector<16x64xf32>
    %c0_27 = arith.constant 0 : index
    %c0_28 = arith.constant 0 : index
    %58 = vector.load %arg4[%c0_27, %c0_28] : memref<16x1xf32, #tpu.memory_space<vmem>>, vector<16x1xf32>
    %59 = vector.broadcast %58 : vector<16x1xf32> to vector<16x64xf32>
    %60 = arith.addf %57, %59 : vector<16x64xf32>
    %cst_29 = arith.constant 2.000000e-01 : f32
    %61 = vector.broadcast %cst_29 : f32 to vector<16x64xf32>
    %62 = arith.mulf %61, %60 : vector<16x64xf32>
    %63 = arith.maximumf %60, %62 : vector<16x64xf32>
    %c0_30 = arith.constant 0 : index
    %c0_31 = arith.constant 0 : index
    %64 = vector.load %arg5[%c0_30, %c0_31] : memref<9x16xbf16, #tpu.memory_space<vmem>>, vector<9x16xbf16>
    %65 = arith.truncf %63 : vector<16x64xf32> to vector<16x64xbf16>
    %cst_32 = arith.constant dense<0.000000e+00> : vector<9x64xf32>
    %66 = tpu.matmul %64, %65, %cst_32 {dimension_numbers = #tpu.dot_dimension_numbers<[1], [0], [0], [1], [0, 0, 1, 1], [], []>} : vector<9x16xbf16>, vector<16x64xbf16>, vector<9x64xf32> -> vector<9x64xf32>
    %cst_33 = arith.constant 0.000000e+00 : f32
    %67 = vector.broadcast %cst_33 : f32 to vector<1x64xf32>
    %68 = vector.extract_strided_slice %66 {offsets = [0, 0], sizes = [1, 64], strides = [1, 1]} : vector<9x64xf32> to vector<1x64xf32>
    %c9_i32_34 = arith.constant 9 : i32
    %69 = tpu.dynamic_rotate %68 by %c9_i32_34 dim 1 : vector<1x64xf32>, i32 -> vector<1x64xf32>
    %c0_35 = arith.constant 0 : index
    %c0_36 = arith.constant 0 : index
    %70 = vector.load %arg2[%c0_35, %c0_36] : memref<9x64xf32, #tpu.memory_space<vmem>>, vector<1x64xf32>
    %71 = arith.mulf %70, %69 : vector<1x64xf32>
    %72 = arith.addf %67, %71 : vector<1x64xf32>
    %73 = vector.extract_strided_slice %66 {offsets = [1, 0], sizes = [1, 64], strides = [1, 1]} : vector<9x64xf32> to vector<1x64xf32>
    %c8_i32_37 = arith.constant 8 : i32
    %74 = tpu.dynamic_rotate %73 by %c8_i32_37 dim 1 : vector<1x64xf32>, i32 -> vector<1x64xf32>
    %c1_38 = arith.constant 1 : index
    %c0_39 = arith.constant 0 : index
    %75 = vector.load %arg2[%c1_38, %c0_39] : memref<9x64xf32, #tpu.memory_space<vmem>>, vector<1x64xf32>
    %76 = arith.mulf %75, %74 : vector<1x64xf32>
    %77 = arith.addf %72, %76 : vector<1x64xf32>
    %78 = vector.extract_strided_slice %66 {offsets = [2, 0], sizes = [1, 64], strides = [1, 1]} : vector<9x64xf32> to vector<1x64xf32>
    %c7_i32_40 = arith.constant 7 : i32
    %79 = tpu.dynamic_rotate %78 by %c7_i32_40 dim 1 : vector<1x64xf32>, i32 -> vector<1x64xf32>
    %c2_41 = arith.constant 2 : index
    %c0_42 = arith.constant 0 : index
    %80 = vector.load %arg2[%c2_41, %c0_42] : memref<9x64xf32, #tpu.memory_space<vmem>>, vector<1x64xf32>
    %81 = arith.mulf %80, %79 : vector<1x64xf32>
    %82 = arith.addf %77, %81 : vector<1x64xf32>
    %83 = vector.extract_strided_slice %66 {offsets = [3, 0], sizes = [1, 64], strides = [1, 1]} : vector<9x64xf32> to vector<1x64xf32>
    %c1_i32_43 = arith.constant 1 : i32
    %84 = tpu.dynamic_rotate %83 by %c1_i32_43 dim 1 : vector<1x64xf32>, i32 -> vector<1x64xf32>
    %c3_44 = arith.constant 3 : index
    %c0_45 = arith.constant 0 : index
    %85 = vector.load %arg2[%c3_44, %c0_45] : memref<9x64xf32, #tpu.memory_space<vmem>>, vector<1x64xf32>
    %86 = arith.mulf %85, %84 : vector<1x64xf32>
    %87 = arith.addf %82, %86 : vector<1x64xf32>
    %88 = vector.extract_strided_slice %66 {offsets = [4, 0], sizes = [1, 64], strides = [1, 1]} : vector<9x64xf32> to vector<1x64xf32>
    %c4_46 = arith.constant 4 : index
    %c0_47 = arith.constant 0 : index
    %89 = vector.load %arg2[%c4_46, %c0_47] : memref<9x64xf32, #tpu.memory_space<vmem>>, vector<1x64xf32>
    %90 = arith.mulf %89, %88 : vector<1x64xf32>
    %91 = arith.addf %87, %90 : vector<1x64xf32>
    %92 = vector.extract_strided_slice %66 {offsets = [5, 0], sizes = [1, 64], strides = [1, 1]} : vector<9x64xf32> to vector<1x64xf32>
    %c63_i32_48 = arith.constant 63 : i32
    %93 = tpu.dynamic_rotate %92 by %c63_i32_48 dim 1 : vector<1x64xf32>, i32 -> vector<1x64xf32>
    %c5_49 = arith.constant 5 : index
    %c0_50 = arith.constant 0 : index
    %94 = vector.load %arg2[%c5_49, %c0_50] : memref<9x64xf32, #tpu.memory_space<vmem>>, vector<1x64xf32>
    %95 = arith.mulf %94, %93 : vector<1x64xf32>
    %96 = arith.addf %91, %95 : vector<1x64xf32>
    %97 = vector.extract_strided_slice %66 {offsets = [6, 0], sizes = [1, 64], strides = [1, 1]} : vector<9x64xf32> to vector<1x64xf32>
    %c57_i32_51 = arith.constant 57 : i32
    %98 = tpu.dynamic_rotate %97 by %c57_i32_51 dim 1 : vector<1x64xf32>, i32 -> vector<1x64xf32>
    %c6_52 = arith.constant 6 : index
    %c0_53 = arith.constant 0 : index
    %99 = vector.load %arg2[%c6_52, %c0_53] : memref<9x64xf32, #tpu.memory_space<vmem>>, vector<1x64xf32>
    %100 = arith.mulf %99, %98 : vector<1x64xf32>
    %101 = arith.addf %96, %100 : vector<1x64xf32>
    %102 = vector.extract_strided_slice %66 {offsets = [7, 0], sizes = [1, 64], strides = [1, 1]} : vector<9x64xf32> to vector<1x64xf32>
    %c56_i32_54 = arith.constant 56 : i32
    %103 = tpu.dynamic_rotate %102 by %c56_i32_54 dim 1 : vector<1x64xf32>, i32 -> vector<1x64xf32>
    %c7_55 = arith.constant 7 : index
    %c0_56 = arith.constant 0 : index
    %104 = vector.load %arg2[%c7_55, %c0_56] : memref<9x64xf32, #tpu.memory_space<vmem>>, vector<1x64xf32>
    %105 = arith.mulf %104, %103 : vector<1x64xf32>
    %106 = arith.addf %101, %105 : vector<1x64xf32>
    %107 = vector.extract_strided_slice %66 {offsets = [8, 0], sizes = [1, 64], strides = [1, 1]} : vector<9x64xf32> to vector<1x64xf32>
    %c55_i32_57 = arith.constant 55 : i32
    %108 = tpu.dynamic_rotate %107 by %c55_i32_57 dim 1 : vector<1x64xf32>, i32 -> vector<1x64xf32>
    %c8_58 = arith.constant 8 : index
    %c0_59 = arith.constant 0 : index
    %109 = vector.load %arg2[%c8_58, %c0_59] : memref<9x64xf32, #tpu.memory_space<vmem>>, vector<1x64xf32>
    %110 = arith.mulf %109, %108 : vector<1x64xf32>
    %111 = arith.addf %106, %110 : vector<1x64xf32>
    %c0_60 = arith.constant 0 : index
    %c0_61 = arith.constant 0 : index
    %112 = vector.load %arg6[%c0_60, %c0_61] : memref<1x1xf32, #tpu.memory_space<vmem>>, vector<1x1xf32>
    %113 = vector.broadcast %112 : vector<1x1xf32> to vector<1x64xf32>
    %114 = arith.addf %111, %113 : vector<1x64xf32>
    %115 = vector.shape_cast %114 : vector<1x64xf32> to vector<1x1x64xf32>
    %c0_62 = arith.constant 0 : index
    %c0_63 = arith.constant 0 : index
    %c0_64 = arith.constant 0 : index
    %116 = vector.load %arg10[%c0_62, %c0_63, %c0_64] : memref<1x1x64xf32, #tpu.memory_space<vmem>>, vector<1x1x64xf32>
    tpu.vector_store %arg10[%c0_62, %c0_63, %c0_64], %115 {strides = array<i32>} : memref<1x1x64xf32, #tpu.memory_space<vmem>>, vector<1x1x64xf32>,
    %c0_65 = arith.constant 0 : index
    %c0_66 = arith.constant 0 : index
    %c0_67 = arith.constant 0 : index
    %c0_68 = arith.constant 0 : index
    %117 = vector.load %arg7[%c0_65, %c0_66, %c0_67, %c0_68] : memref<1x8x8x8xf32, #tpu.memory_space<vmem>>, vector<1x8x8x8xf32>
    %118 = vector.shape_cast %117 : vector<1x8x8x8xf32> to vector<8x8x8xf32>
    %c0_69 = arith.constant 0 : index
    %c0_70 = arith.constant 0 : index
    %119 = vector.load %arg8[%c0_69, %c0_70] : memref<4x8xf32, #tpu.memory_space<vmem>>, vector<4x8xf32>
    %120 = vector.shape_cast %119 : vector<4x8xf32> to vector<1x4x8xf32>
    %121 = vector.broadcast %120 : vector<1x4x8xf32> to vector<8x4x8xf32>
    "tpu.trace_start"() <{level = 10 : i32, message = "coh,chw->cow"}> : () -> ()
    %cst_71 = arith.constant dense<0.000000e+00> : vector<8x4x8xf32>
    %122 = tpu.matmul %121, %118, %cst_71 {dimension_numbers = #tpu.dot_dimension_numbers<[2], [1], [1], [2], [0, 0, 0, 1, 1, 2], [0], [0]>} : vector<8x4x8xf32>, vector<8x8x8xf32>, vector<8x4x8xf32> -> vector<8x4x8xf32>
    "tpu.trace_stop"() : () -> ()
    %123 = vector.shape_cast %122 : vector<8x4x8xf32> to vector<32x8xf32>
    %c0_72 = arith.constant 0 : index
    %c0_73 = arith.constant 0 : index
    %124 = vector.load %arg9[%c0_72, %c0_73] : memref<8x4xf32, #tpu.memory_space<vmem>>, vector<8x4xf32>
    %cst_74 = arith.constant dense<0.000000e+00> : vector<32x4xf32>
    %125 = tpu.matmul %123, %124, %cst_74 {dimension_numbers = #tpu.dot_dimension_numbers<[1], [0], [0], [1], [0, 0, 1, 1], [], []>} : vector<32x8xf32>, vector<8x4xf32>, vector<32x4xf32> -> vector<32x4xf32>
    %126 = vector.shape_cast %125 : vector<32x4xf32> to vector<8x4x4xf32>
    %c0_75 = arith.constant 0 : index
    %c0_76 = arith.constant 0 : index
    %c0_77 = arith.constant 0 : index
    %c0_78 = arith.constant 0 : index
    %127 = vector.load %arg11[%c0_75, %c0_76, %c0_77, %c0_78] : memref<1x8x4x4xf32, #tpu.memory_space<vmem>>, vector<1x8x4x4xf32>
    %128 = vector.shape_cast %127 : vector<1x8x4x4xf32> to vector<8x4x4xf32>
    %129 = vector.shape_cast %126 : vector<8x4x4xf32> to vector<1x8x4x4xf32>
    tpu.vector_store %arg11[%c0_75, %c0_76, %c0_77, %c0_78], %129 {strides = array<i32>} : memref<1x8x4x4xf32, #tpu.memory_space<vmem>>, vector<1x8x4x4xf32>,
    return
  }
  func.func @transform_0(%arg0: i32) -> (i32, i32, i32) {
    %c0_i32 = arith.constant 0 : i32
    %c0_i32_0 = arith.constant 0 : i32
    %c0_i32_1 = arith.constant 0 : i32
    return %arg0, %c0_i32, %c0_i32_0 : i32, i32, i32
  }
  func.func @transform_1(%arg0: i32) -> (i32, i32) {
    %c0_i32 = arith.constant 0 : i32
    %c0_i32_0 = arith.constant 0 : i32
    %c0_i32_1 = arith.constant 0 : i32
    return %c0_i32, %c0_i32_0 : i32, i32
  }
  func.func @transform_2(%arg0: i32) -> (i32, i32) {
    %c0_i32 = arith.constant 0 : i32
    %c0_i32_0 = arith.constant 0 : i32
    %c0_i32_1 = arith.constant 0 : i32
    return %c0_i32, %c0_i32_0 : i32, i32
  }
  func.func @transform_3(%arg0: i32) -> (i32, i32) {
    %c0_i32 = arith.constant 0 : i32
    %c0_i32_0 = arith.constant 0 : i32
    %c0_i32_1 = arith.constant 0 : i32
    return %c0_i32, %c0_i32_0 : i32, i32
  }
  func.func @transform_4(%arg0: i32) -> (i32, i32) {
    %c0_i32 = arith.constant 0 : i32
    %c0_i32_0 = arith.constant 0 : i32
    %c0_i32_1 = arith.constant 0 : i32
    return %c0_i32, %c0_i32_0 : i32, i32
  }
  func.func @transform_5(%arg0: i32) -> (i32, i32) {
    %c0_i32 = arith.constant 0 : i32
    %c0_i32_0 = arith.constant 0 : i32
    %c0_i32_1 = arith.constant 0 : i32
    return %c0_i32, %c0_i32_0 : i32, i32
  }
  func.func @transform_6(%arg0: i32) -> (i32, i32, i32, i32) {
    %c0_i32 = arith.constant 0 : i32
    %c0_i32_0 = arith.constant 0 : i32
    %c0_i32_1 = arith.constant 0 : i32
    %c0_i32_2 = arith.constant 0 : i32
    return %arg0, %c0_i32, %c0_i32_0, %c0_i32_1 : i32, i32, i32, i32
  }
  func.func @transform_7(%arg0: i32) -> (i32, i32) {
    %c0_i32 = arith.constant 0 : i32
    %c0_i32_0 = arith.constant 0 : i32
    %c0_i32_1 = arith.constant 0 : i32
    return %c0_i32, %c0_i32_0 : i32, i32
  }
  func.func @transform_8(%arg0: i32) -> (i32, i32) {
    %c0_i32 = arith.constant 0 : i32
    %c0_i32_0 = arith.constant 0 : i32
    %c0_i32_1 = arith.constant 0 : i32
    return %c0_i32, %c0_i32_0 : i32, i32
  }
  func.func @transform_9(%arg0: i32) -> (i32, i32, i32) {
    %c0_i32 = arith.constant 0 : i32
    %c0_i32_0 = arith.constant 0 : i32
    %c0_i32_1 = arith.constant 0 : i32
    return %arg0, %c0_i32, %c0_i32_0 : i32, i32, i32
  }
  func.func @transform_10(%arg0: i32) -> (i32, i32, i32, i32) {
    %c0_i32 = arith.constant 0 : i32
    %c0_i32_0 = arith.constant 0 : i32
    %c0_i32_1 = arith.constant 0 : i32
    %c0_i32_2 = arith.constant 0 : i32
    return %arg0, %c0_i32, %c0_i32_0, %c0_i32_1 : i32, i32, i32, i32
  }
}

module attributes {stable_mosaic.version = 11 : i64} {
  func.func @kernel(%arg0: i32, %arg1: memref<1x8x16xf32, #tpu.memory_space<vmem>>, %arg2: memref<9x16xf32, #tpu.memory_space<vmem>>, %arg3: memref<16x72xbf16, #tpu.memory_space<vmem>>, %arg4: memref<16x1xf32, #tpu.memory_space<vmem>>, %arg5: memref<9x16xbf16, #tpu.memory_space<vmem>>, %arg6: memref<1x1xf32, #tpu.memory_space<vmem>>, %arg7: memref<1x1x16xf32, #tpu.memory_space<vmem>>, %arg8: memref<72x16xbf16, #tpu.memory_space<vmem>>) attributes {dimension_semantics = [#tpu.dimension_semantics<parallel>], iteration_bounds = array<i64: 2>, scalar_prefetch = 0 : i64, scratch_operands = 1 : i64, tpu.core_type = #tpu.core_type<tc>, window_params = [{transform_indices = @transform_0, window_bounds = array<i64: 1, 8, 16>}, {pipeline_mode = #tpu.pipeline_mode<synchronous>, transform_indices = @transform_1, window_bounds = array<i64: 9, 16>}, {pipeline_mode = #tpu.pipeline_mode<synchronous>, transform_indices = @transform_2, window_bounds = array<i64: 16, 72>}, {pipeline_mode = #tpu.pipeline_mode<synchronous>, transform_indices = @transform_3, window_bounds = array<i64: 16, 1>}, {pipeline_mode = #tpu.pipeline_mode<synchronous>, transform_indices = @transform_4, window_bounds = array<i64: 9, 16>}, {pipeline_mode = #tpu.pipeline_mode<synchronous>, transform_indices = @transform_5, window_bounds = array<i64: 1, 1>}, {transform_indices = @transform_6, window_bounds = array<i64: 1, 1, 16>}]} {
    %c0 = arith.constant 0 : index
    %c0_0 = arith.constant 0 : index
    %c0_1 = arith.constant 0 : index
    %0 = vector.load %arg1[%c0, %c0_0, %c0_1] : memref<1x8x16xf32, #tpu.memory_space<vmem>>, vector<1x8x16xf32>
    %1 = vector.shape_cast %0 : vector<1x8x16xf32> to vector<8x16xf32>
    %c5_i32 = arith.constant 5 : i32
    %2 = tpu.dynamic_rotate %1 by %c5_i32 dim 1 : vector<8x16xf32>, i32 -> vector<8x16xf32>
    %c0_2 = arith.constant 0 : index
    %c0_3 = arith.constant 0 : index
    %3 = vector.load %arg2[%c0_2, %c0_3] : memref<9x16xf32, #tpu.memory_space<vmem>>, vector<1x16xf32>
    %4 = vector.broadcast %3 : vector<1x16xf32> to vector<8x16xf32>
    %5 = arith.mulf %4, %2 : vector<8x16xf32>
    %6 = arith.truncf %5 : vector<8x16xf32> to vector<8x16xbf16>
    %c0_4 = arith.constant 0 : index
    %c0_5 = arith.constant 0 : index
    %7 = vector.load %arg8[%c0_4, %c0_5] : memref<72x16xbf16, #tpu.memory_space<vmem>>, vector<8x16xbf16>
    tpu.vector_store %arg8[%c0_4, %c0_5], %6 {strides = array<i32>} : memref<72x16xbf16, #tpu.memory_space<vmem>>, vector<8x16xbf16>,
    %c4_i32 = arith.constant 4 : i32
    %8 = tpu.dynamic_rotate %1 by %c4_i32 dim 1 : vector<8x16xf32>, i32 -> vector<8x16xf32>
    %c1 = arith.constant 1 : index
    %c0_6 = arith.constant 0 : index
    %9 = vector.load %arg2[%c1, %c0_6] : memref<9x16xf32, #tpu.memory_space<vmem>>, vector<1x16xf32>
    %10 = vector.broadcast %9 : vector<1x16xf32> to vector<8x16xf32>
    %11 = arith.mulf %10, %8 : vector<8x16xf32>
    %12 = arith.truncf %11 : vector<8x16xf32> to vector<8x16xbf16>
    %c8 = arith.constant 8 : index
    %c0_7 = arith.constant 0 : index
    %13 = vector.load %arg8[%c8, %c0_7] : memref<72x16xbf16, #tpu.memory_space<vmem>>, vector<8x16xbf16>
    tpu.vector_store %arg8[%c8, %c0_7], %12 {strides = array<i32>} : memref<72x16xbf16, #tpu.memory_space<vmem>>, vector<8x16xbf16>,
    %c3_i32 = arith.constant 3 : i32
    %14 = tpu.dynamic_rotate %1 by %c3_i32 dim 1 : vector<8x16xf32>, i32 -> vector<8x16xf32>
    %c2 = arith.constant 2 : index
    %c0_8 = arith.constant 0 : index
    %15 = vector.load %arg2[%c2, %c0_8] : memref<9x16xf32, #tpu.memory_space<vmem>>, vector<1x16xf32>
    %16 = vector.broadcast %15 : vector<1x16xf32> to vector<8x16xf32>
    %17 = arith.mulf %16, %14 : vector<8x16xf32>
    %18 = arith.truncf %17 : vector<8x16xf32> to vector<8x16xbf16>
    %c16 = arith.constant 16 : index
    %c0_9 = arith.constant 0 : index
    %19 = vector.load %arg8[%c16, %c0_9] : memref<72x16xbf16, #tpu.memory_space<vmem>>, vector<8x16xbf16>
    tpu.vector_store %arg8[%c16, %c0_9], %18 {strides = array<i32>} : memref<72x16xbf16, #tpu.memory_space<vmem>>, vector<8x16xbf16>,
    %c1_i32 = arith.constant 1 : i32
    %20 = tpu.dynamic_rotate %1 by %c1_i32 dim 1 : vector<8x16xf32>, i32 -> vector<8x16xf32>
    %c3 = arith.constant 3 : index
    %c0_10 = arith.constant 0 : index
    %21 = vector.load %arg2[%c3, %c0_10] : memref<9x16xf32, #tpu.memory_space<vmem>>, vector<1x16xf32>
    %22 = vector.broadcast %21 : vector<1x16xf32> to vector<8x16xf32>
    %23 = arith.mulf %22, %20 : vector<8x16xf32>
    %24 = arith.truncf %23 : vector<8x16xf32> to vector<8x16xbf16>
    %c24 = arith.constant 24 : index
    %c0_11 = arith.constant 0 : index
    %25 = vector.load %arg8[%c24, %c0_11] : memref<72x16xbf16, #tpu.memory_space<vmem>>, vector<8x16xbf16>
    tpu.vector_store %arg8[%c24, %c0_11], %24 {strides = array<i32>} : memref<72x16xbf16, #tpu.memory_space<vmem>>, vector<8x16xbf16>,
    %c4 = arith.constant 4 : index
    %c0_12 = arith.constant 0 : index
    %26 = vector.load %arg2[%c4, %c0_12] : memref<9x16xf32, #tpu.memory_space<vmem>>, vector<1x16xf32>
    %27 = vector.broadcast %26 : vector<1x16xf32> to vector<8x16xf32>
    %28 = arith.mulf %27, %1 : vector<8x16xf32>
    %29 = arith.truncf %28 : vector<8x16xf32> to vector<8x16xbf16>
    %c32 = arith.constant 32 : index
    %c0_13 = arith.constant 0 : index
    %30 = vector.load %arg8[%c32, %c0_13] : memref<72x16xbf16, #tpu.memory_space<vmem>>, vector<8x16xbf16>
    tpu.vector_store %arg8[%c32, %c0_13], %29 {strides = array<i32>} : memref<72x16xbf16, #tpu.memory_space<vmem>>, vector<8x16xbf16>,
    %c15_i32 = arith.constant 15 : i32
    %31 = tpu.dynamic_rotate %1 by %c15_i32 dim 1 : vector<8x16xf32>, i32 -> vector<8x16xf32>
    %c5 = arith.constant 5 : index
    %c0_14 = arith.constant 0 : index
    %32 = vector.load %arg2[%c5, %c0_14] : memref<9x16xf32, #tpu.memory_space<vmem>>, vector<1x16xf32>
    %33 = vector.broadcast %32 : vector<1x16xf32> to vector<8x16xf32>
    %34 = arith.mulf %33, %31 : vector<8x16xf32>
    %35 = arith.truncf %34 : vector<8x16xf32> to vector<8x16xbf16>
    %c40 = arith.constant 40 : index
    %c0_15 = arith.constant 0 : index
    %36 = vector.load %arg8[%c40, %c0_15] : memref<72x16xbf16, #tpu.memory_space<vmem>>, vector<8x16xbf16>
    tpu.vector_store %arg8[%c40, %c0_15], %35 {strides = array<i32>} : memref<72x16xbf16, #tpu.memory_space<vmem>>, vector<8x16xbf16>,
    %c13_i32 = arith.constant 13 : i32
    %37 = tpu.dynamic_rotate %1 by %c13_i32 dim 1 : vector<8x16xf32>, i32 -> vector<8x16xf32>
    %c6 = arith.constant 6 : index
    %c0_16 = arith.constant 0 : index
    %38 = vector.load %arg2[%c6, %c0_16] : memref<9x16xf32, #tpu.memory_space<vmem>>, vector<1x16xf32>
    %39 = vector.broadcast %38 : vector<1x16xf32> to vector<8x16xf32>
    %40 = arith.mulf %39, %37 : vector<8x16xf32>
    %41 = arith.truncf %40 : vector<8x16xf32> to vector<8x16xbf16>
    %c48 = arith.constant 48 : index
    %c0_17 = arith.constant 0 : index
    %42 = vector.load %arg8[%c48, %c0_17] : memref<72x16xbf16, #tpu.memory_space<vmem>>, vector<8x16xbf16>
    tpu.vector_store %arg8[%c48, %c0_17], %41 {strides = array<i32>} : memref<72x16xbf16, #tpu.memory_space<vmem>>, vector<8x16xbf16>,
    %c12_i32 = arith.constant 12 : i32
    %43 = tpu.dynamic_rotate %1 by %c12_i32 dim 1 : vector<8x16xf32>, i32 -> vector<8x16xf32>
    %c7 = arith.constant 7 : index
    %c0_18 = arith.constant 0 : index
    %44 = vector.load %arg2[%c7, %c0_18] : memref<9x16xf32, #tpu.memory_space<vmem>>, vector<1x16xf32>
    %45 = vector.broadcast %44 : vector<1x16xf32> to vector<8x16xf32>
    %46 = arith.mulf %45, %43 : vector<8x16xf32>
    %47 = arith.truncf %46 : vector<8x16xf32> to vector<8x16xbf16>
    %c56 = arith.constant 56 : index
    %c0_19 = arith.constant 0 : index
    %48 = vector.load %arg8[%c56, %c0_19] : memref<72x16xbf16, #tpu.memory_space<vmem>>, vector<8x16xbf16>
    tpu.vector_store %arg8[%c56, %c0_19], %47 {strides = array<i32>} : memref<72x16xbf16, #tpu.memory_space<vmem>>, vector<8x16xbf16>,
    %c11_i32 = arith.constant 11 : i32
    %49 = tpu.dynamic_rotate %1 by %c11_i32 dim 1 : vector<8x16xf32>, i32 -> vector<8x16xf32>
    %c8_20 = arith.constant 8 : index
    %c0_21 = arith.constant 0 : index
    %50 = vector.load %arg2[%c8_20, %c0_21] : memref<9x16xf32, #tpu.memory_space<vmem>>, vector<1x16xf32>
    %51 = vector.broadcast %50 : vector<1x16xf32> to vector<8x16xf32>
    %52 = arith.mulf %51, %49 : vector<8x16xf32>
    %53 = arith.truncf %52 : vector<8x16xf32> to vector<8x16xbf16>
    %c64 = arith.constant 64 : index
    %c0_22 = arith.constant 0 : index
    %54 = vector.load %arg8[%c64, %c0_22] : memref<72x16xbf16, #tpu.memory_space<vmem>>, vector<8x16xbf16>
    tpu.vector_store %arg8[%c64, %c0_22], %53 {strides = array<i32>} : memref<72x16xbf16, #tpu.memory_space<vmem>>, vector<8x16xbf16>,
    %c0_23 = arith.constant 0 : index
    %c0_24 = arith.constant 0 : index
    %55 = vector.load %arg3[%c0_23, %c0_24] : memref<16x72xbf16, #tpu.memory_space<vmem>>, vector<16x72xbf16>
    %c0_25 = arith.constant 0 : index
    %c0_26 = arith.constant 0 : index
    %56 = vector.load %arg8[%c0_25, %c0_26] : memref<72x16xbf16, #tpu.memory_space<vmem>>, vector<72x16xbf16>
    %cst = arith.constant dense<0.000000e+00> : vector<16x16xf32>
    %57 = tpu.matmul %55, %56, %cst {dimension_numbers = #tpu.dot_dimension_numbers<[1], [0], [0], [1], [0, 0, 1, 1], [], []>} : vector<16x72xbf16>, vector<72x16xbf16>, vector<16x16xf32> -> vector<16x16xf32>
    %c0_27 = arith.constant 0 : index
    %c0_28 = arith.constant 0 : index
    %58 = vector.load %arg4[%c0_27, %c0_28] : memref<16x1xf32, #tpu.memory_space<vmem>>, vector<16x1xf32>
    %59 = vector.broadcast %58 : vector<16x1xf32> to vector<16x16xf32>
    %60 = arith.addf %57, %59 : vector<16x16xf32>
    %cst_29 = arith.constant 2.000000e-01 : f32
    %61 = vector.broadcast %cst_29 : f32 to vector<16x16xf32>
    %62 = arith.mulf %61, %60 : vector<16x16xf32>
    %63 = arith.maximumf %60, %62 : vector<16x16xf32>
    %c0_30 = arith.constant 0 : index
    %c0_31 = arith.constant 0 : index
    %64 = vector.load %arg5[%c0_30, %c0_31] : memref<9x16xbf16, #tpu.memory_space<vmem>>, vector<9x16xbf16>
    %65 = arith.truncf %63 : vector<16x16xf32> to vector<16x16xbf16>
    %cst_32 = arith.constant dense<0.000000e+00> : vector<9x16xf32>
    %66 = tpu.matmul %64, %65, %cst_32 {dimension_numbers = #tpu.dot_dimension_numbers<[1], [0], [0], [1], [0, 0, 1, 1], [], []>} : vector<9x16xbf16>, vector<16x16xbf16>, vector<9x16xf32> -> vector<9x16xf32>
    %cst_33 = arith.constant 0.000000e+00 : f32
    %67 = vector.broadcast %cst_33 : f32 to vector<1x16xf32>
    %68 = vector.extract_strided_slice %66 {offsets = [0, 0], sizes = [1, 16], strides = [1, 1]} : vector<9x16xf32> to vector<1x16xf32>
    %c5_i32_34 = arith.constant 5 : i32
    %69 = tpu.dynamic_rotate %68 by %c5_i32_34 dim 1 : vector<1x16xf32>, i32 -> vector<1x16xf32>
    %c0_35 = arith.constant 0 : index
    %c0_36 = arith.constant 0 : index
    %70 = vector.load %arg2[%c0_35, %c0_36] : memref<9x16xf32, #tpu.memory_space<vmem>>, vector<1x16xf32>
    %71 = arith.mulf %70, %69 : vector<1x16xf32>
    %72 = arith.addf %67, %71 : vector<1x16xf32>
    %73 = vector.extract_strided_slice %66 {offsets = [1, 0], sizes = [1, 16], strides = [1, 1]} : vector<9x16xf32> to vector<1x16xf32>
    %c4_i32_37 = arith.constant 4 : i32
    %74 = tpu.dynamic_rotate %73 by %c4_i32_37 dim 1 : vector<1x16xf32>, i32 -> vector<1x16xf32>
    %c1_38 = arith.constant 1 : index
    %c0_39 = arith.constant 0 : index
    %75 = vector.load %arg2[%c1_38, %c0_39] : memref<9x16xf32, #tpu.memory_space<vmem>>, vector<1x16xf32>
    %76 = arith.mulf %75, %74 : vector<1x16xf32>
    %77 = arith.addf %72, %76 : vector<1x16xf32>
    %78 = vector.extract_strided_slice %66 {offsets = [2, 0], sizes = [1, 16], strides = [1, 1]} : vector<9x16xf32> to vector<1x16xf32>
    %c3_i32_40 = arith.constant 3 : i32
    %79 = tpu.dynamic_rotate %78 by %c3_i32_40 dim 1 : vector<1x16xf32>, i32 -> vector<1x16xf32>
    %c2_41 = arith.constant 2 : index
    %c0_42 = arith.constant 0 : index
    %80 = vector.load %arg2[%c2_41, %c0_42] : memref<9x16xf32, #tpu.memory_space<vmem>>, vector<1x16xf32>
    %81 = arith.mulf %80, %79 : vector<1x16xf32>
    %82 = arith.addf %77, %81 : vector<1x16xf32>
    %83 = vector.extract_strided_slice %66 {offsets = [3, 0], sizes = [1, 16], strides = [1, 1]} : vector<9x16xf32> to vector<1x16xf32>
    %c1_i32_43 = arith.constant 1 : i32
    %84 = tpu.dynamic_rotate %83 by %c1_i32_43 dim 1 : vector<1x16xf32>, i32 -> vector<1x16xf32>
    %c3_44 = arith.constant 3 : index
    %c0_45 = arith.constant 0 : index
    %85 = vector.load %arg2[%c3_44, %c0_45] : memref<9x16xf32, #tpu.memory_space<vmem>>, vector<1x16xf32>
    %86 = arith.mulf %85, %84 : vector<1x16xf32>
    %87 = arith.addf %82, %86 : vector<1x16xf32>
    %88 = vector.extract_strided_slice %66 {offsets = [4, 0], sizes = [1, 16], strides = [1, 1]} : vector<9x16xf32> to vector<1x16xf32>
    %c4_46 = arith.constant 4 : index
    %c0_47 = arith.constant 0 : index
    %89 = vector.load %arg2[%c4_46, %c0_47] : memref<9x16xf32, #tpu.memory_space<vmem>>, vector<1x16xf32>
    %90 = arith.mulf %89, %88 : vector<1x16xf32>
    %91 = arith.addf %87, %90 : vector<1x16xf32>
    %92 = vector.extract_strided_slice %66 {offsets = [5, 0], sizes = [1, 16], strides = [1, 1]} : vector<9x16xf32> to vector<1x16xf32>
    %c15_i32_48 = arith.constant 15 : i32
    %93 = tpu.dynamic_rotate %92 by %c15_i32_48 dim 1 : vector<1x16xf32>, i32 -> vector<1x16xf32>
    %c5_49 = arith.constant 5 : index
    %c0_50 = arith.constant 0 : index
    %94 = vector.load %arg2[%c5_49, %c0_50] : memref<9x16xf32, #tpu.memory_space<vmem>>, vector<1x16xf32>
    %95 = arith.mulf %94, %93 : vector<1x16xf32>
    %96 = arith.addf %91, %95 : vector<1x16xf32>
    %97 = vector.extract_strided_slice %66 {offsets = [6, 0], sizes = [1, 16], strides = [1, 1]} : vector<9x16xf32> to vector<1x16xf32>
    %c13_i32_51 = arith.constant 13 : i32
    %98 = tpu.dynamic_rotate %97 by %c13_i32_51 dim 1 : vector<1x16xf32>, i32 -> vector<1x16xf32>
    %c6_52 = arith.constant 6 : index
    %c0_53 = arith.constant 0 : index
    %99 = vector.load %arg2[%c6_52, %c0_53] : memref<9x16xf32, #tpu.memory_space<vmem>>, vector<1x16xf32>
    %100 = arith.mulf %99, %98 : vector<1x16xf32>
    %101 = arith.addf %96, %100 : vector<1x16xf32>
    %102 = vector.extract_strided_slice %66 {offsets = [7, 0], sizes = [1, 16], strides = [1, 1]} : vector<9x16xf32> to vector<1x16xf32>
    %c12_i32_54 = arith.constant 12 : i32
    %103 = tpu.dynamic_rotate %102 by %c12_i32_54 dim 1 : vector<1x16xf32>, i32 -> vector<1x16xf32>
    %c7_55 = arith.constant 7 : index
    %c0_56 = arith.constant 0 : index
    %104 = vector.load %arg2[%c7_55, %c0_56] : memref<9x16xf32, #tpu.memory_space<vmem>>, vector<1x16xf32>
    %105 = arith.mulf %104, %103 : vector<1x16xf32>
    %106 = arith.addf %101, %105 : vector<1x16xf32>
    %107 = vector.extract_strided_slice %66 {offsets = [8, 0], sizes = [1, 16], strides = [1, 1]} : vector<9x16xf32> to vector<1x16xf32>
    %c11_i32_57 = arith.constant 11 : i32
    %108 = tpu.dynamic_rotate %107 by %c11_i32_57 dim 1 : vector<1x16xf32>, i32 -> vector<1x16xf32>
    %c8_58 = arith.constant 8 : index
    %c0_59 = arith.constant 0 : index
    %109 = vector.load %arg2[%c8_58, %c0_59] : memref<9x16xf32, #tpu.memory_space<vmem>>, vector<1x16xf32>
    %110 = arith.mulf %109, %108 : vector<1x16xf32>
    %111 = arith.addf %106, %110 : vector<1x16xf32>
    %c0_60 = arith.constant 0 : index
    %c0_61 = arith.constant 0 : index
    %112 = vector.load %arg6[%c0_60, %c0_61] : memref<1x1xf32, #tpu.memory_space<vmem>>, vector<1x1xf32>
    %113 = vector.broadcast %112 : vector<1x1xf32> to vector<1x16xf32>
    %114 = arith.addf %111, %113 : vector<1x16xf32>
    %115 = vector.shape_cast %114 : vector<1x16xf32> to vector<1x1x16xf32>
    %c0_62 = arith.constant 0 : index
    %c0_63 = arith.constant 0 : index
    %c0_64 = arith.constant 0 : index
    %116 = vector.load %arg7[%c0_62, %c0_63, %c0_64] : memref<1x1x16xf32, #tpu.memory_space<vmem>>, vector<1x1x16xf32>
    tpu.vector_store %arg7[%c0_62, %c0_63, %c0_64], %115 {strides = array<i32>} : memref<1x1x16xf32, #tpu.memory_space<vmem>>, vector<1x1x16xf32>,
    return
  }
  func.func @transform_0(%arg0: i32) -> (i32, i32, i32) {
    %c0_i32 = arith.constant 0 : i32
    %c0_i32_0 = arith.constant 0 : i32
    %c0_i32_1 = arith.constant 0 : i32
    return %arg0, %c0_i32, %c0_i32_0 : i32, i32, i32
  }
  func.func @transform_1(%arg0: i32) -> (i32, i32) {
    %c0_i32 = arith.constant 0 : i32
    %c0_i32_0 = arith.constant 0 : i32
    %c0_i32_1 = arith.constant 0 : i32
    return %c0_i32, %c0_i32_0 : i32, i32
  }
  func.func @transform_2(%arg0: i32) -> (i32, i32) {
    %c0_i32 = arith.constant 0 : i32
    %c0_i32_0 = arith.constant 0 : i32
    %c0_i32_1 = arith.constant 0 : i32
    return %c0_i32, %c0_i32_0 : i32, i32
  }
  func.func @transform_3(%arg0: i32) -> (i32, i32) {
    %c0_i32 = arith.constant 0 : i32
    %c0_i32_0 = arith.constant 0 : i32
    %c0_i32_1 = arith.constant 0 : i32
    return %c0_i32, %c0_i32_0 : i32, i32
  }
  func.func @transform_4(%arg0: i32) -> (i32, i32) {
    %c0_i32 = arith.constant 0 : i32
    %c0_i32_0 = arith.constant 0 : i32
    %c0_i32_1 = arith.constant 0 : i32
    return %c0_i32, %c0_i32_0 : i32, i32
  }
  func.func @transform_5(%arg0: i32) -> (i32, i32) {
    %c0_i32 = arith.constant 0 : i32
    %c0_i32_0 = arith.constant 0 : i32
    %c0_i32_1 = arith.constant 0 : i32
    return %c0_i32, %c0_i32_0 : i32, i32
  }
  func.func @transform_6(%arg0: i32) -> (i32, i32, i32) {
    %c0_i32 = arith.constant 0 : i32
    %c0_i32_0 = arith.constant 0 : i32
    %c0_i32_1 = arith.constant 0 : i32
    return %arg0, %c0_i32, %c0_i32_0 : i32, i32, i32
  }
}

</mosaic_0001>

<llo_original>
// kernel: multi_scale_discriminator.5
$region0: #{multi_scale_discriminator.5}
  #allocation0 [shape = 'u32[]', space=smem, size = 0x4, offset = 0x4, fixed_abs, tag = 'smem constant byte address 0x4 - core index']
  #allocation1 [shape = 'u32[72,128]{1,0:T(1,128)}', space=vmem, size = 0x9000, scoped, tag = 'internal scratch']
  #allocation2 [shape = 'bf16[72,16]{1,0:T(8,128)(2,1)}', space=vmem, size = 0x4800, scoped, tag = 'scratch operand']
  #allocation3 [shape = 'f32[1,1]{1,0:T(1,128)S(1)}', space=vmem, size = 0x200, scoped, tag = 'scoped memory for multi_scale_discriminator.5']
  %s0 = inlined_call_operand.vmem [shape: f32[2,8,16], index: 0, kind: input, shape index: {}]
  %s1 = inlined_call_operand.vmem [shape: f32[9,16], index: 1, kind: input, shape index: {}]
  %s2 = inlined_call_operand.vmem [shape: bf16[16,72], index: 2, kind: input, shape index: {}]
  %s3 = inlined_call_operand.vmem [shape: f32[16,1], index: 3, kind: input, shape index: {}]
  %s4 = inlined_call_operand.vmem [shape: bf16[9,16], index: 4, kind: input, shape index: {}]
  %s5 = inlined_call_operand.<no memory space> [shape: f32[1,1], index: 5, kind: input, shape index: {}]
  %s6 = inlined_call_operand.vmem [shape: f32[2,1,16], index: 6, kind: output, shape index: {}]
  %s7 = sld [smem:[#allocation0]]
  $region57: #{multi_scale_discriminator.5} parent=0
    _
  %s9 = ssub.s32 1, %s7
  %s10 = scalar_select 0, %s9, %s7
  %v11 = vstv %s5
  %12 = vst [vmem:[#allocation3] sm:$0x1] %v11
  loop: start=0, step=1, limit=4
  $region2: #{multi_scale_discriminator.5} parent=0 // loop_pre_header
    _
  $region3: #{multi_scale_discriminator.5} parent=0 // loop_header
    %s14 = sphi 0, %s18
    %p15 = scmp.ge.s32.totalorder %s14, 4
    %s24 = sphi 0, %s26
    %s27 = sphi 0, %s24
    %s28 = sphi 0, %s27
    %s44 = sphi 0, %s28
    %s48 = sphi 0, %s48
    %s50 = sphi 0, %s48
    %s51 = sphi 0, %s50
    %s65 = sphi 0, %s51
    %s69 = sphi 0, %s69
    %s71 = sphi 0, %s69
    %s72 = sphi 0, %s71
    %s86 = sphi 0, %s72
    %s90 = sphi 0, %s90
    %s92 = sphi 0, %s90
    %s93 = sphi 0, %s92
    %s107 = sphi 0, %s93
    %s111 = sphi 0, %s111
    %s113 = sphi 0, %s111
    %s114 = sphi 0, %s113
    %s128 = sphi 0, %s114
    %s132 = sphi 0, %s132
    %s134 = sphi 0, %s132
    %s135 = sphi 0, %s134
    %s149 = sphi 0, %s135
    %s155 = sphi 0, %s157
    %s158 = sphi 0, %s155
    %s159 = sphi 0, %s158
    %s175 = sphi 0, %s159
  $region4: #{multi_scale_discriminator.5} parent=0 // loop_header_branch
    %17 = sbr.rel (%p15) target = $region8
  $region5: #{multi_scale_discriminator.5} parent=0 // loop_body
    %s19 = ssub.s32 %s14, 1
    %s20 = ssub.s32 %s14, 2
    %s21 = sadd.s32 %s14, 1
    %s22 = ssub.s32 %s14, %s21
    %p23 = scmp.eq.s32.totalorder %s22, 0
    %s25 = sadd.s32 %s24, 1
    %s26 = scalar_select %p23, %s24, %s25
    %p29 = pneg %p23
    %p30 = scmp.eq.s32.totalorder %s14, 1
    %p31 = por %p29, %p30
    %p32 = scmp.ne.s32.totalorder %s24, %s27
    %p33 = scmp.eq.s32.totalorder %s14, 0
    %p34 = por %p32, %p33
    %p35 = scmp.ne.s32.totalorder %s24, %s27
    %p36 = scmp.eq.s32.totalorder %s19, 1
    %p37 = por %p35, %p36
    %p38 = scmp.ne.s32.totalorder %s27, %s28
    %p39 = scmp.eq.s32.totalorder %s19, 0
    %p40 = por %p38, %p39
    %p41 = scmp.ne.s32.totalorder %s27, %s28
    %p42 = scmp.eq.s32.totalorder %s20, 1
    %p43 = por %p41, %p42
    %p45 = scmp.ne.s32.totalorder %s28, %s44
    %p46 = scmp.eq.s32.totalorder %s20, 0
    %p47 = por %p45, %p46
    %s49 = sadd.s32 %s48, 1
    %p52 = scmp.eq.s32.totalorder %s14, 1
    %p53 = scmp.ne.s32.totalorder %s48, %s50
    %p54 = scmp.eq.s32.totalorder %s14, 0
    %p55 = por %p53, %p54
    %p56 = scmp.ne.s32.totalorder %s48, %s50
    %p57 = scmp.eq.s32.totalorder %s19, 1
    %p58 = por %p56, %p57
    %p59 = scmp.ne.s32.totalorder %s50, %s51
    %p60 = scmp.eq.s32.totalorder %s19, 0
    %p61 = por %p59, %p60
    %p62 = scmp.ne.s32.totalorder %s50, %s51
    %p63 = scmp.eq.s32.totalorder %s20, 1
    %p64 = por %p62, %p63
    %p66 = scmp.ne.s32.totalorder %s51, %s65
    %p67 = scmp.eq.s32.totalorder %s20, 0
    %p68 = por %p66, %p67
    %s70 = sadd.s32 %s69, 1
    %p73 = scmp.eq.s32.totalorder %s14, 1
    %p74 = scmp.ne.s32.totalorder %s69, %s71
    %p75 = scmp.eq.s32.totalorder %s14, 0
    %p76 = por %p74, %p75
    %p77 = scmp.ne.s32.totalorder %s69, %s71
    %p78 = scmp.eq.s32.totalorder %s19, 1
    %p79 = por %p77, %p78
    %p80 = scmp.ne.s32.totalorder %s71, %s72
    %p81 = scmp.eq.s32.totalorder %s19, 0
    %p82 = por %p80, %p81
    %p83 = scmp.ne.s32.totalorder %s71, %s72
    %p84 = scmp.eq.s32.totalorder %s20, 1
    %p85 = por %p83, %p84
    %p87 = scmp.ne.s32.totalorder %s72, %s86
    %p88 = scmp.eq.s32.totalorder %s20, 0
    %p89 = por %p87, %p88
    %s91 = sadd.s32 %s90, 1
    %p94 = scmp.eq.s32.totalorder %s14, 1
    %p95 = scmp.ne.s32.totalorder %s90, %s92
    %p96 = scmp.eq.s32.totalorder %s14, 0
    %p97 = por %p95, %p96
    %p98 = scmp.ne.s32.totalorder %s90, %s92
    %p99 = scmp.eq.s32.totalorder %s19, 1
    %p100 = por %p98, %p99
    %p101 = scmp.ne.s32.totalorder %s92, %s93
    %p102 = scmp.eq.s32.totalorder %s19, 0
    %p103 = por %p101, %p102
    %p104 = scmp.ne.s32.totalorder %s92, %s93
    %p105 = scmp.eq.s32.totalorder %s20, 1
    %p106 = por %p104, %p105
    %p108 = scmp.ne.s32.totalorder %s93, %s107
    %p109 = scmp.eq.s32.totalorder %s20, 0
    %p110 = por %p108, %p109
    %s112 = sadd.s32 %s111, 1
    %p115 = scmp.eq.s32.totalorder %s14, 1
    %p116 = scmp.ne.s32.totalorder %s111, %s113
    %p117 = scmp.eq.s32.totalorder %s14, 0
    %p118 = por %p116, %p117
    %p119 = scmp.ne.s32.totalorder %s111, %s113
    %p120 = scmp.eq.s32.totalorder %s19, 1
    %p121 = por %p119, %p120
    %p122 = scmp.ne.s32.totalorder %s113, %s114
    %p123 = scmp.eq.s32.totalorder %s19, 0
    %p124 = por %p122, %p123
    %p125 = scmp.ne.s32.totalorder %s113, %s114
    %p126 = scmp.eq.s32.totalorder %s20, 1
    %p127 = por %p125, %p126
    %p129 = scmp.ne.s32.totalorder %s114, %s128
    %p130 = scmp.eq.s32.totalorder %s20, 0
    %p131 = por %p129, %p130
    %s133 = sadd.s32 %s132, 1
    %p136 = scmp.eq.s32.totalorder %s14, 1
    %p137 = scmp.ne.s32.totalorder %s132, %s134
    %p138 = scmp.eq.s32.totalorder %s14, 0
    %p139 = por %p137, %p138
    %p140 = scmp.ne.s32.totalorder %s132, %s134
    %p141 = scmp.eq.s32.totalorder %s19, 1
    %p142 = por %p140, %p141
    %p143 = scmp.ne.s32.totalorder %s134, %s135
    %p144 = scmp.eq.s32.totalorder %s19, 0
    %p145 = por %p143, %p144
    %p146 = scmp.ne.s32.totalorder %s134, %s135
    %p147 = scmp.eq.s32.totalorder %s20, 1
    %p148 = por %p146, %p147
    %p150 = scmp.ne.s32.totalorder %s135, %s149
    %p151 = scmp.eq.s32.totalorder %s20, 0
    %p152 = por %p150, %p151
    %s153 = ssub.s32 %s14, %s21
    %p154 = scmp.eq.s32.totalorder %s153, 0
    %s156 = sadd.s32 %s155, 1
    %s157 = scalar_select %p154, %s155, %s156
    %p160 = pneg %p154
    %p161 = scmp.eq.s32.totalorder %s14, 1
    %p162 = por %p160, %p161
    %p163 = scmp.ne.s32.totalorder %s155, %s158
    %p164 = scmp.eq.s32.totalorder %s14, 0
    %p165 = por %p163, %p164
    %p166 = scmp.ne.s32.totalorder %s155, %s158
    %p167 = scmp.eq.s32.totalorder %s19, 1
    %p168 = por %p166, %p167
    %p169 = scmp.ne.s32.totalorder %s158, %s159
    %p170 = scmp.eq.s32.totalorder %s19, 0
    %p171 = por %p169, %p170
    %p172 = scmp.ne.s32.totalorder %s158, %s159
    %p173 = scmp.eq.s32.totalorder %s20, 1
    %p174 = por %p172, %p173
    %p176 = scmp.ne.s32.totalorder %s159, %s175
    %p177 = scmp.eq.s32.totalorder %s20, 0
    %p178 = por %p176, %p177
    %p179 = scmp.le.s32.totalorder 1, %s14
    %p180 = scmp.lt.s32.totalorder %s14, 3
    %p181 = pnand %p179, %p180
    %p182 = pneg %p181
    // Predicated region
    $region9: #{multi_scale_discriminator.5} parent=5 // pred_check
      _
    $region10: #{multi_scale_discriminator.5} parent=5 // pred_check_branch
      %184 = sbr.rel (%p181) target = $region12
    $region11: #{multi_scale_discriminator.5} parent=5 // pred_region
      %s185 = ssub.s32 %s14, 1
      // Predicated region
      $region13: #{multi_scale_discriminator.5} parent=11 // pred_check
        %p186 = pneg %p61
      $region14: #{multi_scale_discriminator.5} parent=11 // pred_check_branch
        %188 = sbr.rel (%p186) target = $region16
      $region15: #{multi_scale_discriminator.5} parent=11 // pred_region
        _
      $region16: #{multi_scale_discriminator.5} parent=11 // pred_fallthru
        _
      // Predicated region
      $region17: #{multi_scale_discriminator.5} parent=11 // pred_check
        %p189 = pneg %p82
      $region18: #{multi_scale_discriminator.5} parent=11 // pred_check_branch
        %191 = sbr.rel (%p189) target = $region20
      $region19: #{multi_scale_discriminator.5} parent=11 // pred_region
        _
      $region20: #{multi_scale_discriminator.5} parent=11 // pred_fallthru
        _
      // Predicated region
      $region21: #{multi_scale_discriminator.5} parent=11 // pred_check
        %p192 = pneg %p103
      $region22: #{multi_scale_discriminator.5} parent=11 // pred_check_branch
        %194 = sbr.rel (%p192) target = $region24
      $region23: #{multi_scale_discriminator.5} parent=11 // pred_region
        _
      $region24: #{multi_scale_discriminator.5} parent=11 // pred_fallthru
        _
      // Predicated region
      $region25: #{multi_scale_discriminator.5} parent=11 // pred_check
        %p195 = pneg %p124
      $region26: #{multi_scale_discriminator.5} parent=11 // pred_check_branch
        %197 = sbr.rel (%p195) target = $region28
      $region27: #{multi_scale_discriminator.5} parent=11 // pred_region
        _
      $region28: #{multi_scale_discriminator.5} parent=11 // pred_fallthru
        _
      // Predicated region
      $region29: #{multi_scale_discriminator.5} parent=11 // pred_check
        %p198 = pneg %p145
      $region30: #{multi_scale_discriminator.5} parent=11 // pred_check_branch
        %200 = sbr.rel (%p198) target = $region32
      $region31: #{multi_scale_discriminator.5} parent=11 // pred_region
        _
      $region32: #{multi_scale_discriminator.5} parent=11 // pred_fallthru
        _
    $region12: #{multi_scale_discriminator.5} parent=5 // pred_fallthru
      _
    %p201 = scmp.lt.s32.totalorder %s14, 2
    // Predicated region
    $region33: #{multi_scale_discriminator.5} parent=5 // pred_check
      %p202 = pneg %p201
    $region34: #{multi_scale_discriminator.5} parent=5 // pred_check_branch
      %204 = sbr.rel (%p202) target = $region36
    $region35: #{multi_scale_discriminator.5} parent=5 // pred_region
      // Predicated region
      $region37: #{multi_scale_discriminator.5} parent=35 // pred_check
        %p205 = pneg %p34
      $region38: #{multi_scale_discriminator.5} parent=35 // pred_check_branch
        %207 = sbr.rel (%p205) target = $region40
      $region39: #{multi_scale_discriminator.5} parent=35 // pred_region
        %p208 = scmp.lt.s32.totalorder %s14, 1
        %s209 = scalar_select %p208, %s14, 1
        %s210 = smul.addr %s209, 8
        %s211 = scalar_lea.vmem %s0, %s210
      $region40: #{multi_scale_discriminator.5} parent=35 // pred_fallthru
        _
    $region36: #{multi_scale_discriminator.5} parent=5 // pred_fallthru
      _
    %p212 = scmp.le.s32.totalorder 1, %s14
    %p213 = scmp.lt.s32.totalorder %s14, 3
    %p214 = pnand %p212, %p213
    %p215 = pneg %p214
    // Predicated region
    $region41: #{multi_scale_discriminator.5} parent=5 // pred_check
      _
    $region42: #{multi_scale_discriminator.5} parent=5 // pred_check_branch
      %217 = sbr.rel (%p214) target = $region44
    $region43: #{multi_scale_discriminator.5} parent=5 // pred_region
      %s218 = ssub.s32 %s14, 1
      %p219 = scmp.lt.s32.totalorder %s19, 1
      %s220 = scalar_select %p219, %s19, 1
      %s221 = smul.addr %s220, 8
      %s222 = scalar_lea.vmem %s0, %s221
      %p223 = pneg %p40
      %p224 = pneg %p37
      %p225 = pneg %p61
      %p226 = pneg %p58
      %p227 = pneg %p82
      %p228 = pneg %p79
      %p229 = pneg %p103
      %p230 = pneg %p100
      %p231 = pneg %p124
      %p232 = pneg %p121
      %p233 = pneg %p145
      %p234 = pneg %p142
      %p235 = pneg %p171
      %p236 = pneg %p168
      %p237 = scmp.lt.s32.totalorder %s19, 1
      %s238 = scalar_select %p237, %s19, 1
      %s239 = scalar_lea.vmem %s6, %s238
      %p240 = scmp.lt.s32.totalorder %s19, 1
      %s241 = scalar_select %p240, %s19, 1
      %s242 = smul.addr %s241, 8
      %s243 = scalar_lea.vmem %s0, %s242
      %p244 = scmp.lt.s32.totalorder %s19, 1
      %s245 = scalar_select %p244, %s19, 1
      %s246 = scalar_lea.vmem %s6, %s245
      %v248 = vld [vmem:[%s243] sm:$0xff]
      %vm249 = vcmask 1047680
      %250 = vrot.lane.b32.xlu0 %v248, 16
      %v251 = vpop.permute.xlu0 %250
      %v252 = vsel %vm249, %v251, %v248
      %253 = vrot.lane.b32.xlu0 %v252, 16
      %v254 = vpop.permute.xlu0 %253
      %v255 = vsel %vm249, %v254, %v248
      %v256 = vld [vmem:[%s1] sm:$0x1]
      %v257 = vperm.slane %v256, 0
      %259 = vrot.lane.b32.xlu0 %v255, 117
      %v260 = vpop.permute.xlu0 %259
      %v262 = vmul.f32 %v257, %v260
      %v263 = vpack.c.bf16 %v262, %v262
      %vm264 = vcmask 125952
      %265 = vst.msk [vmem:[#allocation2] sm:$0xf] %vm264, %v263
      %v266 = vld [vmem:[%s1 + $0x1] sm:$0x1]
      %v267 = vperm.slane %v266, 0
      %268 = vrot.lane.b32.xlu0 %v255, 116
      %v269 = vpop.permute.xlu0 %268
      %v271 = vmul.f32 %v267, %v269
      %v272 = vpack.c.bf16 %v271, %v271
      %273 = vst.msk [vmem:[#allocation2 + $0x4] sm:$0xf] %vm264, %v272
      %v274 = vld [vmem:[%s1 + $0x2] sm:$0x1]
      %v275 = vperm.slane %v274, 0
      %276 = vrot.lane.b32.xlu0 %v255, 115
      %v277 = vpop.permute.xlu0 %276
      %v279 = vmul.f32 %v275, %v277
      %v280 = vpack.c.bf16 %v279, %v279
      %281 = vst.msk [vmem:[#allocation2 + $0x8] sm:$0xf] %vm264, %v280
      %v282 = vld [vmem:[%s1 + $0x3] sm:$0x1]
      %v283 = vperm.slane %v282, 0
      %284 = vrot.lane.b32.xlu0 %v255, 113
      %v285 = vpop.permute.xlu0 %284
      %v287 = vmul.f32 %v283, %v285
      %v288 = vpack.c.bf16 %v287, %v287
      %289 = vst.msk [vmem:[#allocation2 + $0xc] sm:$0xf] %vm264, %v288
      %v290 = vld [vmem:[%s1 + $0x4] sm:$0x1]
      %v291 = vperm.slane %v290, 0
      %v292 = vmul.f32 %v291, %v248
      %v293 = vpack.c.bf16 %v292, %v292
      %294 = vst.msk [vmem:[#allocation2 + $0x10] sm:$0xf] %vm264, %v293
      %v295 = vld [vmem:[%s1 + $0x5] sm:$0x1]
      %v296 = vperm.slane %v295, 0
      %297 = vrot.lane.b32.xlu0 %v255, 127
      %v298 = vpop.permute.xlu0 %297
      %v300 = vmul.f32 %v296, %v298
      %v301 = vpack.c.bf16 %v300, %v300
      %302 = vst.msk [vmem:[#allocation2 + $0x14] sm:$0xf] %vm264, %v301
      %v303 = vld [vmem:[%s1 + $0x6] sm:$0x1]
      %v304 = vperm.slane %v303, 0
      %305 = vrot.lane.b32.xlu0 %v255, 125
      %v306 = vpop.permute.xlu0 %305
      %v308 = vmul.f32 %v304, %v306
      %v309 = vpack.c.bf16 %v308, %v308
      %310 = vst.msk [vmem:[#allocation2 + $0x18] sm:$0xf] %vm264, %v309
      %v311 = vld [vmem:[%s1 + $0x7] sm:$0x1]
      %v312 = vperm.slane %v311, 0
      %313 = vrot.lane.b32.xlu0 %v255, 124
      %v314 = vpop.permute.xlu0 %313
      %v316 = vmul.f32 %v312, %v314
      %v317 = vpack.c.bf16 %v316, %v316
      %318 = vst.msk [vmem:[#allocation2 + $0x1c] sm:$0xf] %vm264, %v317
      %v319 = vld [vmem:[%s1 + $0x8] sm:$0x1]
      %v320 = vperm.slane %v319, 0
      %321 = vrot.lane.b32.xlu0 %v255, 123
      %v322 = vpop.permute.xlu0 %321
      %v324 = vmul.f32 %v320, %v322
      %v325 = vpack.c.bf16 %v324, %v324
      %326 = vst.msk [vmem:[#allocation2 + $0x20] sm:$0xf] %vm264, %v325
      %v327 = vld [vmem:[%s2] sm:$0xf]
      %v328 = vld [vmem:[%s2 + $0x4] sm:$0xf]
      %v329 = vld [vmem:[#allocation2] sm:$0xf]
      %v330 = vld [vmem:[#allocation2 + $0x4] sm:$0xf]
      %v331 = vld [vmem:[#allocation2 + $0x8] sm:$0xf]
      %v332 = vld [vmem:[#allocation2 + $0xc] sm:$0xf]
      %v333 = vld [vmem:[#allocation2 + $0x10] sm:$0xf]
      %v334 = vld [vmem:[#allocation2 + $0x14] sm:$0xf]
      %v335 = vld [vmem:[#allocation2 + $0x18] sm:$0xf]
      %v336 = vld [vmem:[#allocation2 + $0x1c] sm:$0xf]
      %v337 = vld [vmem:[#allocation2 + $0x20] sm:$0xf]
      %v338 = vld [vmem:[%s3] sm:$0xff]
      %v339 = vld [vmem:[%s3 + $0x8] sm:$0xff]
      %341 = vset.pattern.permute.xlu0 0
      %342 = vperm.xlu0 %341, %v338
      %v343 = vpop.permute.xlu0 %342
      %346 = vset.pattern.permute.xlu0 0
      %347 = vperm.xlu0 %346, %v339
      %v348 = vpop.permute.xlu0 %347
      %v352 = vunpack.c.l.b16 %v327
      %v353 = vunpack.c.l.b16 %v328
      %v354 = vpack.c.b16 %v353, %v352
      %v364 = vunpack.c.l.b16 %v329
      %v365 = vunpack.c.l.b16 %v330
      %v366 = vunpack.c.l.b16 %v331
      %v367 = vunpack.c.l.b16 %v332
      %v368 = vunpack.c.l.b16 %v333
      %v369 = vunpack.c.l.b16 %v334
      %v370 = vunpack.c.l.b16 %v335
      %v371 = vunpack.c.l.b16 %v336
      %v372 = vunpack.c.l.b16 %v337
      %v373 = vpack.c.b16 %v365, %v364
      %v374 = vpack.c.b16 %v367, %v366
      %v375 = vpack.c.b16 %v369, %v368
      %v376 = vpack.c.b16 %v371, %v370
      %v377 = vpack.c.b16 %v372, %v372
      %vm382 = vcmask 588800
      %v384 = vsel %vm382, %v354, 0
      %vm386 = vcmask 1043456
      %v388 = vsel %vm386, %v377, 0
      %390 = vmatpush.bf16.msra.mxu0 0
      %391 = vmatpush.bf16.msra.mxu0 0
      %392 = vmatpush.bf16.msra.mxu0 0
      %393 = vmatpush.bf16.msra.mxu0 %v388
      %394 = vmatpush.bf16.msra.mxu0 %v376
      %395 = vmatpush.bf16.msra.mxu0 %v375
      %396 = vmatpush.bf16.msra.mxu0 %v374
      %397 = vmatpush.bf16.msra.mxu0 %v373
      %398 = vmatmul.bf16.gmra.mxu0 %v384
      %v399 = vpop.f32.mrf.mxu0
      %v400 = vadd.f32 %v343, %v399
      %v401 = vpop.f32.mrf.mxu0
      %v402 = vadd.f32 %v348, %v401
      %403 = vdwg.mxu0
      %v404 = vmul.f32 %v400, 0.2
      %v405 = vmul.f32 %v402, 0.2
      %v406 = vmax.f32 %v400, %v404
      %v407 = vmax.f32 %v402, %v405
      %v408 = vld [vmem:[%s4] sm:$0xf]
      %v409 = vld [vmem:[%s4 + $0x4] sm:$0x1]
      %v410 = vpack.c.bf16 %v407, %v406
      %v413 = vunpack.c.l.b16 %v408
      %v414 = vunpack.c.l.b16 %v409
      %v415 = vpack.c.b16 %v414, %v413
      %vm416 = vcmask 130048
      %v418 = vsel %vm416, %v415, 0
      %420 = vmatpush.bf16.msra.mxu0 0
      %421 = vmatpush.bf16.msra.mxu0 0
      %422 = vmatpush.bf16.msra.mxu0 0
      %423 = vmatpush.bf16.msra.mxu0 0
      %424 = vmatpush.bf16.msra.mxu0 0
      %425 = vmatpush.bf16.msra.mxu0 0
      %426 = vmatpush.bf16.msra.mxu0 0
      %427 = vmatpush.bf16.msra.mxu0 %v410
      %428 = vmatmul.bf16.gmra.mxu0 %v418
      %v429 = vpop.f32.mrf.mxu0
      %v430 = vadd.f32 0.0, %v429
      %v431 = vpop.f32.mrf.mxu0
      %v432 = vadd.f32 0.0, %v431
      %433 = vdwg.mxu0
      %434 = vrot.lane.b32.xlu0 %v430, 16
      %v435 = vpop.permute.xlu0 %434
      %v436 = vsel %vm249, %v435, %v430
      %437 = vrot.lane.b32.xlu0 %v436, 16
      %v438 = vpop.permute.xlu0 %437
      %v439 = vsel %vm249, %v438, %v430
      %v440 = vld [vmem:[%s1] sm:$0x1]
      %442 = vrot.lane.b32.xlu0 %v439, 117
      %v443 = vpop.permute.xlu0 %442
      %v445 = vmul.f32 %v440, %v443
      %v446 = vadd.f32 %v445, 0.0
      %v448 = vrot.slane %v430, 1
      %450 = vrot.lane.b32.xlu0 %v448, 16
      %v451 = vpop.permute.xlu0 %450
      %v452 = vsel %vm249, %v451, %v448
      %453 = vrot.lane.b32.xlu0 %v452, 16
      %v454 = vpop.permute.xlu0 %453
      %v455 = vsel %vm249, %v454, %v448
      %v456 = vld [vmem:[%s1 + $0x1] sm:$0x1]
      %458 = vrot.lane.b32.xlu0 %v455, 116
      %v459 = vpop.permute.xlu0 %458
      %v461 = vmul.f32 %v456, %v459
      %v462 = vadd.f32 %v446, %v461
      %v463 = vrot.slane %v430, 2
      %465 = vrot.lane.b32.xlu0 %v463, 16
      %v466 = vpop.permute.xlu0 %465
      %v467 = vsel %vm249, %v466, %v463
      %468 = vrot.lane.b32.xlu0 %v467, 16
      %v469 = vpop.permute.xlu0 %468
      %v470 = vsel %vm249, %v469, %v463
      %v471 = vld [vmem:[%s1 + $0x2] sm:$0x1]
      %473 = vrot.lane.b32.xlu0 %v470, 115
      %v474 = vpop.permute.xlu0 %473
      %v476 = vmul.f32 %v471, %v474
      %v477 = vadd.f32 %v462, %v476
      %v478 = vrot.slane %v430, 3
      %480 = vrot.lane.b32.xlu0 %v478, 16
      %v481 = vpop.permute.xlu0 %480
      %v482 = vsel %vm249, %v481, %v478
      %483 = vrot.lane.b32.xlu0 %v482, 16
      %v484 = vpop.permute.xlu0 %483
      %v485 = vsel %vm249, %v484, %v478
      %v486 = vld [vmem:[%s1 + $0x3] sm:$0x1]
      %488 = vrot.lane.b32.xlu0 %v485, 113
      %v489 = vpop.permute.xlu0 %488
      %v491 = vmul.f32 %v486, %v489
      %v492 = vadd.f32 %v477, %v491
      %v493 = vld [vmem:[%s1 + $0x4] sm:$0x1]
      %v494 = vrot.slane %v430, 4
      %v496 = vmul.f32 %v493, %v494
      %v497 = vadd.f32 %v492, %v496
      %v498 = vrot.slane %v430, 5
      %500 = vrot.lane.b32.xlu0 %v498, 16
      %v501 = vpop.permute.xlu0 %500
      %v502 = vsel %vm249, %v501, %v498
      %503 = vrot.lane.b32.xlu0 %v502, 16
      %v504 = vpop.permute.xlu0 %503
      %v505 = vsel %vm249, %v504, %v498
      %v506 = vld [vmem:[%s1 + $0x5] sm:$0x1]
      %508 = vrot.lane.b32.xlu0 %v505, 127
      %v509 = vpop.permute.xlu0 %508
      %v511 = vmul.f32 %v506, %v509
      %v512 = vadd.f32 %v497, %v511
      %v513 = vrot.slane %v430, 6
      %515 = vrot.lane.b32.xlu0 %v513, 16
      %v516 = vpop.permute.xlu0 %515
      %v517 = vsel %vm249, %v516, %v513
      %518 = vrot.lane.b32.xlu0 %v517, 16
      %v519 = vpop.permute.xlu0 %518
      %v520 = vsel %vm249, %v519, %v513
      %v521 = vld [vmem:[%s1 + $0x6] sm:$0x1]
      %523 = vrot.lane.b32.xlu0 %v520, 125
      %v524 = vpop.permute.xlu0 %523
      %v526 = vmul.f32 %v521, %v524
      %v527 = vadd.f32 %v512, %v526
      %v528 = vrot.slane %v430, 7
      %530 = vrot.lane.b32.xlu0 %v528, 16
      %v531 = vpop.permute.xlu0 %530
      %v532 = vsel %vm249, %v531, %v528
      %533 = vrot.lane.b32.xlu0 %v532, 16
      %v534 = vpop.permute.xlu0 %533
      %v535 = vsel %vm249, %v534, %v528
      %v536 = vld [vmem:[%s1 + $0x7] sm:$0x1]
      %538 = vrot.lane.b32.xlu0 %v535, 124
      %v539 = vpop.permute.xlu0 %538
      %v541 = vmul.f32 %v536, %v539
      %v542 = vadd.f32 %v527, %v541
      %543 = vrot.lane.b32.xlu0 %v432, 16
      %v544 = vpop.permute.xlu0 %543
      %v545 = vsel %vm249, %v544, %v432
      %546 = vrot.lane.b32.xlu0 %v545, 16
      %v547 = vpop.permute.xlu0 %546
      %v548 = vsel %vm249, %v547, %v432
      %v549 = vld [vmem:[%s1 + $0x8] sm:$0x1]
      %551 = vrot.lane.b32.xlu0 %v548, 123
      %v552 = vpop.permute.xlu0 %551
      %v554 = vmul.f32 %v549, %v552
      %v555 = vadd.f32 %v542, %v554
      %v556 = vld [vmem:[#allocation3] sm:$0x1]
      %558 = vset.pattern.permute.xlu0 0
      %559 = vperm.xlu0 %558, %v556
      %v560 = vpop.permute.xlu0 %559
      %v562 = vperm.slane %v560, 0
      %v563 = vadd.f32 %v555, %v562
      %vm564 = vcmask 122880
      %565 = vst.msk [vmem:[%s246] sm:$0x1] %vm564, %v563
      %p566 = scmp.lt.s32.totalorder %s19, 1
      %s567 = scalar_select %p566, %s19, 1
      %s568 = scalar_lea.vmem %s6, %s567
      // Predicated region
      $region45: #{multi_scale_discriminator.5} parent=43 // pred_check
        %p569 = pneg %p168
      $region46: #{multi_scale_discriminator.5} parent=43 // pred_check_branch
        %571 = sbr.rel (%p569) target = $region48
      $region47: #{multi_scale_discriminator.5} parent=43 // pred_region
        _
      $region48: #{multi_scale_discriminator.5} parent=43 // pred_fallthru
        _
    $region44: #{multi_scale_discriminator.5} parent=5 // pred_fallthru
      _
    %p572 = scmp.le.s32.totalorder 2, %s14
    // Predicated region
    $region49: #{multi_scale_discriminator.5} parent=5 // pred_check
      %p573 = pneg %p572
    $region50: #{multi_scale_discriminator.5} parent=5 // pred_check_branch
      %575 = sbr.rel (%p573) target = $region52
    $region51: #{multi_scale_discriminator.5} parent=5 // pred_region
      %s576 = ssub.s32 %s14, 2
      // Predicated region
      $region53: #{multi_scale_discriminator.5} parent=51 // pred_check
        %p577 = pneg %p174
      $region54: #{multi_scale_discriminator.5} parent=51 // pred_check_branch
        %579 = sbr.rel (%p577) target = $region56
      $region55: #{multi_scale_discriminator.5} parent=51 // pred_region
        %p580 = scmp.lt.s32.totalorder %s20, 1
        %s581 = scalar_select %p580, %s20, 1
        %s582 = scalar_lea.vmem %s6, %s581
      $region56: #{multi_scale_discriminator.5} parent=51 // pred_fallthru
        _
    $region52: #{multi_scale_discriminator.5} parent=5 // pred_fallthru
      _
  $region6: #{multi_scale_discriminator.5} parent=0 // loop_footer
    %s18 = sadd.s32 1, %s14
  $region7: #{multi_scale_discriminator.5} parent=0 // loop_footer_branch
    %13 = sbr.rel target = $region3
  $region8: #{multi_scale_discriminator.5} parent=0 // loop_exit
    _

// kernel: multi_scale_discriminator.4
$region0: #{multi_scale_discriminator.4}
  #allocation0 [shape = 'u32[]', space=smem, size = 0x4, offset = 0x4, fixed_abs, tag = 'smem constant byte address 0x4 - core index']
  #allocation1 [shape = 'u32[72,128]{1,0:T(1,128)}', space=vmem, size = 0x9000, scoped, tag = 'internal scratch']
  #allocation2 [shape = 'bf16[72,64]{1,0:T(8,128)(2,1)}', space=vmem, size = 0x4800, scoped, tag = 'scratch operand']
  #allocation3 [shape = 'f32[1,1]{1,0:T(1,128)S(1)}', space=vmem, size = 0x200, scoped, tag = 'scoped memory for multi_scale_discriminator.4']
  %s0 = inlined_call_operand.vmem [shape: f32[2,8,64], index: 0, kind: input, shape index: {}]
  %s1 = inlined_call_operand.vmem [shape: f32[9,64], index: 1, kind: input, shape index: {}]
  %s2 = inlined_call_operand.vmem [shape: bf16[16,72], index: 2, kind: input, shape index: {}]
  %s3 = inlined_call_operand.vmem [shape: f32[16,1], index: 3, kind: input, shape index: {}]
  %s4 = inlined_call_operand.vmem [shape: bf16[9,16], index: 4, kind: input, shape index: {}]
  %s5 = inlined_call_operand.<no memory space> [shape: f32[1,1], index: 5, kind: input, shape index: {}]
  %s6 = inlined_call_operand.vmem [shape: f32[2,8,8,8], index: 6, kind: input, shape index: {}]
  %s7 = inlined_call_operand.vmem [shape: f32[4,8], index: 7, kind: input, shape index: {}]
  %s8 = inlined_call_operand.vmem [shape: f32[8,4], index: 8, kind: input, shape index: {}]
  %s9 = inlined_call_operand.vmem [shape: f32[2,1,64], index: 9, kind: output, shape index: {0}]
  %s10 = inlined_call_operand.vmem [shape: f32[2,8,4,4], index: 10, kind: output, shape index: {1}]
  %11 = xla_tuple %s9, %s10
  %s12 = sld [smem:[#allocation0]]
  $region77: #{multi_scale_discriminator.4} parent=0
    _
  %s14 = ssub.s32 1, %s12
  %s15 = scalar_select 0, %s14, %s12
  %v16 = vstv %s5
  %17 = vst [vmem:[#allocation3] sm:$0x1] %v16
  loop: start=0, step=1, limit=4
  $region2: #{multi_scale_discriminator.4} parent=0 // loop_pre_header
    _
  $region3: #{multi_scale_discriminator.4} parent=0 // loop_header
    %s19 = sphi 0, %s23
    %p20 = scmp.ge.s32.totalorder %s19, 4
    %s29 = sphi 0, %s31
    %s32 = sphi 0, %s29
    %s33 = sphi 0, %s32
    %s49 = sphi 0, %s33
    %s53 = sphi 0, %s53
    %s55 = sphi 0, %s53
    %s56 = sphi 0, %s55
    %s70 = sphi 0, %s56
    %s74 = sphi 0, %s74
    %s76 = sphi 0, %s74
    %s77 = sphi 0, %s76
    %s91 = sphi 0, %s77
    %s95 = sphi 0, %s95
    %s97 = sphi 0, %s95
    %s98 = sphi 0, %s97
    %s112 = sphi 0, %s98
    %s116 = sphi 0, %s116
    %s118 = sphi 0, %s116
    %s119 = sphi 0, %s118
    %s133 = sphi 0, %s119
    %s137 = sphi 0, %s137
    %s139 = sphi 0, %s137
    %s140 = sphi 0, %s139
    %s154 = sphi 0, %s140
    %s160 = sphi 0, %s162
    %s163 = sphi 0, %s160
    %s164 = sphi 0, %s163
    %s180 = sphi 0, %s164
    %s184 = sphi 0, %s184
    %s186 = sphi 0, %s184
    %s187 = sphi 0, %s186
    %s201 = sphi 0, %s187
    %s205 = sphi 0, %s205
    %s207 = sphi 0, %s205
    %s208 = sphi 0, %s207
    %s222 = sphi 0, %s208
    %s228 = sphi 0, %s230
    %s231 = sphi 0, %s228
    %s232 = sphi 0, %s231
    %s248 = sphi 0, %s232
    %s254 = sphi 0, %s256
    %s257 = sphi 0, %s254
    %s258 = sphi 0, %s257
    %s274 = sphi 0, %s258
  $region4: #{multi_scale_discriminator.4} parent=0 // loop_header_branch
    %22 = sbr.rel (%p20) target = $region8
  $region5: #{multi_scale_discriminator.4} parent=0 // loop_body
    %s24 = ssub.s32 %s19, 1
    %s25 = ssub.s32 %s19, 2
    %s26 = sadd.s32 %s19, 1
    %s27 = ssub.s32 %s19, %s26
    %p28 = scmp.eq.s32.totalorder %s27, 0
    %s30 = sadd.s32 %s29, 1
    %s31 = scalar_select %p28, %s29, %s30
    %p34 = pneg %p28
    %p35 = scmp.eq.s32.totalorder %s19, 1
    %p36 = por %p34, %p35
    %p37 = scmp.ne.s32.totalorder %s29, %s32
    %p38 = scmp.eq.s32.totalorder %s19, 0
    %p39 = por %p37, %p38
    %p40 = scmp.ne.s32.totalorder %s29, %s32
    %p41 = scmp.eq.s32.totalorder %s24, 1
    %p42 = por %p40, %p41
    %p43 = scmp.ne.s32.totalorder %s32, %s33
    %p44 = scmp.eq.s32.totalorder %s24, 0
    %p45 = por %p43, %p44
    %p46 = scmp.ne.s32.totalorder %s32, %s33
    %p47 = scmp.eq.s32.totalorder %s25, 1
    %p48 = por %p46, %p47
    %p50 = scmp.ne.s32.totalorder %s33, %s49
    %p51 = scmp.eq.s32.totalorder %s25, 0
    %p52 = por %p50, %p51
    %s54 = sadd.s32 %s53, 1
    %p57 = scmp.eq.s32.totalorder %s19, 1
    %p58 = scmp.ne.s32.totalorder %s53, %s55
    %p59 = scmp.eq.s32.totalorder %s19, 0
    %p60 = por %p58, %p59
    %p61 = scmp.ne.s32.totalorder %s53, %s55
    %p62 = scmp.eq.s32.totalorder %s24, 1
    %p63 = por %p61, %p62
    %p64 = scmp.ne.s32.totalorder %s55, %s56
    %p65 = scmp.eq.s32.totalorder %s24, 0
    %p66 = por %p64, %p65
    %p67 = scmp.ne.s32.totalorder %s55, %s56
    %p68 = scmp.eq.s32.totalorder %s25, 1
    %p69 = por %p67, %p68
    %p71 = scmp.ne.s32.totalorder %s56, %s70
    %p72 = scmp.eq.s32.totalorder %s25, 0
    %p73 = por %p71, %p72
    %s75 = sadd.s32 %s74, 1
    %p78 = scmp.eq.s32.totalorder %s19, 1
    %p79 = scmp.ne.s32.totalorder %s74, %s76
    %p80 = scmp.eq.s32.totalorder %s19, 0
    %p81 = por %p79, %p80
    %p82 = scmp.ne.s32.totalorder %s74, %s76
    %p83 = scmp.eq.s32.totalorder %s24, 1
    %p84 = por %p82, %p83
    %p85 = scmp.ne.s32.totalorder %s76, %s77
    %p86 = scmp.eq.s32.totalorder %s24, 0
    %p87 = por %p85, %p86
    %p88 = scmp.ne.s32.totalorder %s76, %s77
    %p89 = scmp.eq.s32.totalorder %s25, 1
    %p90 = por %p88, %p89
    %p92 = scmp.ne.s32.totalorder %s77, %s91
    %p93 = scmp.eq.s32.totalorder %s25, 0
    %p94 = por %p92, %p93
    %s96 = sadd.s32 %s95, 1
    %p99 = scmp.eq.s32.totalorder %s19, 1
    %p100 = scmp.ne.s32.totalorder %s95, %s97
    %p101 = scmp.eq.s32.totalorder %s19, 0
    %p102 = por %p100, %p101
    %p103 = scmp.ne.s32.totalorder %s95, %s97
    %p104 = scmp.eq.s32.totalorder %s24, 1
    %p105 = por %p103, %p104
    %p106 = scmp.ne.s32.totalorder %s97, %s98
    %p107 = scmp.eq.s32.totalorder %s24, 0
    %p108 = por %p106, %p107
    %p109 = scmp.ne.s32.totalorder %s97, %s98
    %p110 = scmp.eq.s32.totalorder %s25, 1
    %p111 = por %p109, %p110
    %p113 = scmp.ne.s32.totalorder %s98, %s112
    %p114 = scmp.eq.s32.totalorder %s25, 0
    %p115 = por %p113, %p114
    %s117 = sadd.s32 %s116, 1
    %p120 = scmp.eq.s32.totalorder %s19, 1
    %p121 = scmp.ne.s32.totalorder %s116, %s118
    %p122 = scmp.eq.s32.totalorder %s19, 0
    %p123 = por %p121, %p122
    %p124 = scmp.ne.s32.totalorder %s116, %s118
    %p125 = scmp.eq.s32.totalorder %s24, 1
    %p126 = por %p124, %p125
    %p127 = scmp.ne.s32.totalorder %s118, %s119
    %p128 = scmp.eq.s32.totalorder %s24, 0
    %p129 = por %p127, %p128
    %p130 = scmp.ne.s32.totalorder %s118, %s119
    %p131 = scmp.eq.s32.totalorder %s25, 1
    %p132 = por %p130, %p131
    %p134 = scmp.ne.s32.totalorder %s119, %s133
    %p135 = scmp.eq.s32.totalorder %s25, 0
    %p136 = por %p134, %p135
    %s138 = sadd.s32 %s137, 1
    %p141 = scmp.eq.s32.totalorder %s19, 1
    %p142 = scmp.ne.s32.totalorder %s137, %s139
    %p143 = scmp.eq.s32.totalorder %s19, 0
    %p144 = por %p142, %p143
    %p145 = scmp.ne.s32.totalorder %s137, %s139
    %p146 = scmp.eq.s32.totalorder %s24, 1
    %p147 = por %p145, %p146
    %p148 = scmp.ne.s32.totalorder %s139, %s140
    %p149 = scmp.eq.s32.totalorder %s24, 0
    %p150 = por %p148, %p149
    %p151 = scmp.ne.s32.totalorder %s139, %s140
    %p152 = scmp.eq.s32.totalorder %s25, 1
    %p153 = por %p151, %p152
    %p155 = scmp.ne.s32.totalorder %s140, %s154
    %p156 = scmp.eq.s32.totalorder %s25, 0
    %p157 = por %p155, %p156
    %s158 = ssub.s32 %s19, %s26
    %p159 = scmp.eq.s32.totalorder %s158, 0
    %s161 = sadd.s32 %s160, 1
    %s162 = scalar_select %p159, %s160, %s161
    %p165 = pneg %p159
    %p166 = scmp.eq.s32.totalorder %s19, 1
    %p167 = por %p165, %p166
    %p168 = scmp.ne.s32.totalorder %s160, %s163
    %p169 = scmp.eq.s32.totalorder %s19, 0
    %p170 = por %p168, %p169
    %p171 = scmp.ne.s32.totalorder %s160, %s163
    %p172 = scmp.eq.s32.totalorder %s24, 1
    %p173 = por %p171, %p172
    %p174 = scmp.ne.s32.totalorder %s163, %s164
    %p175 = scmp.eq.s32.totalorder %s24, 0
    %p176 = por %p174, %p175
    %p177 = scmp.ne.s32.totalorder %s163, %s164
    %p178 = scmp.eq.s32.totalorder %s25, 1
    %p179 = por %p177, %p178
    %p181 = scmp.ne.s32.totalorder %s164, %s180
    %p182 = scmp.eq.s32.totalorder %s25, 0
    %p183 = por %p181, %p182
    %s185 = sadd.s32 %s184, 1
    %p188 = scmp.eq.s32.totalorder %s19, 1
    %p189 = scmp.ne.s32.totalorder %s184, %s186
    %p190 = scmp.eq.s32.totalorder %s19, 0
    %p191 = por %p189, %p190
    %p192 = scmp.ne.s32.totalorder %s184, %s186
    %p193 = scmp.eq.s32.totalorder %s24, 1
    %p194 = por %p192, %p193
    %p195 = scmp.ne.s32.totalorder %s186, %s187
    %p196 = scmp.eq.s32.totalorder %s24, 0
    %p197 = por %p195, %p196
    %p198 = scmp.ne.s32.totalorder %s186, %s187
    %p199 = scmp.eq.s32.totalorder %s25, 1
    %p200 = por %p198, %p199
    %p202 = scmp.ne.s32.totalorder %s187, %s201
    %p203 = scmp.eq.s32.totalorder %s25, 0
    %p204 = por %p202, %p203
    %s206 = sadd.s32 %s205, 1
    %p209 = scmp.eq.s32.totalorder %s19, 1
    %p210 = scmp.ne.s32.totalorder %s205, %s207
    %p211 = scmp.eq.s32.totalorder %s19, 0
    %p212 = por %p210, %p211
    %p213 = scmp.ne.s32.totalorder %s205, %s207
    %p214 = scmp.eq.s32.totalorder %s24, 1
    %p215 = por %p213, %p214
    %p216 = scmp.ne.s32.totalorder %s207, %s208
    %p217 = scmp.eq.s32.totalorder %s24, 0
    %p218 = por %p216, %p217
    %p219 = scmp.ne.s32.totalorder %s207, %s208
    %p220 = scmp.eq.s32.totalorder %s25, 1
    %p221 = por %p219, %p220
    %p223 = scmp.ne.s32.totalorder %s208, %s222
    %p224 = scmp.eq.s32.totalorder %s25, 0
    %p225 = por %p223, %p224
    %s226 = ssub.s32 %s19, %s26
    %p227 = scmp.eq.s32.totalorder %s226, 0
    %s229 = sadd.s32 %s228, 1
    %s230 = scalar_select %p227, %s228, %s229
    %p233 = pneg %p227
    %p234 = scmp.eq.s32.totalorder %s19, 1
    %p235 = por %p233, %p234
    %p236 = scmp.ne.s32.totalorder %s228, %s231
    %p237 = scmp.eq.s32.totalorder %s19, 0
    %p238 = por %p236, %p237
    %p239 = scmp.ne.s32.totalorder %s228, %s231
    %p240 = scmp.eq.s32.totalorder %s24, 1
    %p241 = por %p239, %p240
    %p242 = scmp.ne.s32.totalorder %s231, %s232
    %p243 = scmp.eq.s32.totalorder %s24, 0
    %p244 = por %p242, %p243
    %p245 = scmp.ne.s32.totalorder %s231, %s232
    %p246 = scmp.eq.s32.totalorder %s25, 1
    %p247 = por %p245, %p246
    %p249 = scmp.ne.s32.totalorder %s232, %s248
    %p250 = scmp.eq.s32.totalorder %s25, 0
    %p251 = por %p249, %p250
    %s252 = ssub.s32 %s19, %s26
    %p253 = scmp.eq.s32.totalorder %s252, 0
    %s255 = sadd.s32 %s254, 1
    %s256 = scalar_select %p253, %s254, %s255
    %p259 = pneg %p253
    %p260 = scmp.eq.s32.totalorder %s19, 1
    %p261 = por %p259, %p260
    %p262 = scmp.ne.s32.totalorder %s254, %s257
    %p263 = scmp.eq.s32.totalorder %s19, 0
    %p264 = por %p262, %p263
    %p265 = scmp.ne.s32.totalorder %s254, %s257
    %p266 = scmp.eq.s32.totalorder %s24, 1
    %p267 = por %p265, %p266
    %p268 = scmp.ne.s32.totalorder %s257, %s258
    %p269 = scmp.eq.s32.totalorder %s24, 0
    %p270 = por %p268, %p269
    %p271 = scmp.ne.s32.totalorder %s257, %s258
    %p272 = scmp.eq.s32.totalorder %s25, 1
    %p273 = por %p271, %p272
    %p275 = scmp.ne.s32.totalorder %s258, %s274
    %p276 = scmp.eq.s32.totalorder %s25, 0
    %p277 = por %p275, %p276
    %p278 = scmp.le.s32.totalorder 1, %s19
    %p279 = scmp.lt.s32.totalorder %s19, 3
    %p280 = pnand %p278, %p279
    %p281 = pneg %p280
    // Predicated region
    $region9: #{multi_scale_discriminator.4} parent=5 // pred_check
      _
    $region10: #{multi_scale_discriminator.4} parent=5 // pred_check_branch
      %283 = sbr.rel (%p280) target = $region12
    $region11: #{multi_scale_discriminator.4} parent=5 // pred_region
      %s284 = ssub.s32 %s19, 1
      // Predicated region
      $region13: #{multi_scale_discriminator.4} parent=11 // pred_check
        %p285 = pneg %p66
      $region14: #{multi_scale_discriminator.4} parent=11 // pred_check_branch
        %287 = sbr.rel (%p285) target = $region16
      $region15: #{multi_scale_discriminator.4} parent=11 // pred_region
        _
      $region16: #{multi_scale_discriminator.4} parent=11 // pred_fallthru
        _
      // Predicated region
      $region17: #{multi_scale_discriminator.4} parent=11 // pred_check
        %p288 = pneg %p87
      $region18: #{multi_scale_discriminator.4} parent=11 // pred_check_branch
        %290 = sbr.rel (%p288) target = $region20
      $region19: #{multi_scale_discriminator.4} parent=11 // pred_region
        _
      $region20: #{multi_scale_discriminator.4} parent=11 // pred_fallthru
        _
      // Predicated region
      $region21: #{multi_scale_discriminator.4} parent=11 // pred_check
        %p291 = pneg %p108
      $region22: #{multi_scale_discriminator.4} parent=11 // pred_check_branch
        %293 = sbr.rel (%p291) target = $region24
      $region23: #{multi_scale_discriminator.4} parent=11 // pred_region
        _
      $region24: #{multi_scale_discriminator.4} parent=11 // pred_fallthru
        _
      // Predicated region
      $region25: #{multi_scale_discriminator.4} parent=11 // pred_check
        %p294 = pneg %p129
      $region26: #{multi_scale_discriminator.4} parent=11 // pred_check_branch
        %296 = sbr.rel (%p294) target = $region28
      $region27: #{multi_scale_discriminator.4} parent=11 // pred_region
        _
      $region28: #{multi_scale_discriminator.4} parent=11 // pred_fallthru
        _
      // Predicated region
      $region29: #{multi_scale_discriminator.4} parent=11 // pred_check
        %p297 = pneg %p150
      $region30: #{multi_scale_discriminator.4} parent=11 // pred_check_branch
        %299 = sbr.rel (%p297) target = $region32
      $region31: #{multi_scale_discriminator.4} parent=11 // pred_region
        _
      $region32: #{multi_scale_discriminator.4} parent=11 // pred_fallthru
        _
      // Predicated region
      $region33: #{multi_scale_discriminator.4} parent=11 // pred_check
        %p300 = pneg %p197
      $region34: #{multi_scale_discriminator.4} parent=11 // pred_check_branch
        %302 = sbr.rel (%p300) target = $region36
      $region35: #{multi_scale_discriminator.4} parent=11 // pred_region
        _
      $region36: #{multi_scale_discriminator.4} parent=11 // pred_fallthru
        _
      // Predicated region
      $region37: #{multi_scale_discriminator.4} parent=11 // pred_check
        %p303 = pneg %p218
      $region38: #{multi_scale_discriminator.4} parent=11 // pred_check_branch
        %305 = sbr.rel (%p303) target = $region40
      $region39: #{multi_scale_discriminator.4} parent=11 // pred_region
        _
      $region40: #{multi_scale_discriminator.4} parent=11 // pred_fallthru
        _
    $region12: #{multi_scale_discriminator.4} parent=5 // pred_fallthru
      _
    %p306 = scmp.lt.s32.totalorder %s19, 2
    // Predicated region
    $region41: #{multi_scale_discriminator.4} parent=5 // pred_check
      %p307 = pneg %p306
    $region42: #{multi_scale_discriminator.4} parent=5 // pred_check_branch
      %309 = sbr.rel (%p307) target = $region44
    $region43: #{multi_scale_discriminator.4} parent=5 // pred_region
      // Predicated region
      $region45: #{multi_scale_discriminator.4} parent=43 // pred_check
        %p310 = pneg %p39
      $region46: #{multi_scale_discriminator.4} parent=43 // pred_check_branch
        %312 = sbr.rel (%p310) target = $region48
      $region47: #{multi_scale_discriminator.4} parent=43 // pred_region
        %p313 = scmp.lt.s32.totalorder %s19, 1
        %s314 = scalar_select %p313, %s19, 1
        %s315 = smul.addr %s314, 8
        %s316 = scalar_lea.vmem %s0, %s315
      $region48: #{multi_scale_discriminator.4} parent=43 // pred_fallthru
        _
      // Predicated region
      $region49: #{multi_scale_discriminator.4} parent=43 // pred_check
        %p317 = pneg %p170
      $region50: #{multi_scale_discriminator.4} parent=43 // pred_check_branch
        %319 = sbr.rel (%p317) target = $region52
      $region51: #{multi_scale_discriminator.4} parent=43 // pred_region
        %p320 = scmp.lt.s32.totalorder %s19, 1
        %s321 = scalar_select %p320, %s19, 1
        %s322 = smul.addr %s321, 8
        %s323 = smul.addr %s322, 8
        %s324 = scalar_lea.vmem %s6, %s323
      $region52: #{multi_scale_discriminator.4} parent=43 // pred_fallthru
        _
    $region44: #{multi_scale_discriminator.4} parent=5 // pred_fallthru
      _
    %p325 = scmp.le.s32.totalorder 1, %s19
    %p326 = scmp.lt.s32.totalorder %s19, 3
    %p327 = pnand %p325, %p326
    %p328 = pneg %p327
    // Predicated region
    $region53: #{multi_scale_discriminator.4} parent=5 // pred_check
      _
    $region54: #{multi_scale_discriminator.4} parent=5 // pred_check_branch
      %330 = sbr.rel (%p327) target = $region56
    $region55: #{multi_scale_discriminator.4} parent=5 // pred_region
      %s331 = ssub.s32 %s19, 1
      %p332 = scmp.lt.s32.totalorder %s24, 1
      %s333 = scalar_select %p332, %s24, 1
      %s334 = smul.addr %s333, 8
      %s335 = scalar_lea.vmem %s0, %s334
      %p336 = pneg %p45
      %p337 = pneg %p42
      %p338 = pneg %p66
      %p339 = pneg %p63
      %p340 = pneg %p87
      %p341 = pneg %p84
      %p342 = pneg %p108
      %p343 = pneg %p105
      %p344 = pneg %p129
      %p345 = pneg %p126
      %p346 = pneg %p150
      %p347 = pneg %p147
      %p348 = scmp.lt.s32.totalorder %s24, 1
      %s349 = scalar_select %p348, %s24, 1
      %s350 = smul.addr %s349, 8
      %s351 = smul.addr %s350, 8
      %s352 = scalar_lea.vmem %s6, %s351
      %p353 = pneg %p176
      %p354 = pneg %p173
      %p355 = pneg %p197
      %p356 = pneg %p194
      %p357 = pneg %p218
      %p358 = pneg %p215
      %p359 = pneg %p244
      %p360 = pneg %p241
      %p361 = scmp.lt.s32.totalorder %s24, 1
      %s362 = scalar_select %p361, %s24, 1
      %s363 = scalar_lea.vmem %s9, %s362
      %p364 = pneg %p270
      %p365 = pneg %p267
      %p366 = scmp.lt.s32.totalorder %s24, 1
      %s367 = scalar_select %p366, %s24, 1
      %s368 = smul.addr %s367, 8
      %s369 = smul.addr %s368, 4
      %s370 = scalar_lea.vmem %s10, %s369
      %p371 = scmp.lt.s32.totalorder %s24, 1
      %s372 = scalar_select %p371, %s24, 1
      %s373 = smul.addr %s372, 8
      %s374 = scalar_lea.vmem %s0, %s373
      %p375 = scmp.lt.s32.totalorder %s24, 1
      %s376 = scalar_select %p375, %s24, 1
      %s377 = smul.addr %s376, 8
      %s378 = smul.addr %s377, 8
      %s379 = scalar_lea.vmem %s6, %s378
      %p380 = scmp.lt.s32.totalorder %s24, 1
      %s381 = scalar_select %p380, %s24, 1
      %s382 = scalar_lea.vmem %s9, %s381
      %p383 = scmp.lt.s32.totalorder %s24, 1
      %s384 = scalar_select %p383, %s24, 1
      %s385 = smul.addr %s384, 8
      %s386 = smul.addr %s385, 4
      %s387 = scalar_lea.vmem %s10, %s386
      %v389 = vld [vmem:[%s374] sm:$0xff]
      %vm390 = vcmask 1048064
      %391 = vrot.lane.b32.xlu0 %v389, 64
      %v392 = vpop.permute.xlu0 %391
      %v393 = vsel %vm390, %v392, %v389
      %394 = vrot.lane.b32.xlu0 %v393, 64
      %v395 = vpop.permute.xlu0 %394
      %v396 = vsel %vm390, %v395, %v389
      %v397 = vld [vmem:[%s1] sm:$0x1]
      %v398 = vperm.slane %v397, 0
      %400 = vrot.lane.b32.xlu0 %v396, 73
      %v401 = vpop.permute.xlu0 %400
      %v403 = vmul.f32 %v398, %v401
      %v404 = vpack.c.bf16 %v403, %v403
      %vm405 = vcmask 519168
      %406 = vst.msk [vmem:[#allocation2] sm:$0xf] %vm405, %v404
      %v407 = vld [vmem:[%s1 + $0x1] sm:$0x1]
      %v408 = vperm.slane %v407, 0
      %409 = vrot.lane.b32.xlu0 %v396, 72
      %v410 = vpop.permute.xlu0 %409
      %v412 = vmul.f32 %v408, %v410
      %v413 = vpack.c.bf16 %v412, %v412
      %414 = vst.msk [vmem:[#allocation2 + $0x4] sm:$0xf] %vm405, %v413
      %v415 = vld [vmem:[%s1 + $0x2] sm:$0x1]
      %v416 = vperm.slane %v415, 0
      %417 = vrot.lane.b32.xlu0 %v396, 71
      %v418 = vpop.permute.xlu0 %417
      %v420 = vmul.f32 %v416, %v418
      %v421 = vpack.c.bf16 %v420, %v420
      %422 = vst.msk [vmem:[#allocation2 + $0x8] sm:$0xf] %vm405, %v421
      %v423 = vld [vmem:[%s1 + $0x3] sm:$0x1]
      %v424 = vperm.slane %v423, 0
      %425 = vrot.lane.b32.xlu0 %v396, 65
      %v426 = vpop.permute.xlu0 %425
      %v428 = vmul.f32 %v424, %v426
      %v429 = vpack.c.bf16 %v428, %v428
      %430 = vst.msk [vmem:[#allocation2 + $0xc] sm:$0xf] %vm405, %v429
      %v431 = vld [vmem:[%s1 + $0x4] sm:$0x1]
      %v432 = vperm.slane %v431, 0
      %v433 = vmul.f32 %v432, %v389
      %v434 = vpack.c.bf16 %v433, %v433
      %435 = vst.msk [vmem:[#allocation2 + $0x10] sm:$0xf] %vm405, %v434
      %v436 = vld [vmem:[%s1 + $0x5] sm:$0x1]
      %v437 = vperm.slane %v436, 0
      %438 = vrot.lane.b32.xlu0 %v396, 127
      %v439 = vpop.permute.xlu0 %438
      %v441 = vmul.f32 %v437, %v439
      %v442 = vpack.c.bf16 %v441, %v441
      %443 = vst.msk [vmem:[#allocation2 + $0x14] sm:$0xf] %vm405, %v442
      %v444 = vld [vmem:[%s1 + $0x6] sm:$0x1]
      %v445 = vperm.slane %v444, 0
      %446 = vrot.lane.b32.xlu0 %v396, 121
      %v447 = vpop.permute.xlu0 %446
      %v449 = vmul.f32 %v445, %v447
      %v450 = vpack.c.bf16 %v449, %v449
      %451 = vst.msk [vmem:[#allocation2 + $0x18] sm:$0xf] %vm405, %v450
      %v452 = vld [vmem:[%s1 + $0x7] sm:$0x1]
      %v453 = vperm.slane %v452, 0
      %454 = vrot.lane.b32.xlu0 %v396, 120
      %v455 = vpop.permute.xlu0 %454
      %v457 = vmul.f32 %v453, %v455
      %v458 = vpack.c.bf16 %v457, %v457
      %459 = vst.msk [vmem:[#allocation2 + $0x1c] sm:$0xf] %vm405, %v458
      %v460 = vld [vmem:[%s1 + $0x8] sm:$0x1]
      %v461 = vperm.slane %v460, 0
      %462 = vrot.lane.b32.xlu0 %v396, 119
      %v463 = vpop.permute.xlu0 %462
      %v465 = vmul.f32 %v461, %v463
      %v466 = vpack.c.bf16 %v465, %v465
      %467 = vst.msk [vmem:[#allocation2 + $0x20] sm:$0xf] %vm405, %v466
      %v468 = vld [vmem:[%s2] sm:$0xf]
      %v469 = vld [vmem:[%s2 + $0x4] sm:$0xf]
      %v470 = vld [vmem:[#allocation2] sm:$0xf]
      %v471 = vld [vmem:[#allocation2 + $0x4] sm:$0xf]
      %v472 = vld [vmem:[#allocation2 + $0x8] sm:$0xf]
      %v473 = vld [vmem:[#allocation2 + $0xc] sm:$0xf]
      %v474 = vld [vmem:[#allocation2 + $0x10] sm:$0xf]
      %v475 = vld [vmem:[#allocation2 + $0x14] sm:$0xf]
      %v476 = vld [vmem:[#allocation2 + $0x18] sm:$0xf]
      %v477 = vld [vmem:[#allocation2 + $0x1c] sm:$0xf]
      %v478 = vld [vmem:[#allocation2 + $0x20] sm:$0xf]
      %v479 = vld [vmem:[%s3] sm:$0xff]
      %v480 = vld [vmem:[%s3 + $0x8] sm:$0xff]
      %482 = vset.pattern.permute.xlu0 0
      %483 = vperm.xlu0 %482, %v479
      %v484 = vpop.permute.xlu0 %483
      %487 = vset.pattern.permute.xlu0 0
      %488 = vperm.xlu0 %487, %v480
      %v489 = vpop.permute.xlu0 %488
      %v493 = vunpack.c.l.b16 %v468
      %v494 = vunpack.c.l.b16 %v469
      %v495 = vpack.c.b16 %v494, %v493
      %v505 = vunpack.c.l.b16 %v470
      %v506 = vunpack.c.l.b16 %v471
      %v507 = vunpack.c.l.b16 %v472
      %v508 = vunpack.c.l.b16 %v473
      %v509 = vunpack.c.l.b16 %v474
      %v510 = vunpack.c.l.b16 %v475
      %v511 = vunpack.c.l.b16 %v476
      %v512 = vunpack.c.l.b16 %v477
      %v513 = vunpack.c.l.b16 %v478
      %v514 = vpack.c.b16 %v506, %v505
      %v515 = vpack.c.b16 %v508, %v507
      %v516 = vpack.c.b16 %v510, %v509
      %v517 = vpack.c.b16 %v512, %v511
      %v518 = vpack.c.b16 %v513, %v513
      %vm523 = vcmask 588800
      %v525 = vsel %vm523, %v495, 0
      %vm527 = vcmask 1043456
      %v529 = vsel %vm527, %v518, 0
      %531 = vmatpush.bf16.msra.mxu0 0
      %532 = vmatpush.bf16.msra.mxu0 0
      %533 = vmatpush.bf16.msra.mxu0 0
      %534 = vmatpush.bf16.msra.mxu0 %v529
      %535 = vmatpush.bf16.msra.mxu0 %v517
      %536 = vmatpush.bf16.msra.mxu0 %v516
      %537 = vmatpush.bf16.msra.mxu0 %v515
      %538 = vmatpush.bf16.msra.mxu0 %v514
      %539 = vmatmul.bf16.gmra.mxu0 %v525
      %v540 = vpop.f32.mrf.mxu0
      %v541 = vadd.f32 %v484, %v540
      %v542 = vpop.f32.mrf.mxu0
      %v543 = vadd.f32 %v489, %v542
      %544 = vdwg.mxu0
      %v545 = vmul.f32 %v541, 0.2
      %v546 = vmul.f32 %v543, 0.2
      %v547 = vmax.f32 %v541, %v545
      %v548 = vmax.f32 %v543, %v546
      %v549 = vld [vmem:[%s4] sm:$0xf]
      %v550 = vld [vmem:[%s4 + $0x4] sm:$0x1]
      %v551 = vpack.c.bf16 %v548, %v547
      %v554 = vunpack.c.l.b16 %v549
      %v555 = vunpack.c.l.b16 %v550
      %v556 = vpack.c.b16 %v555, %v554
      %vm557 = vcmask 130048
      %v559 = vsel %vm557, %v556, 0
      %561 = vmatpush.bf16.msra.mxu0 0
      %562 = vmatpush.bf16.msra.mxu0 0
      %563 = vmatpush.bf16.msra.mxu0 0
      %564 = vmatpush.bf16.msra.mxu0 0
      %565 = vmatpush.bf16.msra.mxu0 0
      %566 = vmatpush.bf16.msra.mxu0 0
      %567 = vmatpush.bf16.msra.mxu0 0
      %568 = vmatpush.bf16.msra.mxu0 %v551
      %569 = vmatmul.bf16.gmra.mxu0 %v559
      %v570 = vpop.f32.mrf.mxu0
      %v571 = vadd.f32 0.0, %v570
      %v572 = vpop.f32.mrf.mxu0
      %v573 = vadd.f32 0.0, %v572
      %574 = vdwg.mxu0
      %575 = vrot.lane.b32.xlu0 %v571, 64
      %v576 = vpop.permute.xlu0 %575
      %v577 = vsel %vm390, %v576, %v571
      %578 = vrot.lane.b32.xlu0 %v577, 64
      %v579 = vpop.permute.xlu0 %578
      %v580 = vsel %vm390, %v579, %v571
      %v581 = vld [vmem:[%s1] sm:$0x1]
      %583 = vrot.lane.b32.xlu0 %v580, 73
      %v584 = vpop.permute.xlu0 %583
      %v586 = vmul.f32 %v581, %v584
      %v587 = vadd.f32 %v586, 0.0
      %v589 = vrot.slane %v571, 1
      %591 = vrot.lane.b32.xlu0 %v589, 64
      %v592 = vpop.permute.xlu0 %591
      %v593 = vsel %vm390, %v592, %v589
      %594 = vrot.lane.b32.xlu0 %v593, 64
      %v595 = vpop.permute.xlu0 %594
      %v596 = vsel %vm390, %v595, %v589
      %v597 = vld [vmem:[%s1 + $0x1] sm:$0x1]
      %599 = vrot.lane.b32.xlu0 %v596, 72
      %v600 = vpop.permute.xlu0 %599
      %v602 = vmul.f32 %v597, %v600
      %v603 = vadd.f32 %v587, %v602
      %v604 = vrot.slane %v571, 2
      %606 = vrot.lane.b32.xlu0 %v604, 64
      %v607 = vpop.permute.xlu0 %606
      %v608 = vsel %vm390, %v607, %v604
      %609 = vrot.lane.b32.xlu0 %v608, 64
      %v610 = vpop.permute.xlu0 %609
      %v611 = vsel %vm390, %v610, %v604
      %v612 = vld [vmem:[%s1 + $0x2] sm:$0x1]
      %614 = vrot.lane.b32.xlu0 %v611, 71
      %v615 = vpop.permute.xlu0 %614
      %v617 = vmul.f32 %v612, %v615
      %v618 = vadd.f32 %v603, %v617
      %v619 = vrot.slane %v571, 3
      %621 = vrot.lane.b32.xlu0 %v619, 64
      %v622 = vpop.permute.xlu0 %621
      %v623 = vsel %vm390, %v622, %v619
      %624 = vrot.lane.b32.xlu0 %v623, 64
      %v625 = vpop.permute.xlu0 %624
      %v626 = vsel %vm390, %v625, %v619
      %v627 = vld [vmem:[%s1 + $0x3] sm:$0x1]
      %629 = vrot.lane.b32.xlu0 %v626, 65
      %v630 = vpop.permute.xlu0 %629
      %v632 = vmul.f32 %v627, %v630
      %v633 = vadd.f32 %v618, %v632
      %v634 = vld [vmem:[%s1 + $0x4] sm:$0x1]
      %v635 = vrot.slane %v571, 4
      %v637 = vmul.f32 %v634, %v635
      %v638 = vadd.f32 %v633, %v637
      %v639 = vrot.slane %v571, 5
      %641 = vrot.lane.b32.xlu0 %v639, 64
      %v642 = vpop.permute.xlu0 %641
      %v643 = vsel %vm390, %v642, %v639
      %644 = vrot.lane.b32.xlu0 %v643, 64
      %v645 = vpop.permute.xlu0 %644
      %v646 = vsel %vm390, %v645, %v639
      %v647 = vld [vmem:[%s1 + $0x5] sm:$0x1]
      %649 = vrot.lane.b32.xlu0 %v646, 127
      %v650 = vpop.permute.xlu0 %649
      %v652 = vmul.f32 %v647, %v650
      %v653 = vadd.f32 %v638, %v652
      %v654 = vrot.slane %v571, 6
      %656 = vrot.lane.b32.xlu0 %v654, 64
      %v657 = vpop.permute.xlu0 %656
      %v658 = vsel %vm390, %v657, %v654
      %659 = vrot.lane.b32.xlu0 %v658, 64
      %v660 = vpop.permute.xlu0 %659
      %v661 = vsel %vm390, %v660, %v654
      %v662 = vld [vmem:[%s1 + $0x6] sm:$0x1]
      %664 = vrot.lane.b32.xlu0 %v661, 121
      %v665 = vpop.permute.xlu0 %664
      %v667 = vmul.f32 %v662, %v665
      %v668 = vadd.f32 %v653, %v667
      %v669 = vrot.slane %v571, 7
      %671 = vrot.lane.b32.xlu0 %v669, 64
      %v672 = vpop.permute.xlu0 %671
      %v673 = vsel %vm390, %v672, %v669
      %674 = vrot.lane.b32.xlu0 %v673, 64
      %v675 = vpop.permute.xlu0 %674
      %v676 = vsel %vm390, %v675, %v669
      %v677 = vld [vmem:[%s1 + $0x7] sm:$0x1]
      %679 = vrot.lane.b32.xlu0 %v676, 120
      %v680 = vpop.permute.xlu0 %679
      %v682 = vmul.f32 %v677, %v680
      %v683 = vadd.f32 %v668, %v682
      %684 = vrot.lane.b32.xlu0 %v573, 64
      %v685 = vpop.permute.xlu0 %684
      %v686 = vsel %vm390, %v685, %v573
      %687 = vrot.lane.b32.xlu0 %v686, 64
      %v688 = vpop.permute.xlu0 %687
      %v689 = vsel %vm390, %v688, %v573
      %v690 = vld [vmem:[%s1 + $0x8] sm:$0x1]
      %692 = vrot.lane.b32.xlu0 %v689, 119
      %v693 = vpop.permute.xlu0 %692
      %v695 = vmul.f32 %v690, %v693
      %v696 = vadd.f32 %v683, %v695
      %v697 = vld [vmem:[#allocation3] sm:$0x1]
      %699 = vset.pattern.permute.xlu0 0
      %700 = vperm.xlu0 %699, %v697
      %v701 = vpop.permute.xlu0 %700
      %v703 = vperm.slane %v701, 0
      %v704 = vadd.f32 %v696, %v703
      %vm705 = vcmask 516096
      %706 = vst.msk [vmem:[%s382] sm:$0x1] %vm705, %v704
      %v707 = vld [vmem:[%s379] sm:$0xff]
      %v708 = vld [vmem:[%s379 + $0x8] sm:$0xff]
      %v709 = vld [vmem:[%s379 + $0x10] sm:$0xff]
      %v710 = vld [vmem:[%s379 + $0x18] sm:$0xff]
      %v711 = vld [vmem:[%s379 + $0x20] sm:$0xff]
      %v712 = vld [vmem:[%s379 + $0x28] sm:$0xff]
      %v713 = vld [vmem:[%s379 + $0x30] sm:$0xff]
      %v714 = vld [vmem:[%s379 + $0x38] sm:$0xff]
      %v715 = vld [vmem:[%s7] sm:$0xf]
      %vm716 = vcmask 64512
      %v718 = vsel %vm716, %v715, 0
      %720 = vmatpush.msra.mxu0 0.0
      %721 = vmatpush.msra.mxu0 0.0
      %722 = vmatpush.msra.mxu0 0.0
      %723 = vmatpush.msra.mxu0 0.0
      %724 = vmatpush.msra.mxu0 0.0
      %725 = vmatpush.msra.mxu0 0.0
      %726 = vmatpush.msra.mxu0 0.0
      %727 = vmatpush.msra.mxu0 0.0
      %728 = vmatpush.msra.mxu0 0.0
      %729 = vmatpush.msra.mxu0 0.0
      %730 = vmatpush.msra.mxu0 0.0
      %731 = vmatpush.msra.mxu0 0.0
      %732 = vmatpush.msra.mxu0 0.0
      %733 = vmatpush.msra.mxu0 0.0
      %734 = vmatpush.msra.mxu0 0.0
      %735 = vmatpush.msra.mxu0 %v707
      %736 = vmatmul.f32.gmra.mxu0 %v718
      %v737 = vpop.f32.mrf.mxu0
      %v738 = vadd.f32 0.0, %v737
      %739 = vdwg.mxu0
      %740 = vmatpush.msra.mxu0 0.0
      %741 = vmatpush.msra.mxu0 0.0
      %742 = vmatpush.msra.mxu0 0.0
      %743 = vmatpush.msra.mxu0 0.0
      %744 = vmatpush.msra.mxu0 0.0
      %745 = vmatpush.msra.mxu0 0.0
      %746 = vmatpush.msra.mxu0 0.0
      %747 = vmatpush.msra.mxu0 0.0
      %748 = vmatpush.msra.mxu0 0.0
      %749 = vmatpush.msra.mxu0 0.0
      %750 = vmatpush.msra.mxu0 0.0
      %751 = vmatpush.msra.mxu0 0.0
      %752 = vmatpush.msra.mxu0 0.0
      %753 = vmatpush.msra.mxu0 0.0
      %754 = vmatpush.msra.mxu0 0.0
      %755 = vmatpush.msra.mxu0 %v708
      %756 = vmatmul.f32.gmra.mxu0 %v718
      %v757 = vpop.f32.mrf.mxu0
      %v758 = vadd.f32 0.0, %v757
      %759 = vdwg.mxu0
      %760 = vmatpush.msra.mxu0 0.0
      %761 = vmatpush.msra.mxu0 0.0
      %762 = vmatpush.msra.mxu0 0.0
      %763 = vmatpush.msra.mxu0 0.0
      %764 = vmatpush.msra.mxu0 0.0
      %765 = vmatpush.msra.mxu0 0.0
      %766 = vmatpush.msra.mxu0 0.0
      %767 = vmatpush.msra.mxu0 0.0
      %768 = vmatpush.msra.mxu0 0.0
      %769 = vmatpush.msra.mxu0 0.0
      %770 = vmatpush.msra.mxu0 0.0
      %771 = vmatpush.msra.mxu0 0.0
      %772 = vmatpush.msra.mxu0 0.0
      %773 = vmatpush.msra.mxu0 0.0
      %774 = vmatpush.msra.mxu0 0.0
      %775 = vmatpush.msra.mxu0 %v709
      %776 = vmatmul.f32.gmra.mxu0 %v718
      %v777 = vpop.f32.mrf.mxu0
      %v778 = vadd.f32 0.0, %v777
      %779 = vdwg.mxu0
      %780 = vmatpush.msra.mxu0 0.0
      %781 = vmatpush.msra.mxu0 0.0
      %782 = vmatpush.msra.mxu0 0.0
      %783 = vmatpush.msra.mxu0 0.0
      %784 = vmatpush.msra.mxu0 0.0
      %785 = vmatpush.msra.mxu0 0.0
      %786 = vmatpush.msra.mxu0 0.0
      %787 = vmatpush.msra.mxu0 0.0
      %788 = vmatpush.msra.mxu0 0.0
      %789 = vmatpush.msra.mxu0 0.0
      %790 = vmatpush.msra.mxu0 0.0
      %791 = vmatpush.msra.mxu0 0.0
      %792 = vmatpush.msra.mxu0 0.0
      %793 = vmatpush.msra.mxu0 0.0
      %794 = vmatpush.msra.mxu0 0.0
      %795 = vmatpush.msra.mxu0 %v710
      %796 = vmatmul.f32.gmra.mxu0 %v718
      %v797 = vpop.f32.mrf.mxu0
      %v798 = vadd.f32 0.0, %v797
      %799 = vdwg.mxu0
      %800 = vmatpush.msra.mxu0 0.0
      %801 = vmatpush.msra.mxu0 0.0
      %802 = vmatpush.msra.mxu0 0.0
      %803 = vmatpush.msra.mxu0 0.0
      %804 = vmatpush.msra.mxu0 0.0
      %805 = vmatpush.msra.mxu0 0.0
      %806 = vmatpush.msra.mxu0 0.0
      %807 = vmatpush.msra.mxu0 0.0
      %808 = vmatpush.msra.mxu0 0.0
      %809 = vmatpush.msra.mxu0 0.0
      %810 = vmatpush.msra.mxu0 0.0
      %811 = vmatpush.msra.mxu0 0.0
      %812 = vmatpush.msra.mxu0 0.0
      %813 = vmatpush.msra.mxu0 0.0
      %814 = vmatpush.msra.mxu0 0.0
      %815 = vmatpush.msra.mxu0 %v711
      %816 = vmatmul.f32.gmra.mxu0 %v718
      %v817 = vpop.f32.mrf.mxu0
      %v818 = vadd.f32 0.0, %v817
      %819 = vdwg.mxu0
      %820 = vmatpush.msra.mxu0 0.0
      %821 = vmatpush.msra.mxu0 0.0
      %822 = vmatpush.msra.mxu0 0.0
      %823 = vmatpush.msra.mxu0 0.0
      %824 = vmatpush.msra.mxu0 0.0
      %825 = vmatpush.msra.mxu0 0.0
      %826 = vmatpush.msra.mxu0 0.0
      %827 = vmatpush.msra.mxu0 0.0
      %828 = vmatpush.msra.mxu0 0.0
      %829 = vmatpush.msra.mxu0 0.0
      %830 = vmatpush.msra.mxu0 0.0
      %831 = vmatpush.msra.mxu0 0.0
      %832 = vmatpush.msra.mxu0 0.0
      %833 = vmatpush.msra.mxu0 0.0
      %834 = vmatpush.msra.mxu0 0.0
      %835 = vmatpush.msra.mxu0 %v712
      %836 = vmatmul.f32.gmra.mxu0 %v718
      %v837 = vpop.f32.mrf.mxu0
      %v838 = vadd.f32 0.0, %v837
      %839 = vdwg.mxu0
      %840 = vmatpush.msra.mxu0 0.0
      %841 = vmatpush.msra.mxu0 0.0
      %842 = vmatpush.msra.mxu0 0.0
      %843 = vmatpush.msra.mxu0 0.0
      %844 = vmatpush.msra.mxu0 0.0
      %845 = vmatpush.msra.mxu0 0.0
      %846 = vmatpush.msra.mxu0 0.0
      %847 = vmatpush.msra.mxu0 0.0
      %848 = vmatpush.msra.mxu0 0.0
      %849 = vmatpush.msra.mxu0 0.0
      %850 = vmatpush.msra.mxu0 0.0
      %851 = vmatpush.msra.mxu0 0.0
      %852 = vmatpush.msra.mxu0 0.0
      %853 = vmatpush.msra.mxu0 0.0
      %854 = vmatpush.msra.mxu0 0.0
      %855 = vmatpush.msra.mxu0 %v713
      %856 = vmatmul.f32.gmra.mxu0 %v718
      %v857 = vpop.f32.mrf.mxu0
      %v858 = vadd.f32 0.0, %v857
      %859 = vdwg.mxu0
      %860 = vmatpush.msra.mxu0 0.0
      %861 = vmatpush.msra.mxu0 0.0
      %862 = vmatpush.msra.mxu0 0.0
      %863 = vmatpush.msra.mxu0 0.0
      %864 = vmatpush.msra.mxu0 0.0
      %865 = vmatpush.msra.mxu0 0.0
      %866 = vmatpush.msra.mxu0 0.0
      %867 = vmatpush.msra.mxu0 0.0
      %868 = vmatpush.msra.mxu0 0.0
      %869 = vmatpush.msra.mxu0 0.0
      %870 = vmatpush.msra.mxu0 0.0
      %871 = vmatpush.msra.mxu0 0.0
      %872 = vmatpush.msra.mxu0 0.0
      %873 = vmatpush.msra.mxu0 0.0
      %874 = vmatpush.msra.mxu0 0.0
      %875 = vmatpush.msra.mxu0 %v714
      %876 = vmatmul.f32.gmra.mxu0 %v718
      %v877 = vpop.f32.mrf.mxu0
      %v878 = vadd.f32 0.0, %v877
      %879 = vdwg.mxu0
      %v880 = vld [vmem:[%s8] sm:$0xff]
      %889 = vst [vmem:[#allocation1] ss:$2 sm:$0xff] %v738
      %s890 = scalar_lea.vmem [#allocation1], 1
      %891 = vst [vmem:[%s890] ss:$2 sm:$0xff] %v758
      %s892 = scalar_lea.vmem [#allocation1], 16
      %893 = vst [vmem:[%s892] ss:$2 sm:$0xff] %v778
      %s894 = scalar_lea.vmem [#allocation1], 17
      %895 = vst [vmem:[%s894] ss:$2 sm:$0xff] %v798
      %s896 = scalar_lea.vmem [#allocation1], 32
      %897 = vst [vmem:[%s896] ss:$2 sm:$0xff] %v818
      %s898 = scalar_lea.vmem [#allocation1], 33
      %899 = vst [vmem:[%s898] ss:$2 sm:$0xff] %v838
      %s900 = scalar_lea.vmem [#allocation1], 48
      %901 = vst [vmem:[%s900] ss:$2 sm:$0xff] %v858
      %s902 = scalar_lea.vmem [#allocation1], 49
      %903 = vst [vmem:[%s902] ss:$2 sm:$0xff] %v878
      %v904 = vld.sshfl [vmem:[#allocation1] sm:$0xff pattern:$0x75316420]
      %v905 = vld.sshfl [vmem:[#allocation1 + $0x10] sm:$0xff pattern:$0x75316420]
      %v906 = vld.sshfl [vmem:[#allocation1 + $0x20] sm:$0xff pattern:$0x75316420]
      %v907 = vld.sshfl [vmem:[#allocation1 + $0x30] sm:$0xff pattern:$0x75316420]
      %v908 = vsel %vm716, %v904, 0
      %v910 = vsel %vm716, %v905, 0
      %v912 = vsel %vm716, %v906, 0
      %v914 = vsel %vm716, %v907, 0
      %916 = vmatpush.msra.mxu0 0.0
      %917 = vmatpush.msra.mxu0 0.0
      %918 = vmatpush.msra.mxu0 0.0
      %919 = vmatpush.msra.mxu0 0.0
      %920 = vmatpush.msra.mxu0 0.0
      %921 = vmatpush.msra.mxu0 0.0
      %922 = vmatpush.msra.mxu0 0.0
      %923 = vmatpush.msra.mxu0 0.0
      %924 = vmatpush.msra.mxu0 0.0
      %925 = vmatpush.msra.mxu0 0.0
      %926 = vmatpush.msra.mxu0 0.0
      %927 = vmatpush.msra.mxu0 0.0
      %928 = vmatpush.msra.mxu0 0.0
      %929 = vmatpush.msra.mxu0 0.0
      %930 = vmatpush.msra.mxu0 0.0
      %931 = vmatpush.msra.mxu0 %v880
      %932 = vmatmul.f32.gmra.mxu0 %v908
      %v933 = vpop.f32.mrf.mxu0
      %v934 = vadd.f32 0.0, %v933
      %935 = vmatmul.f32.gmra.mxu0 %v910
      %v936 = vpop.f32.mrf.mxu0
      %v937 = vadd.f32 0.0, %v936
      %938 = vmatmul.f32.gmra.mxu0 %v912
      %v939 = vpop.f32.mrf.mxu0
      %v940 = vadd.f32 0.0, %v939
      %941 = vmatmul.f32.gmra.mxu0 %v914
      %v942 = vpop.f32.mrf.mxu0
      %v943 = vadd.f32 0.0, %v942
      %944 = vdwg.mxu0
      %v949 = vrot.slane %v934, 4
      %v950 = vrot.slane %v937, 4
      %v951 = vrot.slane %v940, 4
      %v952 = vrot.slane %v943, 4
      %vm957 = vcmask 27648
      %958 = vst.msk [vmem:[%s387] sm:$0xf] %vm957, %v934
      %959 = vst.msk [vmem:[%s387 + $0x4] sm:$0xf] %vm957, %v949
      %960 = vst.msk [vmem:[%s387 + $0x8] sm:$0xf] %vm957, %v937
      %961 = vst.msk [vmem:[%s387 + $0xc] sm:$0xf] %vm957, %v950
      %962 = vst.msk [vmem:[%s387 + $0x10] sm:$0xf] %vm957, %v940
      %963 = vst.msk [vmem:[%s387 + $0x14] sm:$0xf] %vm957, %v951
      %964 = vst.msk [vmem:[%s387 + $0x18] sm:$0xf] %vm957, %v943
      %965 = vst.msk [vmem:[%s387 + $0x1c] sm:$0xf] %vm957, %v952
      %p966 = scmp.lt.s32.totalorder %s24, 1
      %s967 = scalar_select %p966, %s24, 1
      %s968 = scalar_lea.vmem %s9, %s967
      %p969 = scmp.lt.s32.totalorder %s24, 1
      %s970 = scalar_select %p969, %s24, 1
      %s971 = smul.addr %s970, 8
      %s972 = smul.addr %s971, 4
      %s973 = scalar_lea.vmem %s10, %s972
      // Predicated region
      $region57: #{multi_scale_discriminator.4} parent=55 // pred_check
        %p974 = pneg %p241
      $region58: #{multi_scale_discriminator.4} parent=55 // pred_check_branch
        %976 = sbr.rel (%p974) target = $region60
      $region59: #{multi_scale_discriminator.4} parent=55 // pred_region
        _
      $region60: #{multi_scale_discriminator.4} parent=55 // pred_fallthru
        _
      // Predicated region
      $region61: #{multi_scale_discriminator.4} parent=55 // pred_check
        %p977 = pneg %p267
      $region62: #{multi_scale_discriminator.4} parent=55 // pred_check_branch
        %979 = sbr.rel (%p977) target = $region64
      $region63: #{multi_scale_discriminator.4} parent=55 // pred_region
        _
      $region64: #{multi_scale_discriminator.4} parent=55 // pred_fallthru
        _
    $region56: #{multi_scale_discriminator.4} parent=5 // pred_fallthru
      _
    %p980 = scmp.le.s32.totalorder 2, %s19
    // Predicated region
    $region65: #{multi_scale_discriminator.4} parent=5 // pred_check
      %p981 = pneg %p980
    $region66: #{multi_scale_discriminator.4} parent=5 // pred_check_branch
      %983 = sbr.rel (%p981) target = $region68
    $region67: #{multi_scale_discriminator.4} parent=5 // pred_region
      %s984 = ssub.s32 %s19, 2
      // Predicated region
      $region69: #{multi_scale_discriminator.4} parent=67 // pred_check
        %p985 = pneg %p247
      $region70: #{multi_scale_discriminator.4} parent=67 // pred_check_branch
        %987 = sbr.rel (%p985) target = $region72
      $region71: #{multi_scale_discriminator.4} parent=67 // pred_region
        %p988 = scmp.lt.s32.totalorder %s25, 1
        %s989 = scalar_select %p988, %s25, 1
        %s990 = scalar_lea.vmem %s9, %s989
      $region72: #{multi_scale_discriminator.4} parent=67 // pred_fallthru
        _
      // Predicated region
      $region73: #{multi_scale_discriminator.4} parent=67 // pred_check
        %p991 = pneg %p273
      $region74: #{multi_scale_discriminator.4} parent=67 // pred_check_branch
        %993 = sbr.rel (%p991) target = $region76
      $region75: #{multi_scale_discriminator.4} parent=67 // pred_region
        %p994 = scmp.lt.s32.totalorder %s25, 1
        %s995 = scalar_select %p994, %s25, 1
        %s996 = smul.addr %s995, 8
        %s997 = smul.addr %s996, 4
        %s998 = scalar_lea.vmem %s10, %s997
      $region76: #{multi_scale_discriminator.4} parent=67 // pred_fallthru
        _
    $region68: #{multi_scale_discriminator.4} parent=5 // pred_fallthru
      _
  $region6: #{multi_scale_discriminator.4} parent=0 // loop_footer
    %s23 = sadd.s32 1, %s19
  $region7: #{multi_scale_discriminator.4} parent=0 // loop_footer_branch
    %18 = sbr.rel target = $region3
  $region8: #{multi_scale_discriminator.4} parent=0 // loop_exit
    _

// kernel: multi_scale_discriminator.3
$region0: #{multi_scale_discriminator.3}
  #allocation0 [shape = 'u32[]', space=smem, size = 0x4, offset = 0x4, fixed_abs, tag = 'smem constant byte address 0x4 - core index']
  #allocation1 [shape = 'u32[72,128]{1,0:T(1,128)}', space=vmem, size = 0x9000, scoped, tag = 'internal scratch']
  #allocation2 [shape = 'bf16[72,256]{1,0:T(8,128)(2,1)}', space=vmem, size = 0x9000, scoped, tag = 'scratch operand']
  #allocation3 [shape = 'f32[1,1]{1,0:T(1,128)S(1)}', space=vmem, size = 0x200, scoped, tag = 'scoped memory for multi_scale_discriminator.3']
  %s0 = inlined_call_operand.vmem [shape: f32[2,8,256], index: 0, kind: input, shape index: {}]
  %s1 = inlined_call_operand.vmem [shape: f32[9,256], index: 1, kind: input, shape index: {}]
  %s2 = inlined_call_operand.vmem [shape: bf16[16,72], index: 2, kind: input, shape index: {}]
  %s3 = inlined_call_operand.vmem [shape: f32[16,1], index: 3, kind: input, shape index: {}]
  %s4 = inlined_call_operand.vmem [shape: bf16[9,16], index: 4, kind: input, shape index: {}]
  %s5 = inlined_call_operand.<no memory space> [shape: f32[1,1], index: 5, kind: input, shape index: {}]
  %s6 = inlined_call_operand.vmem [shape: f32[2,8,16,16], index: 6, kind: input, shape index: {}]
  %s7 = inlined_call_operand.vmem [shape: f32[8,16], index: 7, kind: input, shape index: {}]
  %s8 = inlined_call_operand.vmem [shape: f32[16,8], index: 8, kind: input, shape index: {}]
  %s9 = inlined_call_operand.vmem [shape: f32[2,1,256], index: 9, kind: output, shape index: {0}]
  %s10 = inlined_call_operand.vmem [shape: f32[2,8,8,8], index: 10, kind: output, shape index: {1}]
  %11 = xla_tuple %s9, %s10
  %s12 = sld [smem:[#allocation0]]
  $region77: #{multi_scale_discriminator.3} parent=0
    _
  %s14 = ssub.s32 1, %s12
  %s15 = scalar_select 0, %s14, %s12
  %v16 = vstv %s5
  %17 = vst [vmem:[#allocation3] sm:$0x1] %v16
  loop: start=0, step=1, limit=4
  $region2: #{multi_scale_discriminator.3} parent=0 // loop_pre_header
    _
  $region3: #{multi_scale_discriminator.3} parent=0 // loop_header
    %s19 = sphi 0, %s23
    %p20 = scmp.ge.s32.totalorder %s19, 4
    %s29 = sphi 0, %s31
    %s32 = sphi 0, %s29
    %s33 = sphi 0, %s32
    %s49 = sphi 0, %s33
    %s53 = sphi 0, %s53
    %s55 = sphi 0, %s53
    %s56 = sphi 0, %s55
    %s70 = sphi 0, %s56
    %s74 = sphi 0, %s74
    %s76 = sphi 0, %s74
    %s77 = sphi 0, %s76
    %s91 = sphi 0, %s77
    %s95 = sphi 0, %s95
    %s97 = sphi 0, %s95
    %s98 = sphi 0, %s97
    %s112 = sphi 0, %s98
    %s116 = sphi 0, %s116
    %s118 = sphi 0, %s116
    %s119 = sphi 0, %s118
    %s133 = sphi 0, %s119
    %s137 = sphi 0, %s137
    %s139 = sphi 0, %s137
    %s140 = sphi 0, %s139
    %s154 = sphi 0, %s140
    %s160 = sphi 0, %s162
    %s163 = sphi 0, %s160
    %s164 = sphi 0, %s163
    %s180 = sphi 0, %s164
    %s184 = sphi 0, %s184
    %s186 = sphi 0, %s184
    %s187 = sphi 0, %s186
    %s201 = sphi 0, %s187
    %s205 = sphi 0, %s205
    %s207 = sphi 0, %s205
    %s208 = sphi 0, %s207
    %s222 = sphi 0, %s208
    %s228 = sphi 0, %s230
    %s231 = sphi 0, %s228
    %s232 = sphi 0, %s231
    %s248 = sphi 0, %s232
    %s254 = sphi 0, %s256
    %s257 = sphi 0, %s254
    %s258 = sphi 0, %s257
    %s274 = sphi 0, %s258
  $region4: #{multi_scale_discriminator.3} parent=0 // loop_header_branch
    %22 = sbr.rel (%p20) target = $region8
  $region5: #{multi_scale_discriminator.3} parent=0 // loop_body
    %s24 = ssub.s32 %s19, 1
    %s25 = ssub.s32 %s19, 2
    %s26 = sadd.s32 %s19, 1
    %s27 = ssub.s32 %s19, %s26
    %p28 = scmp.eq.s32.totalorder %s27, 0
    %s30 = sadd.s32 %s29, 1
    %s31 = scalar_select %p28, %s29, %s30
    %p34 = pneg %p28
    %p35 = scmp.eq.s32.totalorder %s19, 1
    %p36 = por %p34, %p35
    %p37 = scmp.ne.s32.totalorder %s29, %s32
    %p38 = scmp.eq.s32.totalorder %s19, 0
    %p39 = por %p37, %p38
    %p40 = scmp.ne.s32.totalorder %s29, %s32
    %p41 = scmp.eq.s32.totalorder %s24, 1
    %p42 = por %p40, %p41
    %p43 = scmp.ne.s32.totalorder %s32, %s33
    %p44 = scmp.eq.s32.totalorder %s24, 0
    %p45 = por %p43, %p44
    %p46 = scmp.ne.s32.totalorder %s32, %s33
    %p47 = scmp.eq.s32.totalorder %s25, 1
    %p48 = por %p46, %p47
    %p50 = scmp.ne.s32.totalorder %s33, %s49
    %p51 = scmp.eq.s32.totalorder %s25, 0
    %p52 = por %p50, %p51
    %s54 = sadd.s32 %s53, 1
    %p57 = scmp.eq.s32.totalorder %s19, 1
    %p58 = scmp.ne.s32.totalorder %s53, %s55
    %p59 = scmp.eq.s32.totalorder %s19, 0
    %p60 = por %p58, %p59
    %p61 = scmp.ne.s32.totalorder %s53, %s55
    %p62 = scmp.eq.s32.totalorder %s24, 1
    %p63 = por %p61, %p62
    %p64 = scmp.ne.s32.totalorder %s55, %s56
    %p65 = scmp.eq.s32.totalorder %s24, 0
    %p66 = por %p64, %p65
    %p67 = scmp.ne.s32.totalorder %s55, %s56
    %p68 = scmp.eq.s32.totalorder %s25, 1
    %p69 = por %p67, %p68
    %p71 = scmp.ne.s32.totalorder %s56, %s70
    %p72 = scmp.eq.s32.totalorder %s25, 0
    %p73 = por %p71, %p72
    %s75 = sadd.s32 %s74, 1
    %p78 = scmp.eq.s32.totalorder %s19, 1
    %p79 = scmp.ne.s32.totalorder %s74, %s76
    %p80 = scmp.eq.s32.totalorder %s19, 0
    %p81 = por %p79, %p80
    %p82 = scmp.ne.s32.totalorder %s74, %s76
    %p83 = scmp.eq.s32.totalorder %s24, 1
    %p84 = por %p82, %p83
    %p85 = scmp.ne.s32.totalorder %s76, %s77
    %p86 = scmp.eq.s32.totalorder %s24, 0
    %p87 = por %p85, %p86
    %p88 = scmp.ne.s32.totalorder %s76, %s77
    %p89 = scmp.eq.s32.totalorder %s25, 1
    %p90 = por %p88, %p89
    %p92 = scmp.ne.s32.totalorder %s77, %s91
    %p93 = scmp.eq.s32.totalorder %s25, 0
    %p94 = por %p92, %p93
    %s96 = sadd.s32 %s95, 1
    %p99 = scmp.eq.s32.totalorder %s19, 1
    %p100 = scmp.ne.s32.totalorder %s95, %s97
    %p101 = scmp.eq.s32.totalorder %s19, 0
    %p102 = por %p100, %p101
    %p103 = scmp.ne.s32.totalorder %s95, %s97
    %p104 = scmp.eq.s32.totalorder %s24, 1
    %p105 = por %p103, %p104
    %p106 = scmp.ne.s32.totalorder %s97, %s98
    %p107 = scmp.eq.s32.totalorder %s24, 0
    %p108 = por %p106, %p107
    %p109 = scmp.ne.s32.totalorder %s97, %s98
    %p110 = scmp.eq.s32.totalorder %s25, 1
    %p111 = por %p109, %p110
    %p113 = scmp.ne.s32.totalorder %s98, %s112
    %p114 = scmp.eq.s32.totalorder %s25, 0
    %p115 = por %p113, %p114
    %s117 = sadd.s32 %s116, 1
    %p120 = scmp.eq.s32.totalorder %s19, 1
    %p121 = scmp.ne.s32.totalorder %s116, %s118
    %p122 = scmp.eq.s32.totalorder %s19, 0
    %p123 = por %p121, %p122
    %p124 = scmp.ne.s32.totalorder %s116, %s118
    %p125 = scmp.eq.s32.totalorder %s24, 1
    %p126 = por %p124, %p125
    %p127 = scmp.ne.s32.totalorder %s118, %s119
    %p128 = scmp.eq.s32.totalorder %s24, 0
    %p129 = por %p127, %p128
    %p130 = scmp.ne.s32.totalorder %s118, %s119
    %p131 = scmp.eq.s32.totalorder %s25, 1
    %p132 = por %p130, %p131
    %p134 = scmp.ne.s32.totalorder %s119, %s133
    %p135 = scmp.eq.s32.totalorder %s25, 0
    %p136 = por %p134, %p135
    %s138 = sadd.s32 %s137, 1
    %p141 = scmp.eq.s32.totalorder %s19, 1
    %p142 = scmp.ne.s32.totalorder %s137, %s139
    %p143 = scmp.eq.s32.totalorder %s19, 0
    %p144 = por %p142, %p143
    %p145 = scmp.ne.s32.totalorder %s137, %s139
    %p146 = scmp.eq.s32.totalorder %s24, 1
    %p147 = por %p145, %p146
    %p148 = scmp.ne.s32.totalorder %s139, %s140
    %p149 = scmp.eq.s32.totalorder %s24, 0
    %p150 = por %p148, %p149
    %p151 = scmp.ne.s32.totalorder %s139, %s140
    %p152 = scmp.eq.s32.totalorder %s25, 1
    %p153 = por %p151, %p152
    %p155 = scmp.ne.s32.totalorder %s140, %s154
    %p156 = scmp.eq.s32.totalorder %s25, 0
    %p157 = por %p155, %p156
    %s158 = ssub.s32 %s19, %s26
    %p159 = scmp.eq.s32.totalorder %s158, 0
    %s161 = sadd.s32 %s160, 1
    %s162 = scalar_select %p159, %s160, %s161
    %p165 = pneg %p159
    %p166 = scmp.eq.s32.totalorder %s19, 1
    %p167 = por %p165, %p166
    %p168 = scmp.ne.s32.totalorder %s160, %s163
    %p169 = scmp.eq.s32.totalorder %s19, 0
    %p170 = por %p168, %p169
    %p171 = scmp.ne.s32.totalorder %s160, %s163
    %p172 = scmp.eq.s32.totalorder %s24, 1
    %p173 = por %p171, %p172
    %p174 = scmp.ne.s32.totalorder %s163, %s164
    %p175 = scmp.eq.s32.totalorder %s24, 0
    %p176 = por %p174, %p175
    %p177 = scmp.ne.s32.totalorder %s163, %s164
    %p178 = scmp.eq.s32.totalorder %s25, 1
    %p179 = por %p177, %p178
    %p181 = scmp.ne.s32.totalorder %s164, %s180
    %p182 = scmp.eq.s32.totalorder %s25, 0
    %p183 = por %p181, %p182
    %s185 = sadd.s32 %s184, 1
    %p188 = scmp.eq.s32.totalorder %s19, 1
    %p189 = scmp.ne.s32.totalorder %s184, %s186
    %p190 = scmp.eq.s32.totalorder %s19, 0
    %p191 = por %p189, %p190
    %p192 = scmp.ne.s32.totalorder %s184, %s186
    %p193 = scmp.eq.s32.totalorder %s24, 1
    %p194 = por %p192, %p193
    %p195 = scmp.ne.s32.totalorder %s186, %s187
    %p196 = scmp.eq.s32.totalorder %s24, 0
    %p197 = por %p195, %p196
    %p198 = scmp.ne.s32.totalorder %s186, %s187
    %p199 = scmp.eq.s32.totalorder %s25, 1
    %p200 = por %p198, %p199
    %p202 = scmp.ne.s32.totalorder %s187, %s201
    %p203 = scmp.eq.s32.totalorder %s25, 0
    %p204 = por %p202, %p203
    %s206 = sadd.s32 %s205, 1
    %p209 = scmp.eq.s32.totalorder %s19, 1
    %p210 = scmp.ne.s32.totalorder %s205, %s207
    %p211 = scmp.eq.s32.totalorder %s19, 0
    %p212 = por %p210, %p211
    %p213 = scmp.ne.s32.totalorder %s205, %s207
    %p214 = scmp.eq.s32.totalorder %s24, 1
    %p215 = por %p213, %p214
    %p216 = scmp.ne.s32.totalorder %s207, %s208
    %p217 = scmp.eq.s32.totalorder %s24, 0
    %p218 = por %p216, %p217
    %p219 = scmp.ne.s32.totalorder %s207, %s208
    %p220 = scmp.eq.s32.totalorder %s25, 1
    %p221 = por %p219, %p220
    %p223 = scmp.ne.s32.totalorder %s208, %s222
    %p224 = scmp.eq.s32.totalorder %s25, 0
    %p225 = por %p223, %p224
    %s226 = ssub.s32 %s19, %s26
    %p227 = scmp.eq.s32.totalorder %s226, 0
    %s229 = sadd.s32 %s228, 1
    %s230 = scalar_select %p227, %s228, %s229
    %p233 = pneg %p227
    %p234 = scmp.eq.s32.totalorder %s19, 1
    %p235 = por %p233, %p234
    %p236 = scmp.ne.s32.totalorder %s228, %s231
    %p237 = scmp.eq.s32.totalorder %s19, 0
    %p238 = por %p236, %p237
    %p239 = scmp.ne.s32.totalorder %s228, %s231
    %p240 = scmp.eq.s32.totalorder %s24, 1
    %p241 = por %p239, %p240
    %p242 = scmp.ne.s32.totalorder %s231, %s232
    %p243 = scmp.eq.s32.totalorder %s24, 0
    %p244 = por %p242, %p243
    %p245 = scmp.ne.s32.totalorder %s231, %s232
    %p246 = scmp.eq.s32.totalorder %s25, 1
    %p247 = por %p245, %p246
    %p249 = scmp.ne.s32.totalorder %s232, %s248
    %p250 = scmp.eq.s32.totalorder %s25, 0
    %p251 = por %p249, %p250
    %s252 = ssub.s32 %s19, %s26
    %p253 = scmp.eq.s32.totalorder %s252, 0
    %s255 = sadd.s32 %s254, 1
    %s256 = scalar_select %p253, %s254, %s255
    %p259 = pneg %p253
    %p260 = scmp.eq.s32.totalorder %s19, 1
    %p261 = por %p259, %p260
    %p262 = scmp.ne.s32.totalorder %s254, %s257
    %p263 = scmp.eq.s32.totalorder %s19, 0
    %p264 = por %p262, %p263
    %p265 = scmp.ne.s32.totalorder %s254, %s257
    %p266 = scmp.eq.s32.totalorder %s24, 1
    %p267 = por %p265, %p266
    %p268 = scmp.ne.s32.totalorder %s257, %s258
    %p269 = scmp.eq.s32.totalorder %s24, 0
    %p270 = por %p268, %p269
    %p271 = scmp.ne.s32.totalorder %s257, %s258
    %p272 = scmp.eq.s32.totalorder %s25, 1
    %p273 = por %p271, %p272
    %p275 = scmp.ne.s32.totalorder %s258, %s274
    %p276 = scmp.eq.s32.totalorder %s25, 0
    %p277 = por %p275, %p276
    %p278 = scmp.le.s32.totalorder 1, %s19
    %p279 = scmp.lt.s32.totalorder %s19, 3
    %p280 = pnand %p278, %p279
    %p281 = pneg %p280
    // Predicated region
    $region9: #{multi_scale_discriminator.3} parent=5 // pred_check
      _
    $region10: #{multi_scale_discriminator.3} parent=5 // pred_check_branch
      %283 = sbr.rel (%p280) target = $region12
    $region11: #{multi_scale_discriminator.3} parent=5 // pred_region
      %s284 = ssub.s32 %s19, 1
      // Predicated region
      $region13: #{multi_scale_discriminator.3} parent=11 // pred_check
        %p285 = pneg %p66
      $region14: #{multi_scale_discriminator.3} parent=11 // pred_check_branch
        %287 = sbr.rel (%p285) target = $region16
      $region15: #{multi_scale_discriminator.3} parent=11 // pred_region
        _
      $region16: #{multi_scale_discriminator.3} parent=11 // pred_fallthru
        _
      // Predicated region
      $region17: #{multi_scale_discriminator.3} parent=11 // pred_check
        %p288 = pneg %p87
      $region18: #{multi_scale_discriminator.3} parent=11 // pred_check_branch
        %290 = sbr.rel (%p288) target = $region20
      $region19: #{multi_scale_discriminator.3} parent=11 // pred_region
        _
      $region20: #{multi_scale_discriminator.3} parent=11 // pred_fallthru
        _
      // Predicated region
      $region21: #{multi_scale_discriminator.3} parent=11 // pred_check
        %p291 = pneg %p108
      $region22: #{multi_scale_discriminator.3} parent=11 // pred_check_branch
        %293 = sbr.rel (%p291) target = $region24
      $region23: #{multi_scale_discriminator.3} parent=11 // pred_region
        _
      $region24: #{multi_scale_discriminator.3} parent=11 // pred_fallthru
        _
      // Predicated region
      $region25: #{multi_scale_discriminator.3} parent=11 // pred_check
        %p294 = pneg %p129
      $region26: #{multi_scale_discriminator.3} parent=11 // pred_check_branch
        %296 = sbr.rel (%p294) target = $region28
      $region27: #{multi_scale_discriminator.3} parent=11 // pred_region
        _
      $region28: #{multi_scale_discriminator.3} parent=11 // pred_fallthru
        _
      // Predicated region
      $region29: #{multi_scale_discriminator.3} parent=11 // pred_check
        %p297 = pneg %p150
      $region30: #{multi_scale_discriminator.3} parent=11 // pred_check_branch
        %299 = sbr.rel (%p297) target = $region32
      $region31: #{multi_scale_discriminator.3} parent=11 // pred_region
        _
      $region32: #{multi_scale_discriminator.3} parent=11 // pred_fallthru
        _
      // Predicated region
      $region33: #{multi_scale_discriminator.3} parent=11 // pred_check
        %p300 = pneg %p197
      $region34: #{multi_scale_discriminator.3} parent=11 // pred_check_branch
        %302 = sbr.rel (%p300) target = $region36
      $region35: #{multi_scale_discriminator.3} parent=11 // pred_region
        _
      $region36: #{multi_scale_discriminator.3} parent=11 // pred_fallthru
        _
      // Predicated region
      $region37: #{multi_scale_discriminator.3} parent=11 // pred_check
        %p303 = pneg %p218
      $region38: #{multi_scale_discriminator.3} parent=11 // pred_check_branch
        %305 = sbr.rel (%p303) target = $region40
      $region39: #{multi_scale_discriminator.3} parent=11 // pred_region
        _
      $region40: #{multi_scale_discriminator.3} parent=11 // pred_fallthru
        _
    $region12: #{multi_scale_discriminator.3} parent=5 // pred_fallthru
      _
    %p306 = scmp.lt.s32.totalorder %s19, 2
    // Predicated region
    $region41: #{multi_scale_discriminator.3} parent=5 // pred_check
      %p307 = pneg %p306
    $region42: #{multi_scale_discriminator.3} parent=5 // pred_check_branch
      %309 = sbr.rel (%p307) target = $region44
    $region43: #{multi_scale_discriminator.3} parent=5 // pred_region
      // Predicated region
      $region45: #{multi_scale_discriminator.3} parent=43 // pred_check
        %p310 = pneg %p39
      $region46: #{multi_scale_discriminator.3} parent=43 // pred_check_branch
        %312 = sbr.rel (%p310) target = $region48
      $region47: #{multi_scale_discriminator.3} parent=43 // pred_region
        %p313 = scmp.lt.s32.totalorder %s19, 1
        %s314 = scalar_select %p313, %s19, 1
        %s315 = smul.addr %s314, 2
        %s316 = smul.addr %s315, 8
        %s317 = scalar_lea.vmem %s0, %s316
      $region48: #{multi_scale_discriminator.3} parent=43 // pred_fallthru
        _
      // Predicated region
      $region49: #{multi_scale_discriminator.3} parent=43 // pred_check
        %p318 = pneg %p170
      $region50: #{multi_scale_discriminator.3} parent=43 // pred_check_branch
        %320 = sbr.rel (%p318) target = $region52
      $region51: #{multi_scale_discriminator.3} parent=43 // pred_region
        %p321 = scmp.lt.s32.totalorder %s19, 1
        %s322 = scalar_select %p321, %s19, 1
        %s323 = smul.addr %s322, 16
        %s324 = smul.addr %s323, 8
        %s325 = scalar_lea.vmem %s6, %s324
      $region52: #{multi_scale_discriminator.3} parent=43 // pred_fallthru
        _
    $region44: #{multi_scale_discriminator.3} parent=5 // pred_fallthru
      _
    %p326 = scmp.le.s32.totalorder 1, %s19
    %p327 = scmp.lt.s32.totalorder %s19, 3
    %p328 = pnand %p326, %p327
    %p329 = pneg %p328
    // Predicated region
    $region53: #{multi_scale_discriminator.3} parent=5 // pred_check
      _
    $region54: #{multi_scale_discriminator.3} parent=5 // pred_check_branch
      %331 = sbr.rel (%p328) target = $region56
    $region55: #{multi_scale_discriminator.3} parent=5 // pred_region
      %s332 = ssub.s32 %s19, 1
      %p333 = scmp.lt.s32.totalorder %s24, 1
      %s334 = scalar_select %p333, %s24, 1
      %s335 = smul.addr %s334, 2
      %s336 = smul.addr %s335, 8
      %s337 = scalar_lea.vmem %s0, %s336
      %p338 = pneg %p45
      %p339 = pneg %p42
      %p340 = pneg %p66
      %p341 = pneg %p63
      %p342 = pneg %p87
      %p343 = pneg %p84
      %p344 = pneg %p108
      %p345 = pneg %p105
      %p346 = pneg %p129
      %p347 = pneg %p126
      %p348 = pneg %p150
      %p349 = pneg %p147
      %p350 = scmp.lt.s32.totalorder %s24, 1
      %s351 = scalar_select %p350, %s24, 1
      %s352 = smul.addr %s351, 16
      %s353 = smul.addr %s352, 8
      %s354 = scalar_lea.vmem %s6, %s353
      %p355 = pneg %p176
      %p356 = pneg %p173
      %p357 = pneg %p197
      %p358 = pneg %p194
      %p359 = pneg %p218
      %p360 = pneg %p215
      %p361 = pneg %p244
      %p362 = pneg %p241
      %p363 = scmp.lt.s32.totalorder %s24, 1
      %s364 = scalar_select %p363, %s24, 1
      %s365 = smul.addr %s364, 2
      %s366 = scalar_lea.vmem %s9, %s365
      %p367 = pneg %p270
      %p368 = pneg %p267
      %p369 = scmp.lt.s32.totalorder %s24, 1
      %s370 = scalar_select %p369, %s24, 1
      %s371 = smul.addr %s370, 8
      %s372 = smul.addr %s371, 8
      %s373 = scalar_lea.vmem %s10, %s372
      %p374 = scmp.lt.s32.totalorder %s24, 1
      %s375 = scalar_select %p374, %s24, 1
      %s376 = smul.addr %s375, 2
      %s377 = smul.addr %s376, 8
      %s378 = scalar_lea.vmem %s0, %s377
      %p379 = scmp.lt.s32.totalorder %s24, 1
      %s380 = scalar_select %p379, %s24, 1
      %s381 = smul.addr %s380, 16
      %s382 = smul.addr %s381, 8
      %s383 = scalar_lea.vmem %s6, %s382
      %p384 = scmp.lt.s32.totalorder %s24, 1
      %s385 = scalar_select %p384, %s24, 1
      %s386 = smul.addr %s385, 2
      %s387 = scalar_lea.vmem %s9, %s386
      %p388 = scmp.lt.s32.totalorder %s24, 1
      %s389 = scalar_select %p388, %s24, 1
      %s390 = smul.addr %s389, 8
      %s391 = smul.addr %s390, 8
      %s392 = scalar_lea.vmem %s10, %s391
      %v394 = vld [vmem:[%s378] sm:$0xff]
      %v395 = vld [vmem:[%s378 + $0x8] sm:$0xff]
      %396 = vrot.lane.b32.xlu0 %v394, 17
      %v397 = vpop.permute.xlu0 %396
      %398 = vrot.lane.b32.xlu0 %v395, 17
      %v399 = vpop.permute.xlu0 %398
      %v400 = vlaneseq
      %v401 = vand.u32 %v400, 127
      %vm402 = vcmp.lt.s32.totalorder %v401, 17
      %v403 = vsel %vm402, %v397, %v399
      %v404 = vsel %vm402, %v399, %v397
      %v405 = vld [vmem:[%s1] ss:$8 sm:$0x3]
      %v407 = vperm.slane %v405, 0
      %v408 = vperm.slane %v405, 1
      %v411 = vmul.f32 %v407, %v404
      %v412 = vmul.f32 %v408, %v403
      %v413 = vpack.c.bf16 %v412, %v411
      %414 = vst [vmem:[#allocation2] sm:$0xff] %v413
      %415 = vrot.lane.b32.xlu0 %v394, 16
      %v416 = vpop.permute.xlu0 %415
      %417 = vrot.lane.b32.xlu0 %v395, 16
      %v418 = vpop.permute.xlu0 %417
      %vm419 = vcmp.lt.s32.totalorder %v401, 16
      %v420 = vsel %vm419, %v416, %v418
      %v421 = vsel %vm419, %v418, %v416
      %s422 = scalar_lea.vmem %s1, 1
      %v423 = vld [vmem:[%s422] ss:$8 sm:$0x3]
      %v425 = vperm.slane %v423, 0
      %v426 = vperm.slane %v423, 1
      %v429 = vmul.f32 %v425, %v421
      %v430 = vmul.f32 %v426, %v420
      %v431 = vpack.c.bf16 %v430, %v429
      %432 = vst [vmem:[#allocation2 + $0x8] sm:$0xff] %v431
      %433 = vrot.lane.b32.xlu0 %v394, 15
      %v434 = vpop.permute.xlu0 %433
      %435 = vrot.lane.b32.xlu0 %v395, 15
      %v436 = vpop.permute.xlu0 %435
      %vm437 = vcmp.lt.s32.totalorder %v401, 15
      %v438 = vsel %vm437, %v434, %v436
      %v439 = vsel %vm437, %v436, %v434
      %s440 = scalar_lea.vmem %s1, 2
      %v441 = vld [vmem:[%s440] ss:$8 sm:$0x3]
      %v443 = vperm.slane %v441, 0
      %v444 = vperm.slane %v441, 1
      %v447 = vmul.f32 %v443, %v439
      %v448 = vmul.f32 %v444, %v438
      %v449 = vpack.c.bf16 %v448, %v447
      %450 = vst [vmem:[#allocation2 + $0x10] sm:$0xff] %v449
      %451 = vrot.lane.b32.xlu0 %v394, 1
      %v452 = vpop.permute.xlu0 %451
      %453 = vrot.lane.b32.xlu0 %v395, 1
      %v454 = vpop.permute.xlu0 %453
      %vm455 = vcmp.lt.s32.totalorder %v401, 1
      %v456 = vsel %vm455, %v452, %v454
      %v457 = vsel %vm455, %v454, %v452
      %s458 = scalar_lea.vmem %s1, 3
      %v459 = vld [vmem:[%s458] ss:$8 sm:$0x3]
      %v461 = vperm.slane %v459, 0
      %v462 = vperm.slane %v459, 1
      %v465 = vmul.f32 %v461, %v457
      %v466 = vmul.f32 %v462, %v456
      %v467 = vpack.c.bf16 %v466, %v465
      %468 = vst [vmem:[#allocation2 + $0x18] sm:$0xff] %v467
      %s469 = scalar_lea.vmem %s1, 4
      %v470 = vld [vmem:[%s469] ss:$8 sm:$0x3]
      %v472 = vperm.slane %v470, 0
      %v473 = vperm.slane %v470, 1
      %v476 = vmul.f32 %v472, %v394
      %v477 = vmul.f32 %v473, %v395
      %v478 = vpack.c.bf16 %v477, %v476
      %479 = vst [vmem:[#allocation2 + $0x20] sm:$0xff] %v478
      %480 = vrot.lane.b32.xlu0 %v394, 127
      %v481 = vpop.permute.xlu0 %480
      %482 = vrot.lane.b32.xlu0 %v395, 127
      %v483 = vpop.permute.xlu0 %482
      %vm484 = vcmp.lt.s32.totalorder %v401, 127
      %v485 = vsel %vm484, %v481, %v483
      %v486 = vsel %vm484, %v483, %v481
      %s487 = scalar_lea.vmem %s1, 5
      %v488 = vld [vmem:[%s487] ss:$8 sm:$0x3]
      %v490 = vperm.slane %v488, 0
      %v491 = vperm.slane %v488, 1
      %v494 = vmul.f32 %v490, %v485
      %v495 = vmul.f32 %v491, %v486
      %v496 = vpack.c.bf16 %v495, %v494
      %497 = vst [vmem:[#allocation2 + $0x28] sm:$0xff] %v496
      %498 = vrot.lane.b32.xlu0 %v394, 113
      %v499 = vpop.permute.xlu0 %498
      %500 = vrot.lane.b32.xlu0 %v395, 113
      %v501 = vpop.permute.xlu0 %500
      %vm502 = vcmp.lt.s32.totalorder %v401, 113
      %v503 = vsel %vm502, %v499, %v501
      %v504 = vsel %vm502, %v501, %v499
      %s505 = scalar_lea.vmem %s1, 6
      %v506 = vld [vmem:[%s505] ss:$8 sm:$0x3]
      %v508 = vperm.slane %v506, 0
      %v509 = vperm.slane %v506, 1
      %v512 = vmul.f32 %v508, %v503
      %v513 = vmul.f32 %v509, %v504
      %v514 = vpack.c.bf16 %v513, %v512
      %515 = vst [vmem:[#allocation2 + $0x30] sm:$0xff] %v514
      %516 = vrot.lane.b32.xlu0 %v394, 112
      %v517 = vpop.permute.xlu0 %516
      %518 = vrot.lane.b32.xlu0 %v395, 112
      %v519 = vpop.permute.xlu0 %518
      %vm520 = vcmp.lt.s32.totalorder %v401, 112
      %v521 = vsel %vm520, %v517, %v519
      %v522 = vsel %vm520, %v519, %v517
      %s523 = scalar_lea.vmem %s1, 7
      %v524 = vld [vmem:[%s523] ss:$8 sm:$0x3]
      %v526 = vperm.slane %v524, 0
      %v527 = vperm.slane %v524, 1
      %v530 = vmul.f32 %v526, %v521
      %v531 = vmul.f32 %v527, %v522
      %v532 = vpack.c.bf16 %v531, %v530
      %533 = vst [vmem:[#allocation2 + $0x38] sm:$0xff] %v532
      %534 = vrot.lane.b32.xlu0 %v394, 111
      %v535 = vpop.permute.xlu0 %534
      %536 = vrot.lane.b32.xlu0 %v395, 111
      %v537 = vpop.permute.xlu0 %536
      %vm538 = vcmp.lt.s32.totalorder %v401, 111
      %v539 = vsel %vm538, %v535, %v537
      %v540 = vsel %vm538, %v537, %v535
      %s541 = scalar_lea.vmem %s1, 16
      %v542 = vld [vmem:[%s541] ss:$8 sm:$0x3]
      %v544 = vperm.slane %v542, 0
      %v545 = vperm.slane %v542, 1
      %v548 = vmul.f32 %v544, %v539
      %v549 = vmul.f32 %v545, %v540
      %v550 = vpack.c.bf16 %v549, %v548
      %551 = vst [vmem:[#allocation2 + $0x40] sm:$0xff] %v550
      %v552 = vld [vmem:[%s2] sm:$0xf]
      %v553 = vld [vmem:[%s2 + $0x4] sm:$0xf]
      %v554 = vld [vmem:[#allocation2] sm:$0xff]
      %v555 = vld [vmem:[#allocation2 + $0x8] sm:$0xff]
      %v556 = vld [vmem:[#allocation2 + $0x10] sm:$0xff]
      %v557 = vld [vmem:[#allocation2 + $0x18] sm:$0xff]
      %v558 = vld [vmem:[#allocation2 + $0x20] sm:$0xff]
      %v559 = vld [vmem:[#allocation2 + $0x28] sm:$0xff]
      %v560 = vld [vmem:[#allocation2 + $0x30] sm:$0xff]
      %v561 = vld [vmem:[#allocation2 + $0x38] sm:$0xff]
      %v562 = vld [vmem:[#allocation2 + $0x40] sm:$0xff]
      %v563 = vld [vmem:[%s3] sm:$0xff]
      %v564 = vld [vmem:[%s3 + $0x8] sm:$0xff]
      %566 = vset.pattern.permute.xlu0 0
      %567 = vperm.xlu0 %566, %v563
      %v568 = vpop.permute.xlu0 %567
      %571 = vset.pattern.permute.xlu0 0
      %572 = vperm.xlu0 %571, %v564
      %v573 = vpop.permute.xlu0 %572
      %v577 = vunpack.c.l.b16 %v552
      %v578 = vunpack.c.l.b16 %v553
      %v579 = vpack.c.b16 %v578, %v577
      %v589 = vunpack.c.l.b16 %v554
      %v590 = vunpack.c.h.b16 %v554
      %v591 = vunpack.c.l.b16 %v555
      %v592 = vunpack.c.h.b16 %v555
      %v593 = vunpack.c.l.b16 %v556
      %v594 = vunpack.c.h.b16 %v556
      %v595 = vunpack.c.l.b16 %v557
      %v596 = vunpack.c.h.b16 %v557
      %v597 = vunpack.c.l.b16 %v558
      %v598 = vunpack.c.h.b16 %v558
      %v599 = vunpack.c.l.b16 %v559
      %v600 = vunpack.c.h.b16 %v559
      %v601 = vunpack.c.l.b16 %v560
      %v602 = vunpack.c.h.b16 %v560
      %v603 = vunpack.c.l.b16 %v561
      %v604 = vunpack.c.h.b16 %v561
      %v605 = vunpack.c.l.b16 %v562
      %v606 = vunpack.c.h.b16 %v562
      %v607 = vpack.c.b16 %v591, %v589
      %v608 = vpack.c.b16 %v592, %v590
      %v609 = vpack.c.b16 %v595, %v593
      %v610 = vpack.c.b16 %v596, %v594
      %v611 = vpack.c.b16 %v599, %v597
      %v612 = vpack.c.b16 %v600, %v598
      %v613 = vpack.c.b16 %v603, %v601
      %v614 = vpack.c.b16 %v604, %v602
      %v615 = vpack.c.b16 %v605, %v605
      %v616 = vpack.c.b16 %v606, %v606
      %vm625 = vcmask 588800
      %v627 = vsel %vm625, %v579, 0
      %vm629 = vcmask 1043456
      %v631 = vsel %vm629, %v615, 0
      %v634 = vsel %vm629, %v616, 0
      %636 = vmatpush.bf16.msra.mxu0 0
      %637 = vmatpush.bf16.msra.mxu0 0
      %638 = vmatpush.bf16.msra.mxu0 0
      %639 = vmatpush.bf16.msra.mxu0 %v631
      %640 = vmatpush.bf16.msra.mxu0 %v613
      %641 = vmatpush.bf16.msra.mxu0 %v611
      %642 = vmatpush.bf16.msra.mxu0 %v609
      %643 = vmatpush.bf16.msra.mxu0 %v607
      %644 = vmatmul.bf16.gmra.mxu0 %v627
      %v645 = vpop.f32.mrf.mxu0
      %v646 = vadd.f32 %v568, %v645
      %v647 = vpop.f32.mrf.mxu0
      %v648 = vadd.f32 %v573, %v647
      %649 = vdwg.mxu0
      %650 = vmatpush.bf16.msra.mxu0 0
      %651 = vmatpush.bf16.msra.mxu0 0
      %652 = vmatpush.bf16.msra.mxu0 0
      %653 = vmatpush.bf16.msra.mxu0 %v634
      %654 = vmatpush.bf16.msra.mxu0 %v614
      %655 = vmatpush.bf16.msra.mxu0 %v612
      %656 = vmatpush.bf16.msra.mxu0 %v610
      %657 = vmatpush.bf16.msra.mxu0 %v608
      %658 = vmatmul.bf16.gmra.mxu0 %v627
      %v659 = vpop.f32.mrf.mxu0
      %v660 = vadd.f32 %v568, %v659
      %v661 = vpop.f32.mrf.mxu0
      %v662 = vadd.f32 %v573, %v661
      %663 = vdwg.mxu0
      %v664 = vmul.f32 %v646, 0.2
      %v665 = vmul.f32 %v660, 0.2
      %v666 = vmul.f32 %v648, 0.2
      %v667 = vmul.f32 %v662, 0.2
      %v668 = vmax.f32 %v646, %v664
      %v669 = vmax.f32 %v660, %v665
      %v670 = vmax.f32 %v648, %v666
      %v671 = vmax.f32 %v662, %v667
      %v672 = vld [vmem:[%s4] sm:$0xf]
      %v673 = vld [vmem:[%s4 + $0x4] sm:$0x1]
      %v674 = vpack.c.bf16 %v670, %v668
      %v675 = vpack.c.bf16 %v671, %v669
      %v678 = vunpack.c.l.b16 %v672
      %v679 = vunpack.c.l.b16 %v673
      %v680 = vpack.c.b16 %v679, %v678
      %vm681 = vcmask 130048
      %v683 = vsel %vm681, %v680, 0
      %685 = vmatpush.bf16.msra.mxu0 0
      %686 = vmatpush.bf16.msra.mxu0 0
      %687 = vmatpush.bf16.msra.mxu0 0
      %688 = vmatpush.bf16.msra.mxu0 0
      %689 = vmatpush.bf16.msra.mxu0 0
      %690 = vmatpush.bf16.msra.mxu0 0
      %691 = vmatpush.bf16.msra.mxu0 0
      %692 = vmatpush.bf16.msra.mxu0 %v674
      %693 = vmatmul.bf16.gmra.mxu0 %v683
      %v694 = vpop.f32.mrf.mxu0
      %v695 = vadd.f32 0.0, %v694
      %v696 = vpop.f32.mrf.mxu0
      %v697 = vadd.f32 0.0, %v696
      %698 = vdwg.mxu0
      %699 = vmatpush.bf16.msra.mxu0 0
      %700 = vmatpush.bf16.msra.mxu0 0
      %701 = vmatpush.bf16.msra.mxu0 0
      %702 = vmatpush.bf16.msra.mxu0 0
      %703 = vmatpush.bf16.msra.mxu0 0
      %704 = vmatpush.bf16.msra.mxu0 0
      %705 = vmatpush.bf16.msra.mxu0 0
      %706 = vmatpush.bf16.msra.mxu0 %v675
      %707 = vmatmul.bf16.gmra.mxu0 %v683
      %v708 = vpop.f32.mrf.mxu0
      %v709 = vadd.f32 0.0, %v708
      %v710 = vpop.f32.mrf.mxu0
      %v711 = vadd.f32 0.0, %v710
      %712 = vdwg.mxu0
      %713 = vrot.lane.b32.xlu0 %v695, 17
      %v714 = vpop.permute.xlu0 %713
      %715 = vrot.lane.b32.xlu0 %v709, 17
      %v716 = vpop.permute.xlu0 %715
      %v717 = vsel %vm402, %v714, %v716
      %v718 = vsel %vm402, %v716, %v714
      %v719 = vld [vmem:[%s1] ss:$8 sm:$0x3]
      %v722 = vrot.slane %v717, 7
      %vm723 = vcmask 1040384
      %v724 = vsel %vm723, %v718, %v722
      %v726 = vmul.f32 %v719, %v724
      %v727 = vadd.f32 %v726, 0.0
      %v730 = vrot.slane %v695, 1
      %v731 = vrot.slane %v709, 1
      %734 = vrot.lane.b32.xlu0 %v730, 16
      %v735 = vpop.permute.xlu0 %734
      %736 = vrot.lane.b32.xlu0 %v731, 16
      %v737 = vpop.permute.xlu0 %736
      %v738 = vsel %vm419, %v735, %v737
      %v739 = vsel %vm419, %v737, %v735
      %v740 = vld [vmem:[%s422] ss:$8 sm:$0x3]
      %v743 = vrot.slane %v738, 7
      %v744 = vsel %vm723, %v739, %v743
      %v746 = vmul.f32 %v740, %v744
      %v747 = vadd.f32 %v727, %v746
      %v748 = vrot.slane %v695, 2
      %v749 = vrot.slane %v709, 2
      %752 = vrot.lane.b32.xlu0 %v748, 15
      %v753 = vpop.permute.xlu0 %752
      %754 = vrot.lane.b32.xlu0 %v749, 15
      %v755 = vpop.permute.xlu0 %754
      %v756 = vsel %vm437, %v753, %v755
      %v757 = vsel %vm437, %v755, %v753
      %v758 = vld [vmem:[%s440] ss:$8 sm:$0x3]
      %v761 = vrot.slane %v756, 7
      %v762 = vsel %vm723, %v757, %v761
      %v764 = vmul.f32 %v758, %v762
      %v765 = vadd.f32 %v747, %v764
      %v766 = vrot.slane %v695, 3
      %v767 = vrot.slane %v709, 3
      %770 = vrot.lane.b32.xlu0 %v766, 1
      %v771 = vpop.permute.xlu0 %770
      %772 = vrot.lane.b32.xlu0 %v767, 1
      %v773 = vpop.permute.xlu0 %772
      %v774 = vsel %vm455, %v771, %v773
      %v775 = vsel %vm455, %v773, %v771
      %v776 = vld [vmem:[%s458] ss:$8 sm:$0x3]
      %v779 = vrot.slane %v774, 7
      %v780 = vsel %vm723, %v775, %v779
      %v782 = vmul.f32 %v776, %v780
      %v783 = vadd.f32 %v765, %v782
      %v784 = vld [vmem:[%s469] ss:$8 sm:$0x3]
      %785 = vst [vmem:[#allocation1] sm:$0xff] %v695
      %786 = vst [vmem:[#allocation1 + $0x9] sm:$0xff] %v709
      %s787 = scalar_lea.vmem [#allocation1], 4
      %v788 = vld [vmem:[%s787] ss:$9 sm:$0xff]
      %v790 = vmul.f32 %v784, %v788
      %v791 = vadd.f32 %v783, %v790
      %v792 = vrot.slane %v695, 5
      %v793 = vrot.slane %v709, 5
      %796 = vrot.lane.b32.xlu0 %v792, 127
      %v797 = vpop.permute.xlu0 %796
      %798 = vrot.lane.b32.xlu0 %v793, 127
      %v799 = vpop.permute.xlu0 %798
      %v800 = vsel %vm484, %v797, %v799
      %v801 = vsel %vm484, %v799, %v797
      %v802 = vld [vmem:[%s487] ss:$8 sm:$0x3]
      %v805 = vrot.slane %v801, 7
      %v806 = vsel %vm723, %v800, %v805
      %v808 = vmul.f32 %v802, %v806
      %v809 = vadd.f32 %v791, %v808
      %v810 = vrot.slane %v695, 6
      %v811 = vrot.slane %v709, 6
      %814 = vrot.lane.b32.xlu0 %v810, 113
      %v815 = vpop.permute.xlu0 %814
      %816 = vrot.lane.b32.xlu0 %v811, 113
      %v817 = vpop.permute.xlu0 %816
      %v818 = vsel %vm502, %v815, %v817
      %v819 = vsel %vm502, %v817, %v815
      %v820 = vld [vmem:[%s505] ss:$8 sm:$0x3]
      %v823 = vrot.slane %v819, 7
      %v824 = vsel %vm723, %v818, %v823
      %v826 = vmul.f32 %v820, %v824
      %v827 = vadd.f32 %v809, %v826
      %v828 = vrot.slane %v695, 7
      %v829 = vrot.slane %v709, 7
      %832 = vrot.lane.b32.xlu0 %v828, 112
      %v833 = vpop.permute.xlu0 %832
      %834 = vrot.lane.b32.xlu0 %v829, 112
      %v835 = vpop.permute.xlu0 %834
      %v836 = vsel %vm520, %v833, %v835
      %v837 = vsel %vm520, %v835, %v833
      %v838 = vld [vmem:[%s523] ss:$8 sm:$0x3]
      %v841 = vrot.slane %v837, 7
      %v842 = vsel %vm723, %v836, %v841
      %v844 = vmul.f32 %v838, %v842
      %v845 = vadd.f32 %v827, %v844
      %846 = vrot.lane.b32.xlu0 %v697, 111
      %v847 = vpop.permute.xlu0 %846
      %848 = vrot.lane.b32.xlu0 %v711, 111
      %v849 = vpop.permute.xlu0 %848
      %v850 = vsel %vm538, %v847, %v849
      %v851 = vsel %vm538, %v849, %v847
      %v852 = vld [vmem:[%s541] ss:$8 sm:$0x3]
      %v855 = vrot.slane %v851, 7
      %v856 = vsel %vm723, %v850, %v855
      %v858 = vmul.f32 %v852, %v856
      %v859 = vadd.f32 %v845, %v858
      %v860 = vld [vmem:[#allocation3] sm:$0x1]
      %862 = vset.pattern.permute.xlu0 0
      %863 = vperm.xlu0 %862, %v860
      %v864 = vpop.permute.xlu0 %863
      %v866 = vperm.slane %v864, 0
      %v867 = vadd.f32 %v859, %v866
      %v868 = vlaneseq
      %vm869 = vcmp.ge.s32.totalorder %v868, 0
      %vm870 = vcmp.lt.s32.totalorder %v868, 256
      %vm871 = vmand %vm869, %vm870
      %872 = vst.msk [vmem:[%s387] sm:$0x3] %vm871, %v867
      %v873 = vld [vmem:[%s383] sm:$0xff]
      %v874 = vld [vmem:[%s383 + $0x8] sm:$0xff]
      %v875 = vld [vmem:[%s383 + $0x10] sm:$0xff]
      %v876 = vld [vmem:[%s383 + $0x18] sm:$0xff]
      %v877 = vld [vmem:[%s383 + $0x20] sm:$0xff]
      %v878 = vld [vmem:[%s383 + $0x28] sm:$0xff]
      %v879 = vld [vmem:[%s383 + $0x30] sm:$0xff]
      %v880 = vld [vmem:[%s383 + $0x38] sm:$0xff]
      %v881 = vld [vmem:[%s383 + $0x40] sm:$0xff]
      %v882 = vld [vmem:[%s383 + $0x48] sm:$0xff]
      %v883 = vld [vmem:[%s383 + $0x50] sm:$0xff]
      %v884 = vld [vmem:[%s383 + $0x58] sm:$0xff]
      %v885 = vld [vmem:[%s383 + $0x60] sm:$0xff]
      %v886 = vld [vmem:[%s383 + $0x68] sm:$0xff]
      %v887 = vld [vmem:[%s383 + $0x70] sm:$0xff]
      %v888 = vld [vmem:[%s383 + $0x78] sm:$0xff]
      %v889 = vld [vmem:[%s7] sm:$0xff]
      %v891 = vsel %vm681, %v889, 0
      %893 = vmatpush.msra.mxu0 0.0
      %894 = vmatpush.msra.mxu0 0.0
      %895 = vmatpush.msra.mxu0 0.0
      %896 = vmatpush.msra.mxu0 0.0
      %897 = vmatpush.msra.mxu0 0.0
      %898 = vmatpush.msra.mxu0 0.0
      %899 = vmatpush.msra.mxu0 0.0
      %900 = vmatpush.msra.mxu0 0.0
      %901 = vmatpush.msra.mxu0 0.0
      %902 = vmatpush.msra.mxu0 0.0
      %903 = vmatpush.msra.mxu0 0.0
      %904 = vmatpush.msra.mxu0 0.0
      %905 = vmatpush.msra.mxu0 0.0
      %906 = vmatpush.msra.mxu0 0.0
      %907 = vmatpush.msra.mxu0 %v874
      %908 = vmatpush.msra.mxu0 %v873
      %909 = vmatmul.f32.gmra.mxu0 %v891
      %v910 = vpop.f32.mrf.mxu0
      %v911 = vadd.f32 0.0, %v910
      %912 = vdwg.mxu0
      %913 = vmatpush.msra.mxu0 0.0
      %914 = vmatpush.msra.mxu0 0.0
      %915 = vmatpush.msra.mxu0 0.0
      %916 = vmatpush.msra.mxu0 0.0
      %917 = vmatpush.msra.mxu0 0.0
      %918 = vmatpush.msra.mxu0 0.0
      %919 = vmatpush.msra.mxu0 0.0
      %920 = vmatpush.msra.mxu0 0.0
      %921 = vmatpush.msra.mxu0 0.0
      %922 = vmatpush.msra.mxu0 0.0
      %923 = vmatpush.msra.mxu0 0.0
      %924 = vmatpush.msra.mxu0 0.0
      %925 = vmatpush.msra.mxu0 0.0
      %926 = vmatpush.msra.mxu0 0.0
      %927 = vmatpush.msra.mxu0 %v876
      %928 = vmatpush.msra.mxu0 %v875
      %929 = vmatmul.f32.gmra.mxu0 %v891
      %v930 = vpop.f32.mrf.mxu0
      %v931 = vadd.f32 0.0, %v930
      %932 = vdwg.mxu0
      %933 = vmatpush.msra.mxu0 0.0
      %934 = vmatpush.msra.mxu0 0.0
      %935 = vmatpush.msra.mxu0 0.0
      %936 = vmatpush.msra.mxu0 0.0
      %937 = vmatpush.msra.mxu0 0.0
      %938 = vmatpush.msra.mxu0 0.0
      %939 = vmatpush.msra.mxu0 0.0
      %940 = vmatpush.msra.mxu0 0.0
      %941 = vmatpush.msra.mxu0 0.0
      %942 = vmatpush.msra.mxu0 0.0
      %943 = vmatpush.msra.mxu0 0.0
      %944 = vmatpush.msra.mxu0 0.0
      %945 = vmatpush.msra.mxu0 0.0
      %946 = vmatpush.msra.mxu0 0.0
      %947 = vmatpush.msra.mxu0 %v878
      %948 = vmatpush.msra.mxu0 %v877
      %949 = vmatmul.f32.gmra.mxu0 %v891
      %v950 = vpop.f32.mrf.mxu0
      %v951 = vadd.f32 0.0, %v950
      %952 = vdwg.mxu0
      %953 = vmatpush.msra.mxu0 0.0
      %954 = vmatpush.msra.mxu0 0.0
      %955 = vmatpush.msra.mxu0 0.0
      %956 = vmatpush.msra.mxu0 0.0
      %957 = vmatpush.msra.mxu0 0.0
      %958 = vmatpush.msra.mxu0 0.0
      %959 = vmatpush.msra.mxu0 0.0
      %960 = vmatpush.msra.mxu0 0.0
      %961 = vmatpush.msra.mxu0 0.0
      %962 = vmatpush.msra.mxu0 0.0
      %963 = vmatpush.msra.mxu0 0.0
      %964 = vmatpush.msra.mxu0 0.0
      %965 = vmatpush.msra.mxu0 0.0
      %966 = vmatpush.msra.mxu0 0.0
      %967 = vmatpush.msra.mxu0 %v880
      %968 = vmatpush.msra.mxu0 %v879
      %969 = vmatmul.f32.gmra.mxu0 %v891
      %v970 = vpop.f32.mrf.mxu0
      %v971 = vadd.f32 0.0, %v970
      %972 = vdwg.mxu0
      %973 = vmatpush.msra.mxu0 0.0
      %974 = vmatpush.msra.mxu0 0.0
      %975 = vmatpush.msra.mxu0 0.0
      %976 = vmatpush.msra.mxu0 0.0
      %977 = vmatpush.msra.mxu0 0.0
      %978 = vmatpush.msra.mxu0 0.0
      %979 = vmatpush.msra.mxu0 0.0
      %980 = vmatpush.msra.mxu0 0.0
      %981 = vmatpush.msra.mxu0 0.0
      %982 = vmatpush.msra.mxu0 0.0
      %983 = vmatpush.msra.mxu0 0.0
      %984 = vmatpush.msra.mxu0 0.0
      %985 = vmatpush.msra.mxu0 0.0
      %986 = vmatpush.msra.mxu0 0.0
      %987 = vmatpush.msra.mxu0 %v882
      %988 = vmatpush.msra.mxu0 %v881
      %989 = vmatmul.f32.gmra.mxu0 %v891
      %v990 = vpop.f32.mrf.mxu0
      %v991 = vadd.f32 0.0, %v990
      %992 = vdwg.mxu0
      %993 = vmatpush.msra.mxu0 0.0
      %994 = vmatpush.msra.mxu0 0.0
      %995 = vmatpush.msra.mxu0 0.0
      %996 = vmatpush.msra.mxu0 0.0
      %997 = vmatpush.msra.mxu0 0.0
      %998 = vmatpush.msra.mxu0 0.0
      %999 = vmatpush.msra.mxu0 0.0
      %1000 = vmatpush.msra.mxu0 0.0
      %1001 = vmatpush.msra.mxu0 0.0
      %1002 = vmatpush.msra.mxu0 0.0
      %1003 = vmatpush.msra.mxu0 0.0
      %1004 = vmatpush.msra.mxu0 0.0
      %1005 = vmatpush.msra.mxu0 0.0
      %1006 = vmatpush.msra.mxu0 0.0
      %1007 = vmatpush.msra.mxu0 %v884
      %1008 = vmatpush.msra.mxu0 %v883
      %1009 = vmatmul.f32.gmra.mxu0 %v891
      %v1010 = vpop.f32.mrf.mxu0
      %v1011 = vadd.f32 0.0, %v1010
      %1012 = vdwg.mxu0
      %1013 = vmatpush.msra.mxu0 0.0
      %1014 = vmatpush.msra.mxu0 0.0
      %1015 = vmatpush.msra.mxu0 0.0
      %1016 = vmatpush.msra.mxu0 0.0
      %1017 = vmatpush.msra.mxu0 0.0
      %1018 = vmatpush.msra.mxu0 0.0
      %1019 = vmatpush.msra.mxu0 0.0
      %1020 = vmatpush.msra.mxu0 0.0
      %1021 = vmatpush.msra.mxu0 0.0
      %1022 = vmatpush.msra.mxu0 0.0
      %1023 = vmatpush.msra.mxu0 0.0
      %1024 = vmatpush.msra.mxu0 0.0
      %1025 = vmatpush.msra.mxu0 0.0
      %1026 = vmatpush.msra.mxu0 0.0
      %1027 = vmatpush.msra.mxu0 %v886
      %1028 = vmatpush.msra.mxu0 %v885
      %1029 = vmatmul.f32.gmra.mxu0 %v891
      %v1030 = vpop.f32.mrf.mxu0
      %v1031 = vadd.f32 0.0, %v1030
      %1032 = vdwg.mxu0
      %1033 = vmatpush.msra.mxu0 0.0
      %1034 = vmatpush.msra.mxu0 0.0
      %1035 = vmatpush.msra.mxu0 0.0
      %1036 = vmatpush.msra.mxu0 0.0
      %1037 = vmatpush.msra.mxu0 0.0
      %1038 = vmatpush.msra.mxu0 0.0
      %1039 = vmatpush.msra.mxu0 0.0
      %1040 = vmatpush.msra.mxu0 0.0
      %1041 = vmatpush.msra.mxu0 0.0
      %1042 = vmatpush.msra.mxu0 0.0
      %1043 = vmatpush.msra.mxu0 0.0
      %1044 = vmatpush.msra.mxu0 0.0
      %1045 = vmatpush.msra.mxu0 0.0
      %1046 = vmatpush.msra.mxu0 0.0
      %1047 = vmatpush.msra.mxu0 %v888
      %1048 = vmatpush.msra.mxu0 %v887
      %1049 = vmatmul.f32.gmra.mxu0 %v891
      %v1050 = vpop.f32.mrf.mxu0
      %v1051 = vadd.f32 0.0, %v1050
      %1052 = vdwg.mxu0
      %v1053 = vld [vmem:[%s8] sm:$0xff]
      %v1054 = vld [vmem:[%s8 + $0x8] sm:$0xff]
      %v1056 = vsel %vm681, %v911, 0
      %v1059 = vsel %vm681, %v931, 0
      %v1062 = vsel %vm681, %v951, 0
      %v1065 = vsel %vm681, %v971, 0
      %v1068 = vsel %vm681, %v991, 0
      %v1071 = vsel %vm681, %v1011, 0
      %v1074 = vsel %vm681, %v1031, 0
      %v1077 = vsel %vm681, %v1051, 0
      %1079 = vmatpush.msra.mxu0 0.0
      %1080 = vmatpush.msra.mxu0 0.0
      %1081 = vmatpush.msra.mxu0 0.0
      %1082 = vmatpush.msra.mxu0 0.0
      %1083 = vmatpush.msra.mxu0 0.0
      %1084 = vmatpush.msra.mxu0 0.0
      %1085 = vmatpush.msra.mxu0 0.0
      %1086 = vmatpush.msra.mxu0 0.0
      %1087 = vmatpush.msra.mxu0 0.0
      %1088 = vmatpush.msra.mxu0 0.0
      %1089 = vmatpush.msra.mxu0 0.0
      %1090 = vmatpush.msra.mxu0 0.0
      %1091 = vmatpush.msra.mxu0 0.0
      %1092 = vmatpush.msra.mxu0 0.0
      %1093 = vmatpush.msra.mxu0 %v1054
      %1094 = vmatpush.msra.mxu0 %v1053
      %1095 = vmatmul.f32.gmra.mxu0 %v1056
      %v1096 = vpop.f32.mrf.mxu0
      %v1097 = vadd.f32 0.0, %v1096
      %1098 = vmatmul.f32.gmra.mxu0 %v1059
      %v1099 = vpop.f32.mrf.mxu0
      %v1100 = vadd.f32 0.0, %v1099
      %1101 = vmatmul.f32.gmra.mxu0 %v1062
      %v1102 = vpop.f32.mrf.mxu0
      %v1103 = vadd.f32 0.0, %v1102
      %1104 = vmatmul.f32.gmra.mxu0 %v1065
      %v1105 = vpop.f32.mrf.mxu0
      %v1106 = vadd.f32 0.0, %v1105
      %1107 = vmatmul.f32.gmra.mxu0 %v1068
      %v1108 = vpop.f32.mrf.mxu0
      %v1109 = vadd.f32 0.0, %v1108
      %1110 = vmatmul.f32.gmra.mxu0 %v1071
      %v1111 = vpop.f32.mrf.mxu0
      %v1112 = vadd.f32 0.0, %v1111
      %1113 = vmatmul.f32.gmra.mxu0 %v1074
      %v1114 = vpop.f32.mrf.mxu0
      %v1115 = vadd.f32 0.0, %v1114
      %1116 = vmatmul.f32.gmra.mxu0 %v1077
      %v1117 = vpop.f32.mrf.mxu0
      %v1118 = vadd.f32 0.0, %v1117
      %1119 = vdwg.mxu0
      %vm1120 = vcmask 64512
      %1121 = vst.msk [vmem:[%s392] sm:$0xff] %vm1120, %v1097
      %1122 = vst.msk [vmem:[%s392 + $0x8] sm:$0xff] %vm1120, %v1100
      %1123 = vst.msk [vmem:[%s392 + $0x10] sm:$0xff] %vm1120, %v1103
      %1124 = vst.msk [vmem:[%s392 + $0x18] sm:$0xff] %vm1120, %v1106
      %1125 = vst.msk [vmem:[%s392 + $0x20] sm:$0xff] %vm1120, %v1109
      %1126 = vst.msk [vmem:[%s392 + $0x28] sm:$0xff] %vm1120, %v1112
      %1127 = vst.msk [vmem:[%s392 + $0x30] sm:$0xff] %vm1120, %v1115
      %1128 = vst.msk [vmem:[%s392 + $0x38] sm:$0xff] %vm1120, %v1118
      %p1129 = scmp.lt.s32.totalorder %s24, 1
      %s1130 = scalar_select %p1129, %s24, 1
      %s1131 = smul.addr %s1130, 2
      %s1132 = scalar_lea.vmem %s9, %s1131
      %p1133 = scmp.lt.s32.totalorder %s24, 1
      %s1134 = scalar_select %p1133, %s24, 1
      %s1135 = smul.addr %s1134, 8
      %s1136 = smul.addr %s1135, 8
      %s1137 = scalar_lea.vmem %s10, %s1136
      // Predicated region
      $region57: #{multi_scale_discriminator.3} parent=55 // pred_check
        %p1138 = pneg %p241
      $region58: #{multi_scale_discriminator.3} parent=55 // pred_check_branch
        %1140 = sbr.rel (%p1138) target = $region60
      $region59: #{multi_scale_discriminator.3} parent=55 // pred_region
        _
      $region60: #{multi_scale_discriminator.3} parent=55 // pred_fallthru
        _
      // Predicated region
      $region61: #{multi_scale_discriminator.3} parent=55 // pred_check
        %p1141 = pneg %p267
      $region62: #{multi_scale_discriminator.3} parent=55 // pred_check_branch
        %1143 = sbr.rel (%p1141) target = $region64
      $region63: #{multi_scale_discriminator.3} parent=55 // pred_region
        _
      $region64: #{multi_scale_discriminator.3} parent=55 // pred_fallthru
        _
    $region56: #{multi_scale_discriminator.3} parent=5 // pred_fallthru
      _
    %p1144 = scmp.le.s32.totalorder 2, %s19
    // Predicated region
    $region65: #{multi_scale_discriminator.3} parent=5 // pred_check
      %p1145 = pneg %p1144
    $region66: #{multi_scale_discriminator.3} parent=5 // pred_check_branch
      %1147 = sbr.rel (%p1145) target = $region68
    $region67: #{multi_scale_discriminator.3} parent=5 // pred_region
      %s1148 = ssub.s32 %s19, 2
      // Predicated region
      $region69: #{multi_scale_discriminator.3} parent=67 // pred_check
        %p1149 = pneg %p247
      $region70: #{multi_scale_discriminator.3} parent=67 // pred_check_branch
        %1151 = sbr.rel (%p1149) target = $region72
      $region71: #{multi_scale_discriminator.3} parent=67 // pred_region
        %p1152 = scmp.lt.s32.totalorder %s25, 1
        %s1153 = scalar_select %p1152, %s25, 1
        %s1154 = smul.addr %s1153, 2
        %s1155 = scalar_lea.vmem %s9, %s1154
      $region72: #{multi_scale_discriminator.3} parent=67 // pred_fallthru
        _
      // Predicated region
      $region73: #{multi_scale_discriminator.3} parent=67 // pred_check
        %p1156 = pneg %p273
      $region74: #{multi_scale_discriminator.3} parent=67 // pred_check_branch
        %1158 = sbr.rel (%p1156) target = $region76
      $region75: #{multi_scale_discriminator.3} parent=67 // pred_region
        %p1159 = scmp.lt.s32.totalorder %s25, 1
        %s1160 = scalar_select %p1159, %s25, 1
        %s1161 = smul.addr %s1160, 8
        %s1162 = smul.addr %s1161, 8
        %s1163 = scalar_lea.vmem %s10, %s1162
      $region76: #{multi_scale_discriminator.3} parent=67 // pred_fallthru
        _
    $region68: #{multi_scale_discriminator.3} parent=5 // pred_fallthru
      _
  $region6: #{multi_scale_discriminator.3} parent=0 // loop_footer
    %s23 = sadd.s32 1, %s19
  $region7: #{multi_scale_discriminator.3} parent=0 // loop_footer_branch
    %18 = sbr.rel target = $region3
  $region8: #{multi_scale_discriminator.3} parent=0 // loop_exit
    _

</llo_original>
